<compile_context>
chip_gen: v7x
topology: tpu7x:2x2x1
jax: 0.10.0
libtpu: 0.0.40
codegen_flags: <defaults>
</compile_context>

<pallas_src>
import jax
import jax.numpy as jnp
from jax.experimental import pallas as pl
from jax.experimental.pallas import tpu as pltpu

EPS = 1e-5                      # PyTorch BatchNorm2d default eps
LANE = 128                      # TPU lane width; channel dims padded to this
ROW_TILE_TARGET = 8             # output rows per grid step (small here so the
                                # multi-tile / stats-accumulation path is
                                # exercised at demo sizes; derive from the VMEM
                                # budget for real UNet shapes)
VMEM_LIMIT_BYTES = 48 * 1024 * 1024   # explicit scoped-VMEM budget (< v7x 64 MiB)
STAGE_DTYPE = jnp.float32       # staged conv outputs in HBM (bf16 halves traffic)
MXU_DTYPE = jnp.bfloat16        # dtype fed to the MXU (f32 accumulation)


def _round_up(x, m):
    return (x + m - 1) // m * m


def _pick_row_tile(h, target):
    """Largest divisor of h that is <= target, so row tiles exactly cover H."""
    for t in range(min(target, h), 0, -1):
        if h % t == 0:
            return t
    return 1


def _conv3x3_taps(src, w_ref, tr, wd):
    """3x3 conv of a (tr+2, wd+2, Cin_p) bf16 window as 9 lane-dense MXU matmuls.

    Channel dims are padded to 128, so every tap is a full-width (K=128+,
    N=128+) matmul; accumulation is f32.
    """
    cout = w_ref.shape[-1]
    acc = jnp.zeros((tr * wd, cout), jnp.float32)
    for kh in range(3):
        for kw in range(3):
            patch = src[kh:kh + tr, kw:kw + wd, :].reshape(tr * wd, -1)
            acc = acc + jnp.dot(patch, w_ref[kh, kw],
                                preferred_element_type=jnp.float32)
    return acc


# ---------------- pass 1: conv1 + bias, staged output + BN1 partial sums ------

def _conv1_kernel(xpad_ref, w_ref, b_ref, y_ref, sum_ref, sq_ref):
    # xpad_ref: (1, H+2, W+2, Cin_p) bf16 -- full padded image, resident over row tiles
    # w_ref:    (3, 3, Cin_p, Cout_p) bf16
    # b_ref:    (1, Cout_p) f32
    # y_ref:    (1, TR, W, Cout_p) staged conv1 output (row tile)
    # sum/sq:   (1, 1, Cout_p) f32 per-image BN1 partials (accumulated over row tiles)
    i = pl.program_id(1)
    _, tr, wd, cout = y_ref.shape

    @pl.when(i == 0)
    def _init():
        sum_ref[...] = jnp.zeros_like(sum_ref)
        sq_ref[...] = jnp.zeros_like(sq_ref)

    row0 = pl.multiple_of(i * tr, tr)
    window = xpad_ref[0, pl.ds(row0, tr + 2), :, :]            # (TR+2, W+2, Cin_p)
    y = _conv3x3_taps(window, w_ref, tr, wd) + b_ref[...]      # (TR*W, Cout_p) f32

    y_ref[...] = y.reshape(1, tr, wd, cout).astype(y_ref.dtype)
    sum_ref[...] += jnp.sum(y, axis=0, keepdims=True)[None]
    sq_ref[...] += jnp.sum(y * y, axis=0, keepdims=True)[None]


# -------- pass 2: BN1 + ReLU + conv2 + bias, staged output + BN2 partials -----

def _bnrelu_conv2_kernel(y1_ref, scale_ref, shift_ref, w_ref, b_ref,
                         y2_ref, sum_ref, sq_ref, h1pad_ref):
    # y1_ref:    (1, H, W, Cout_p) staged conv1 output -- full image, resident
    # scale/shift: (1, Cout_p) f32 folded BN1 parameters
    # w_ref:     (3, 3, Cout_p, Cout_p) bf16
    # b_ref:     (1, Cout_p) f32
    # y2_ref:    (1, TR, W, Cout_p) staged conv2 output (row tile)
    # sum/sq:    (1, 1, Cout_p) f32 per-image BN2 partials
    # h1pad_ref: VMEM scratch (H+2, W+2, Cout_p) bf16, zero-padded BN1+ReLU output
    i = pl.program_id(1)
    _, tr, wd, cout = y2_ref.shape
    h = y1_ref.shape[1]

    @pl.when(i == 0)
    def _init():
        # Fused BN1-affine + ReLU epilogue, written once per image into a
        # pre-zeroed padded VMEM scratch (replaces in-kernel concatenate padding).
        h1pad_ref[...] = jnp.zeros_like(h1pad_ref)
        h1 = y1_ref[0].astype(jnp.float32) * scale_ref[...] + shift_ref[...]
        h1 = jnp.maximum(h1, 0.0)
        h1pad_ref[pl.ds(1, h), pl.ds(1, wd), :] = h1.astype(h1pad_ref.dtype)
        sum_ref[...] = jnp.zeros_like(sum_ref)
        sq_ref[...] = jnp.zeros_like(sq_ref)

    row0 = pl.multiple_of(i * tr, tr)
    window = h1pad_ref[pl.ds(row0, tr + 2), :, :]              # (TR+2, W+2, Cout_p)
    y = _conv3x3_taps(window, w_ref, tr, wd) + b_ref[...]

    y2_ref[...] = y.reshape(1, tr, wd, cout).astype(y2_ref.dtype)
    sum_ref[...] += jnp.sum(y, axis=0, keepdims=True)[None]
    sq_ref[...] += jnp.sum(y * y, axis=0, keepdims=True)[None]


# ---------------- pass 3: BN2 + ReLU (elementwise, row-tiled) -----------------

def _bn_relu_kernel(y_ref, scale_ref, shift_ref, out_ref):
    y = y_ref[...].astype(jnp.float32)
    out_ref[...] = jnp.maximum(y * scale_ref[...] + shift_ref[...],
                               0.0).astype(out_ref.dtype)


# ------------------------------- wrapper --------------------------------------

def _finalize_bn(sum_part, sq_part, gamma, beta, count):
    """Fold per-image partial sums into BN scale/shift rows (tiny O(C) glue)."""
    mean = jnp.sum(sum_part, axis=0) / count                   # (1, Cout_p)
    var = jnp.maximum(jnp.sum(sq_part, axis=0) / count - mean * mean, 0.0)
    scale = gamma * jax.lax.rsqrt(var + EPS)
    shift = beta - mean * scale
    return scale, shift


@jax.jit
def conv_block_forward(x_nchw, params):
    (w1, b1, g1, bt1, w2, b2, g2, bt2) = params
    n, cin, h, wd = x_nchw.shape
    cout = w1.shape[0]
    cin_p = _round_up(cin, LANE)
    cout_p = _round_up(cout, LANE)
    tr = _pick_row_tile(h, ROW_TILE_TARGET)
    rt = h // tr
    count = n * h * wd

    # ---- layout glue only (transpose / zero-pad / cast); compute is in kernels ----
    x_nhwc = jnp.transpose(x_nchw, (0, 2, 3, 1)).astype(MXU_DTYPE)
    x_pad = jnp.pad(x_nhwc, ((0, 0), (1, 1), (1, 1), (0, cin_p - cin)))
    w1_k = jnp.pad(jnp.transpose(w1, (2, 3, 1, 0)),
                   ((0, 0), (0, 0), (0, cin_p - cin),
                    (0, cout_p - cout))).astype(MXU_DTYPE)
    w2_k = jnp.pad(jnp.transpose(w2, (2, 3, 1, 0)),
                   ((0, 0), (0, 0), (0, cout_p - cout),
                    (0, cout_p - cout))).astype(MXU_DTYPE)

    def cvec(v):   # (C,) -> zero-padded (1, Cout_p) f32 row (padded params are 0)
        return jnp.pad(v.astype(jnp.float32), (0, cout_p - cout)).reshape(1, cout_p)

    b1_k, b2_k = cvec(b1), cvec(b2)
    g1_k, bt1_k, g2_k, bt2_k = cvec(g1), cvec(bt1), cvec(g2), cvec(bt2)

    cparams_acc = pltpu.CompilerParams(
        dimension_semantics=("parallel", "arbitrary"),
        vmem_limit_bytes=VMEM_LIMIT_BYTES)
    cparams_par = pltpu.CompilerParams(
        dimension_semantics=("parallel", "parallel"),
        vmem_limit_bytes=VMEM_LIMIT_BYTES)

    vec_spec = pl.BlockSpec((1, cout_p), lambda b, i: (0, 0))
    tile_spec = pl.BlockSpec((1, tr, wd, cout_p), lambda b, i: (b, i, 0, 0))
    stat_spec = pl.BlockSpec((1, 1, cout_p), lambda b, i: (b, 0, 0))

    # ---- pass 1: conv1 + bias -> staged y1 + BN1 partial sums ----
    y1, s1, q1 = pl.pallas_call(
        _conv1_kernel,
        grid=(n, rt),
        in_specs=[
            pl.BlockSpec((1, h + 2, wd + 2, cin_p), lambda b, i: (b, 0, 0, 0)),
            pl.BlockSpec((3, 3, cin_p, cout_p), lambda b, i: (0, 0, 0, 0)),
            vec_spec,
        ],
        out_specs=[tile_spec, stat_spec, stat_spec],
        out_shape=[
            jax.ShapeDtypeStruct((n, h, wd, cout_p), STAGE_DTYPE),
            jax.ShapeDtypeStruct((n, 1, cout_p), jnp.float32),
            jax.ShapeDtypeStruct((n, 1, cout_p), jnp.float32),
        ],
        compiler_params=cparams_acc,
    )(x_pad, w1_k, b1_k)

    scale1, shift1 = _finalize_bn(s1, q1, g1_k, bt1_k, count)

    # ---- pass 2: BN1 + ReLU + conv2 + bias -> staged y2 + BN2 partial sums ----
    y2, s2, q2 = pl.pallas_call(
        _bnrelu_conv2_kernel,
        grid=(n, rt),
        in_specs=[
            pl.BlockSpec((1, h, wd, cout_p), lambda b, i: (b, 0, 0, 0)),
            vec_spec, vec_spec,
            pl.BlockSpec((3, 3, cout_p, cout_p), lambda b, i: (0, 0, 0, 0)),
            vec_spec,
        ],
        out_specs=[tile_spec, stat_spec, stat_spec],
        out_shape=[
            jax.ShapeDtypeStruct((n, h, wd, cout_p), STAGE_DTYPE),
            jax.ShapeDtypeStruct((n, 1, cout_p), jnp.float32),
            jax.ShapeDtypeStruct((n, 1, cout_p), jnp.float32),
        ],
        scratch_shapes=[pltpu.VMEM((h + 2, wd + 2, cout_p), MXU_DTYPE)],
        compiler_params=cparams_acc,
    )(y1, scale1, shift1, w2_k, b2_k)

    scale2, shift2 = _finalize_bn(s2, q2, g2_k, bt2_k, count)

    # ---- pass 3: BN2 + ReLU ----
    out_pad = pl.pallas_call(
        _bn_relu_kernel,
        grid=(n, rt),
        in_specs=[tile_spec, vec_spec, vec_spec],
        out_specs=tile_spec,
        out_shape=jax.ShapeDtypeStruct((n, h, wd, cout_p), jnp.float32),
        compiler_params=cparams_par,
    )(y2, scale2, shift2)

    # ---- layout glue: drop channel padding, back to NCHW ----
    return jnp.transpose(out_pad[..., :cout], (0, 3, 1, 2))


# ------------------------------ reference -------------------------------------

def conv_block_ref(x_nchw, params):
    """Pure-JAX f32 reference matching PyTorch training-mode forward."""
    (w1, b1, g1, bt1, w2, b2, g2, bt2) = params

    def conv(x, w, b):
        y = jax.lax.conv_general_dilated(
            x, w, window_strides=(1, 1), padding=((1, 1), (1, 1)),
            dimension_numbers=('NCHW', 'OIHW', 'NCHW'),
            precision=jax.lax.Precision.HIGHEST)
        return y + b[None, :, None, None]

    def bn_relu(x, g, bt):
        mean = jnp.mean(x, axis=(0, 2, 3), keepdims=True)
        var = jnp.mean((x - mean) ** 2, axis=(0, 2, 3), keepdims=True)
        y = (x - mean) * jax.lax.rsqrt(var + EPS)
        y = y * g[None, :, None, None] + bt[None, :, None, None]
        return jnp.maximum(y, 0.0)

    h = bn_relu(conv(x_nchw, w1, b1), g1, bt1)
    return bn_relu(conv(h, w2, b2), g2, bt2)


if __name__ == "__main__":
    key = jax.random.PRNGKey(0)
    N, CIN, COUT, H, W = 2, 4, 8, 16, 16
    ks = jax.random.split(key, 9)

    x = jax.random.normal(ks[0], (N, CIN, H, W), jnp.float32)
    # PyTorch shapes: conv weight (Cout, Cin, 3, 3), bias (Cout,)
    w1 = jax.random.normal(ks[1], (COUT, CIN, 3, 3), jnp.float32) * 0.2
    b1 = jax.random.normal(ks[2], (COUT,), jnp.float32) * 0.1
    w2 = jax.random.normal(ks[3], (COUT, COUT, 3, 3), jnp.float32) * 0.2
    b2 = jax.random.normal(ks[4], (COUT,), jnp.float32) * 0.1
    # BatchNorm affine params (perturbed from the default weight=1, bias=0 so the
    # affine path is exercised).
    g1 = 1.0 + 0.1 * jax.random.normal(ks[5], (COUT,), jnp.float32)
    bt1 = 0.1 * jax.random.normal(ks[6], (COUT,), jnp.float32)
    g2 = 1.0 + 0.1 * jax.random.normal(ks[7], (COUT,), jnp.float32)
    bt2 = 0.1 * jax.random.normal(ks[8], (COUT,), jnp.float32)
    params = (w1, b1, g1, bt1, w2, b2, g2, bt2)

    out = jax.block_until_ready(conv_block_forward(x, params))
    ref = jax.block_until_ready(conv_block_ref(x, params))

    assert out.shape == (N, COUT, H, W), out.shape
    # bf16 MXU inputs with f32 accumulation/statistics: error stays well below 5e-2.
    max_err = float(jnp.max(jnp.abs(out - ref)))
    assert max_err < 5e-2, f"max abs err {max_err}"
    print("KERNEL_OK")
</pallas_src>

<mosaic_0001>
module attributes {stable_mosaic.version = 11 : i64} {
  func.func @_conv1_kernel(%arg0: i32, %arg1: i32, %arg2: memref<1x18x18x128xbf16, #tpu.memory_space<vmem>>, %arg3: memref<3x3x128x128xbf16, #tpu.memory_space<vmem>>, %arg4: memref<1x128xf32, #tpu.memory_space<vmem>>, %arg5: memref<1x8x16x128xf32, #tpu.memory_space<vmem>>, %arg6: memref<1x1x128xf32, #tpu.memory_space<vmem>>, %arg7: memref<1x1x128xf32, #tpu.memory_space<vmem>>) attributes {dimension_semantics = [#tpu.dimension_semantics<parallel>, #tpu.dimension_semantics<arbitrary>], iteration_bounds = array<i64: 2, 2>, scalar_prefetch = 0 : i64, scratch_operands = 0 : i64, tpu.core_type = #tpu.core_type<tc>, window_params = [{transform_indices = @transform_0, window_bounds = array<i64: 1, 18, 18, 128>}, {pipeline_mode = #tpu.pipeline_mode<synchronous>, transform_indices = @transform_1, window_bounds = array<i64: 3, 3, 128, 128>}, {pipeline_mode = #tpu.pipeline_mode<synchronous>, transform_indices = @transform_2, window_bounds = array<i64: 1, 128>}, {transform_indices = @transform_3, window_bounds = array<i64: 1, 8, 16, 128>}, {transform_indices = @transform_4, window_bounds = array<i64: 1, 1, 128>}, {transform_indices = @transform_5, window_bounds = array<i64: 1, 1, 128>}]} {
    %c0_i32 = arith.constant 0 : i32
    %0 = arith.cmpi eq, %arg1, %c0_i32 : i32
    %1 = arith.extui %0 : i1 to i32
    %c0_i32_0 = arith.constant 0 : i32
    %2 = arith.cmpi ne, %1, %c0_i32_0 : i32
    scf.if %2 {
      %cst_66 = arith.constant 0.000000e+00 : f32
      %81 = vector.broadcast %cst_66 : f32 to vector<1x1x128xf32>
      %c0_67 = arith.constant 0 : index
      %c0_68 = arith.constant 0 : index
      %c0_69 = arith.constant 0 : index
      %82 = vector.load %arg6[%c0_67, %c0_68, %c0_69] : memref<1x1x128xf32, #tpu.memory_space<vmem>>, vector<1x1x128xf32>
      tpu.vector_store %arg6[%c0_67, %c0_68, %c0_69], %81 {strides = array<i32>} : memref<1x1x128xf32, #tpu.memory_space<vmem>>, vector<1x1x128xf32>,
      %cst_70 = arith.constant 0.000000e+00 : f32
      %83 = vector.broadcast %cst_70 : f32 to vector<1x1x128xf32>
      %c0_71 = arith.constant 0 : index
      %c0_72 = arith.constant 0 : index
      %c0_73 = arith.constant 0 : index
      %84 = vector.load %arg7[%c0_71, %c0_72, %c0_73] : memref<1x1x128xf32, #tpu.memory_space<vmem>>, vector<1x1x128xf32>
      tpu.vector_store %arg7[%c0_71, %c0_72, %c0_73], %83 {strides = array<i32>} : memref<1x1x128xf32, #tpu.memory_space<vmem>>, vector<1x1x128xf32>,
    } else {
    }
    %c8_i32 = arith.constant 8 : i32
    %3 = arith.muli %arg1, %c8_i32 : i32
    %4 = tpu.assume_multiple %3, 8 : i32
    %c0 = arith.constant 0 : index
    %5 = arith.index_cast %4 : i32 to index
    %c0_1 = arith.constant 0 : index
    %c0_2 = arith.constant 0 : index
    %6 = vector.load %arg2[%c0, %5, %c0_1, %c0_2] : memref<1x18x18x128xbf16, #tpu.memory_space<vmem>>, vector<1x10x18x128xbf16>
    %7 = vector.shape_cast %6 : vector<1x10x18x128xbf16> to vector<10x18x128xbf16>
    %cst = arith.constant 0.000000e+00 : f32
    %8 = vector.broadcast %cst : f32 to vector<128x128xf32>
    %9 = vector.extract_strided_slice %7 {offsets = [0, 0, 0], sizes = [8, 16, 128], strides = [1, 1, 1]} : vector<10x18x128xbf16> to vector<8x16x128xbf16>
    %10 = vector.shape_cast %9 : vector<8x16x128xbf16> to vector<128x128xbf16>
    %c0_3 = arith.constant 0 : index
    %c0_4 = arith.constant 0 : index
    %c0_5 = arith.constant 0 : index
    %c0_6 = arith.constant 0 : index
    %11 = vector.load %arg3[%c0_3, %c0_4, %c0_5, %c0_6] : memref<3x3x128x128xbf16, #tpu.memory_space<vmem>>, vector<1x1x128x128xbf16>
    %12 = vector.shape_cast %11 : vector<1x1x128x128xbf16> to vector<128x128xbf16>
    %cst_7 = arith.constant dense<0.000000e+00> : vector<128x128xf32>
    %13 = tpu.matmul %10, %12, %cst_7 {dimension_numbers = #tpu.dot_dimension_numbers<[1], [0], [0], [1], [0, 0, 1, 1], [], []>} : vector<128x128xbf16>, vector<128x128xbf16>, vector<128x128xf32> -> vector<128x128xf32>
    %14 = arith.addf %8, %13 : vector<128x128xf32>
    %15 = vector.extract_strided_slice %7 {offsets = [0, 1, 0], sizes = [8, 16, 128], strides = [1, 1, 1]} : vector<10x18x128xbf16> to vector<8x16x128xbf16>
    %16 = vector.shape_cast %15 : vector<8x16x128xbf16> to vector<128x128xbf16>
    %c0_8 = arith.constant 0 : index
    %c1 = arith.constant 1 : index
    %c0_9 = arith.constant 0 : index
    %c0_10 = arith.constant 0 : index
    %17 = vector.load %arg3[%c0_8, %c1, %c0_9, %c0_10] : memref<3x3x128x128xbf16, #tpu.memory_space<vmem>>, vector<1x1x128x128xbf16>
    %18 = vector.shape_cast %17 : vector<1x1x128x128xbf16> to vector<128x128xbf16>
    %cst_11 = arith.constant dense<0.000000e+00> : vector<128x128xf32>
    %19 = tpu.matmul %16, %18, %cst_11 {dimension_numbers = #tpu.dot_dimension_numbers<[1], [0], [0], [1], [0, 0, 1, 1], [], []>} : vector<128x128xbf16>, vector<128x128xbf16>, vector<128x128xf32> -> vector<128x128xf32>
    %20 = arith.addf %14, %19 : vector<128x128xf32>
    %21 = vector.extract_strided_slice %7 {offsets = [0, 2, 0], sizes = [8, 16, 128], strides = [1, 1, 1]} : vector<10x18x128xbf16> to vector<8x16x128xbf16>
    %22 = vector.shape_cast %21 : vector<8x16x128xbf16> to vector<128x128xbf16>
    %c0_12 = arith.constant 0 : index
    %c2 = arith.constant 2 : index
    %c0_13 = arith.constant 0 : index
    %c0_14 = arith.constant 0 : index
    %23 = vector.load %arg3[%c0_12, %c2, %c0_13, %c0_14] : memref<3x3x128x128xbf16, #tpu.memory_space<vmem>>, vector<1x1x128x128xbf16>
    %24 = vector.shape_cast %23 : vector<1x1x128x128xbf16> to vector<128x128xbf16>
    %cst_15 = arith.constant dense<0.000000e+00> : vector<128x128xf32>
    %25 = tpu.matmul %22, %24, %cst_15 {dimension_numbers = #tpu.dot_dimension_numbers<[1], [0], [0], [1], [0, 0, 1, 1], [], []>} : vector<128x128xbf16>, vector<128x128xbf16>, vector<128x128xf32> -> vector<128x128xf32>
    %26 = arith.addf %20, %25 : vector<128x128xf32>
    %27 = vector.extract_strided_slice %7 {offsets = [1, 0, 0], sizes = [8, 16, 128], strides = [1, 1, 1]} : vector<10x18x128xbf16> to vector<8x16x128xbf16>
    %28 = vector.shape_cast %27 : vector<8x16x128xbf16> to vector<128x128xbf16>
    %c1_16 = arith.constant 1 : index
    %c0_17 = arith.constant 0 : index
    %c0_18 = arith.constant 0 : index
    %c0_19 = arith.constant 0 : index
    %29 = vector.load %arg3[%c1_16, %c0_17, %c0_18, %c0_19] : memref<3x3x128x128xbf16, #tpu.memory_space<vmem>>, vector<1x1x128x128xbf16>
    %30 = vector.shape_cast %29 : vector<1x1x128x128xbf16> to vector<128x128xbf16>
    %cst_20 = arith.constant dense<0.000000e+00> : vector<128x128xf32>
    %31 = tpu.matmul %28, %30, %cst_20 {dimension_numbers = #tpu.dot_dimension_numbers<[1], [0], [0], [1], [0, 0, 1, 1], [], []>} : vector<128x128xbf16>, vector<128x128xbf16>, vector<128x128xf32> -> vector<128x128xf32>
    %32 = arith.addf %26, %31 : vector<128x128xf32>
    %33 = vector.extract_strided_slice %7 {offsets = [1, 1, 0], sizes = [8, 16, 128], strides = [1, 1, 1]} : vector<10x18x128xbf16> to vector<8x16x128xbf16>
    %34 = vector.shape_cast %33 : vector<8x16x128xbf16> to vector<128x128xbf16>
    %c1_21 = arith.constant 1 : index
    %c1_22 = arith.constant 1 : index
    %c0_23 = arith.constant 0 : index
    %c0_24 = arith.constant 0 : index
    %35 = vector.load %arg3[%c1_21, %c1_22, %c0_23, %c0_24] : memref<3x3x128x128xbf16, #tpu.memory_space<vmem>>, vector<1x1x128x128xbf16>
    %36 = vector.shape_cast %35 : vector<1x1x128x128xbf16> to vector<128x128xbf16>
    %cst_25 = arith.constant dense<0.000000e+00> : vector<128x128xf32>
    %37 = tpu.matmul %34, %36, %cst_25 {dimension_numbers = #tpu.dot_dimension_numbers<[1], [0], [0], [1], [0, 0, 1, 1], [], []>} : vector<128x128xbf16>, vector<128x128xbf16>, vector<128x128xf32> -> vector<128x128xf32>
    %38 = arith.addf %32, %37 : vector<128x128xf32>
    %39 = vector.extract_strided_slice %7 {offsets = [1, 2, 0], sizes = [8, 16, 128], strides = [1, 1, 1]} : vector<10x18x128xbf16> to vector<8x16x128xbf16>
    %40 = vector.shape_cast %39 : vector<8x16x128xbf16> to vector<128x128xbf16>
    %c1_26 = arith.constant 1 : index
    %c2_27 = arith.constant 2 : index
    %c0_28 = arith.constant 0 : index
    %c0_29 = arith.constant 0 : index
    %41 = vector.load %arg3[%c1_26, %c2_27, %c0_28, %c0_29] : memref<3x3x128x128xbf16, #tpu.memory_space<vmem>>, vector<1x1x128x128xbf16>
    %42 = vector.shape_cast %41 : vector<1x1x128x128xbf16> to vector<128x128xbf16>
    %cst_30 = arith.constant dense<0.000000e+00> : vector<128x128xf32>
    %43 = tpu.matmul %40, %42, %cst_30 {dimension_numbers = #tpu.dot_dimension_numbers<[1], [0], [0], [1], [0, 0, 1, 1], [], []>} : vector<128x128xbf16>, vector<128x128xbf16>, vector<128x128xf32> -> vector<128x128xf32>
    %44 = arith.addf %38, %43 : vector<128x128xf32>
    %45 = vector.extract_strided_slice %7 {offsets = [2, 0, 0], sizes = [8, 16, 128], strides = [1, 1, 1]} : vector<10x18x128xbf16> to vector<8x16x128xbf16>
    %46 = vector.shape_cast %45 : vector<8x16x128xbf16> to vector<128x128xbf16>
    %c2_31 = arith.constant 2 : index
    %c0_32 = arith.constant 0 : index
    %c0_33 = arith.constant 0 : index
    %c0_34 = arith.constant 0 : index
    %47 = vector.load %arg3[%c2_31, %c0_32, %c0_33, %c0_34] : memref<3x3x128x128xbf16, #tpu.memory_space<vmem>>, vector<1x1x128x128xbf16>
    %48 = vector.shape_cast %47 : vector<1x1x128x128xbf16> to vector<128x128xbf16>
    %cst_35 = arith.constant dense<0.000000e+00> : vector<128x128xf32>
    %49 = tpu.matmul %46, %48, %cst_35 {dimension_numbers = #tpu.dot_dimension_numbers<[1], [0], [0], [1], [0, 0, 1, 1], [], []>} : vector<128x128xbf16>, vector<128x128xbf16>, vector<128x128xf32> -> vector<128x128xf32>
    %50 = arith.addf %44, %49 : vector<128x128xf32>
    %51 = vector.extract_strided_slice %7 {offsets = [2, 1, 0], sizes = [8, 16, 128], strides = [1, 1, 1]} : vector<10x18x128xbf16> to vector<8x16x128xbf16>
    %52 = vector.shape_cast %51 : vector<8x16x128xbf16> to vector<128x128xbf16>
    %c2_36 = arith.constant 2 : index
    %c1_37 = arith.constant 1 : index
    %c0_38 = arith.constant 0 : index
    %c0_39 = arith.constant 0 : index
    %53 = vector.load %arg3[%c2_36, %c1_37, %c0_38, %c0_39] : memref<3x3x128x128xbf16, #tpu.memory_space<vmem>>, vector<1x1x128x128xbf16>
    %54 = vector.shape_cast %53 : vector<1x1x128x128xbf16> to vector<128x128xbf16>
    %cst_40 = arith.constant dense<0.000000e+00> : vector<128x128xf32>
    %55 = tpu.matmul %52, %54, %cst_40 {dimension_numbers = #tpu.dot_dimension_numbers<[1], [0], [0], [1], [0, 0, 1, 1], [], []>} : vector<128x128xbf16>, vector<128x128xbf16>, vector<128x128xf32> -> vector<128x128xf32>
    %56 = arith.addf %50, %55 : vector<128x128xf32>
    %57 = vector.extract_strided_slice %7 {offsets = [2, 2, 0], sizes = [8, 16, 128], strides = [1, 1, 1]} : vector<10x18x128xbf16> to vector<8x16x128xbf16>
    %58 = vector.shape_cast %57 : vector<8x16x128xbf16> to vector<128x128xbf16>
    %c2_41 = arith.constant 2 : index
    %c2_42 = arith.constant 2 : index
    %c0_43 = arith.constant 0 : index
    %c0_44 = arith.constant 0 : index
    %59 = vector.load %arg3[%c2_41, %c2_42, %c0_43, %c0_44] : memref<3x3x128x128xbf16, #tpu.memory_space<vmem>>, vector<1x1x128x128xbf16>
    %60 = vector.shape_cast %59 : vector<1x1x128x128xbf16> to vector<128x128xbf16>
    %cst_45 = arith.constant dense<0.000000e+00> : vector<128x128xf32>
    %61 = tpu.matmul %58, %60, %cst_45 {dimension_numbers = #tpu.dot_dimension_numbers<[1], [0], [0], [1], [0, 0, 1, 1], [], []>} : vector<128x128xbf16>, vector<128x128xbf16>, vector<128x128xf32> -> vector<128x128xf32>
    %62 = arith.addf %56, %61 : vector<128x128xf32>
    %c0_46 = arith.constant 0 : index
    %c0_47 = arith.constant 0 : index
    %63 = vector.load %arg4[%c0_46, %c0_47] : memref<1x128xf32, #tpu.memory_space<vmem>>, vector<1x128xf32>
    %64 = vector.broadcast %63 : vector<1x128xf32> to vector<128x128xf32>
    %65 = arith.addf %62, %64 : vector<128x128xf32>
    %66 = vector.shape_cast %65 : vector<128x128xf32> to vector<1x8x16x128xf32>
    %c0_48 = arith.constant 0 : index
    %c0_49 = arith.constant 0 : index
    %c0_50 = arith.constant 0 : index
    %c0_51 = arith.constant 0 : index
    %67 = vector.load %arg5[%c0_48, %c0_49, %c0_50, %c0_51] : memref<1x8x16x128xf32, #tpu.memory_space<vmem>>, vector<1x8x16x128xf32>
    tpu.vector_store %arg5[%c0_48, %c0_49, %c0_50, %c0_51], %66 {strides = array<i32>} : memref<1x8x16x128xf32, #tpu.memory_space<vmem>>, vector<1x8x16x128xf32>,
    %c0_52 = arith.constant 0 : index
    %c0_53 = arith.constant 0 : index
    %c0_54 = arith.constant 0 : index
    %68 = vector.load %arg6[%c0_52, %c0_53, %c0_54] : memref<1x1x128xf32, #tpu.memory_space<vmem>>, vector<1x1x128xf32>
    %cst_55 = arith.constant dense<0.000000e+00> : vector<128xf32>
    %69 = vector.multi_reduction <add>, %65, %cst_55 [0] : vector<128x128xf32> to vector<128xf32>
    %70 = vector.shape_cast %69 : vector<128xf32> to vector<1x128xf32>
    %71 = vector.shape_cast %70 : vector<1x128xf32> to vector<1x1x128xf32>
    %72 = arith.addf %68, %71 : vector<1x1x128xf32>
    %c0_56 = arith.constant 0 : index
    %c0_57 = arith.constant 0 : index
    %c0_58 = arith.constant 0 : index
    %73 = vector.load %arg6[%c0_56, %c0_57, %c0_58] : memref<1x1x128xf32, #tpu.memory_space<vmem>>, vector<1x1x128xf32>
    tpu.vector_store %arg6[%c0_56, %c0_57, %c0_58], %72 {strides = array<i32>} : memref<1x1x128xf32, #tpu.memory_space<vmem>>, vector<1x1x128xf32>,
    %c0_59 = arith.constant 0 : index
    %c0_60 = arith.constant 0 : index
    %c0_61 = arith.constant 0 : index
    %74 = vector.load %arg7[%c0_59, %c0_60, %c0_61] : memref<1x1x128xf32, #tpu.memory_space<vmem>>, vector<1x1x128xf32>
    %75 = arith.mulf %65, %65 : vector<128x128xf32>
    %cst_62 = arith.constant dense<0.000000e+00> : vector<128xf32>
    %76 = vector.multi_reduction <add>, %75, %cst_62 [0] : vector<128x128xf32> to vector<128xf32>
    %77 = vector.shape_cast %76 : vector<128xf32> to vector<1x128xf32>
    %78 = vector.shape_cast %77 : vector<1x128xf32> to vector<1x1x128xf32>
    %79 = arith.addf %74, %78 : vector<1x1x128xf32>
    %c0_63 = arith.constant 0 : index
    %c0_64 = arith.constant 0 : index
    %c0_65 = arith.constant 0 : index
    %80 = vector.load %arg7[%c0_63, %c0_64, %c0_65] : memref<1x1x128xf32, #tpu.memory_space<vmem>>, vector<1x1x128xf32>
    tpu.vector_store %arg7[%c0_63, %c0_64, %c0_65], %79 {strides = array<i32>} : memref<1x1x128xf32, #tpu.memory_space<vmem>>, vector<1x1x128xf32>,
    return
  }
  func.func @transform_0(%arg0: i32, %arg1: i32) -> (i32, i32, i32, i32) {
    %c0_i32 = arith.constant 0 : i32
    %c0_i32_0 = arith.constant 0 : i32
    %c0_i32_1 = arith.constant 0 : i32
    %c0_i32_2 = arith.constant 0 : i32
    return %arg0, %c0_i32, %c0_i32_0, %c0_i32_1 : i32, i32, i32, i32
  }
  func.func @transform_1(%arg0: i32, %arg1: i32) -> (i32, i32, i32, i32) {
    %c0_i32 = arith.constant 0 : i32
    %c0_i32_0 = arith.constant 0 : i32
    %c0_i32_1 = arith.constant 0 : i32
    %c0_i32_2 = arith.constant 0 : i32
    %c0_i32_3 = arith.constant 0 : i32
    return %c0_i32, %c0_i32_0, %c0_i32_1, %c0_i32_2 : i32, i32, i32, i32
  }
  func.func @transform_2(%arg0: i32, %arg1: i32) -> (i32, i32) {
    %c0_i32 = arith.constant 0 : i32
    %c0_i32_0 = arith.constant 0 : i32
    %c0_i32_1 = arith.constant 0 : i32
    return %c0_i32, %c0_i32_0 : i32, i32
  }
  func.func @transform_3(%arg0: i32, %arg1: i32) -> (i32, i32, i32, i32) {
    %c0_i32 = arith.constant 0 : i32
    %c0_i32_0 = arith.constant 0 : i32
    %c0_i32_1 = arith.constant 0 : i32
    return %arg0, %arg1, %c0_i32, %c0_i32_0 : i32, i32, i32, i32
  }
  func.func @transform_4(%arg0: i32, %arg1: i32) -> (i32, i32, i32) {
    %c0_i32 = arith.constant 0 : i32
    %c0_i32_0 = arith.constant 0 : i32
    %c0_i32_1 = arith.constant 0 : i32
    return %arg0, %c0_i32, %c0_i32_0 : i32, i32, i32
  }
  func.func @transform_5(%arg0: i32, %arg1: i32) -> (i32, i32, i32) {
    %c0_i32 = arith.constant 0 : i32
    %c0_i32_0 = arith.constant 0 : i32
    %c0_i32_1 = arith.constant 0 : i32
    return %arg0, %c0_i32, %c0_i32_0 : i32, i32, i32
  }
}

module attributes {stable_mosaic.version = 11 : i64} {
  func.func @_bn_relu_kernel(%arg0: i32, %arg1: i32, %arg2: memref<1x8x16x128xf32, #tpu.memory_space<vmem>>, %arg3: memref<1x128xf32, #tpu.memory_space<vmem>>, %arg4: memref<1x128xf32, #tpu.memory_space<vmem>>, %arg5: memref<1x8x16x128xf32, #tpu.memory_space<vmem>>) attributes {dimension_semantics = [#tpu.dimension_semantics<parallel>, #tpu.dimension_semantics<parallel>], iteration_bounds = array<i64: 2, 2>, scalar_prefetch = 0 : i64, scratch_operands = 0 : i64, tpu.core_type = #tpu.core_type<tc>, window_params = [{transform_indices = @transform_0, window_bounds = array<i64: 1, 8, 16, 128>}, {pipeline_mode = #tpu.pipeline_mode<synchronous>, transform_indices = @transform_1, window_bounds = array<i64: 1, 128>}, {pipeline_mode = #tpu.pipeline_mode<synchronous>, transform_indices = @transform_2, window_bounds = array<i64: 1, 128>}, {transform_indices = @transform_3, window_bounds = array<i64: 1, 8, 16, 128>}]} {
    %c0 = arith.constant 0 : index
    %c0_0 = arith.constant 0 : index
    %c0_1 = arith.constant 0 : index
    %c0_2 = arith.constant 0 : index
    %0 = vector.load %arg2[%c0, %c0_0, %c0_1, %c0_2] : memref<1x8x16x128xf32, #tpu.memory_space<vmem>>, vector<1x8x16x128xf32>
    %c0_3 = arith.constant 0 : index
    %c0_4 = arith.constant 0 : index
    %1 = vector.load %arg3[%c0_3, %c0_4] : memref<1x128xf32, #tpu.memory_space<vmem>>, vector<1x128xf32>
    %2 = vector.shape_cast %1 : vector<1x128xf32> to vector<1x1x1x128xf32>
    %3 = vector.broadcast %2 : vector<1x1x1x128xf32> to vector<1x8x16x128xf32>
    %4 = arith.mulf %0, %3 : vector<1x8x16x128xf32>
    %c0_5 = arith.constant 0 : index
    %c0_6 = arith.constant 0 : index
    %5 = vector.load %arg4[%c0_5, %c0_6] : memref<1x128xf32, #tpu.memory_space<vmem>>, vector<1x128xf32>
    %6 = vector.shape_cast %5 : vector<1x128xf32> to vector<1x1x1x128xf32>
    %7 = vector.broadcast %6 : vector<1x1x1x128xf32> to vector<1x8x16x128xf32>
    %8 = arith.addf %4, %7 : vector<1x8x16x128xf32>
    %cst = arith.constant 0.000000e+00 : f32
    %9 = vector.broadcast %cst : f32 to vector<1x8x16x128xf32>
    %10 = arith.maximumf %8, %9 : vector<1x8x16x128xf32>
    %c0_7 = arith.constant 0 : index
    %c0_8 = arith.constant 0 : index
    %c0_9 = arith.constant 0 : index
    %c0_10 = arith.constant 0 : index
    %11 = vector.load %arg5[%c0_7, %c0_8, %c0_9, %c0_10] : memref<1x8x16x128xf32, #tpu.memory_space<vmem>>, vector<1x8x16x128xf32>
    tpu.vector_store %arg5[%c0_7, %c0_8, %c0_9, %c0_10], %10 {strides = array<i32>} : memref<1x8x16x128xf32, #tpu.memory_space<vmem>>, vector<1x8x16x128xf32>,
    return
  }
  func.func @transform_0(%arg0: i32, %arg1: i32) -> (i32, i32, i32, i32) {
    %c0_i32 = arith.constant 0 : i32
    %c0_i32_0 = arith.constant 0 : i32
    %c0_i32_1 = arith.constant 0 : i32
    return %arg0, %arg1, %c0_i32, %c0_i32_0 : i32, i32, i32, i32
  }
  func.func @transform_1(%arg0: i32, %arg1: i32) -> (i32, i32) {
    %c0_i32 = arith.constant 0 : i32
    %c0_i32_0 = arith.constant 0 : i32
    %c0_i32_1 = arith.constant 0 : i32
    return %c0_i32, %c0_i32_0 : i32, i32
  }
  func.func @transform_2(%arg0: i32, %arg1: i32) -> (i32, i32) {
    %c0_i32 = arith.constant 0 : i32
    %c0_i32_0 = arith.constant 0 : i32
    %c0_i32_1 = arith.constant 0 : i32
    return %c0_i32, %c0_i32_0 : i32, i32
  }
  func.func @transform_3(%arg0: i32, %arg1: i32) -> (i32, i32, i32, i32) {
    %c0_i32 = arith.constant 0 : i32
    %c0_i32_0 = arith.constant 0 : i32
    %c0_i32_1 = arith.constant 0 : i32
    return %arg0, %arg1, %c0_i32, %c0_i32_0 : i32, i32, i32, i32
  }
}

module attributes {stable_mosaic.version = 11 : i64} {
  func.func @_bnrelu_conv2_kernel(%arg0: i32, %arg1: i32, %arg2: memref<1x16x16x128xf32, #tpu.memory_space<vmem>>, %arg3: memref<1x128xf32, #tpu.memory_space<vmem>>, %arg4: memref<1x128xf32, #tpu.memory_space<vmem>>, %arg5: memref<3x3x128x128xbf16, #tpu.memory_space<vmem>>, %arg6: memref<1x128xf32, #tpu.memory_space<vmem>>, %arg7: memref<1x8x16x128xf32, #tpu.memory_space<vmem>>, %arg8: memref<1x1x128xf32, #tpu.memory_space<vmem>>, %arg9: memref<1x1x128xf32, #tpu.memory_space<vmem>>, %arg10: memref<18x18x128xbf16, #tpu.memory_space<vmem>>) attributes {dimension_semantics = [#tpu.dimension_semantics<parallel>, #tpu.dimension_semantics<arbitrary>], iteration_bounds = array<i64: 2, 2>, scalar_prefetch = 0 : i64, scratch_operands = 1 : i64, tpu.core_type = #tpu.core_type<tc>, window_params = [{transform_indices = @transform_0, window_bounds = array<i64: 1, 16, 16, 128>}, {pipeline_mode = #tpu.pipeline_mode<synchronous>, transform_indices = @transform_1, window_bounds = array<i64: 1, 128>}, {pipeline_mode = #tpu.pipeline_mode<synchronous>, transform_indices = @transform_2, window_bounds = array<i64: 1, 128>}, {pipeline_mode = #tpu.pipeline_mode<synchronous>, transform_indices = @transform_3, window_bounds = array<i64: 3, 3, 128, 128>}, {pipeline_mode = #tpu.pipeline_mode<synchronous>, transform_indices = @transform_4, window_bounds = array<i64: 1, 128>}, {transform_indices = @transform_5, window_bounds = array<i64: 1, 8, 16, 128>}, {transform_indices = @transform_6, window_bounds = array<i64: 1, 1, 128>}, {transform_indices = @transform_7, window_bounds = array<i64: 1, 1, 128>}]} {
    %c0_i32 = arith.constant 0 : i32
    %0 = arith.cmpi eq, %arg1, %c0_i32 : i32
    %1 = arith.extui %0 : i1 to i32
    %c0_i32_0 = arith.constant 0 : i32
    %2 = arith.cmpi ne, %1, %c0_i32_0 : i32
    scf.if %2 {
      %cst_65 = arith.constant 0.000000e+00 : bf16
      %80 = vector.broadcast %cst_65 : bf16 to vector<18x18x128xbf16>
      %c0_66 = arith.constant 0 : index
      %c0_67 = arith.constant 0 : index
      %c0_68 = arith.constant 0 : index
      %81 = vector.load %arg10[%c0_66, %c0_67, %c0_68] : memref<18x18x128xbf16, #tpu.memory_space<vmem>>, vector<18x18x128xbf16>
      tpu.vector_store %arg10[%c0_66, %c0_67, %c0_68], %80 {strides = array<i32>} : memref<18x18x128xbf16, #tpu.memory_space<vmem>>, vector<18x18x128xbf16>,
      %c0_69 = arith.constant 0 : index
      %c0_70 = arith.constant 0 : index
      %c0_71 = arith.constant 0 : index
      %c0_72 = arith.constant 0 : index
      %82 = vector.load %arg2[%c0_69, %c0_70, %c0_71, %c0_72] : memref<1x16x16x128xf32, #tpu.memory_space<vmem>>, vector<1x16x16x128xf32>
      %83 = vector.shape_cast %82 : vector<1x16x16x128xf32> to vector<16x16x128xf32>
      %c0_73 = arith.constant 0 : index
      %c0_74 = arith.constant 0 : index
      %84 = vector.load %arg3[%c0_73, %c0_74] : memref<1x128xf32, #tpu.memory_space<vmem>>, vector<1x128xf32>
      %85 = vector.shape_cast %84 : vector<1x128xf32> to vector<1x1x128xf32>
      %86 = vector.broadcast %85 : vector<1x1x128xf32> to vector<16x16x128xf32>
      %87 = arith.mulf %83, %86 : vector<16x16x128xf32>
      %c0_75 = arith.constant 0 : index
      %c0_76 = arith.constant 0 : index
      %88 = vector.load %arg4[%c0_75, %c0_76] : memref<1x128xf32, #tpu.memory_space<vmem>>, vector<1x128xf32>
      %89 = vector.shape_cast %88 : vector<1x128xf32> to vector<1x1x128xf32>
      %90 = vector.broadcast %89 : vector<1x1x128xf32> to vector<16x16x128xf32>
      %91 = arith.addf %87, %90 : vector<16x16x128xf32>
      %cst_77 = arith.constant 0.000000e+00 : f32
      %92 = vector.broadcast %cst_77 : f32 to vector<16x16x128xf32>
      %93 = arith.maximumf %91, %92 : vector<16x16x128xf32>
      %94 = arith.truncf %93 : vector<16x16x128xf32> to vector<16x16x128xbf16>
      %c1_78 = arith.constant 1 : index
      %c1_79 = arith.constant 1 : index
      %c0_80 = arith.constant 0 : index
      %95 = vector.load %arg10[%c1_78, %c1_79, %c0_80] : memref<18x18x128xbf16, #tpu.memory_space<vmem>>, vector<16x16x128xbf16>
      tpu.vector_store %arg10[%c1_78, %c1_79, %c0_80], %94 {strides = array<i32>} : memref<18x18x128xbf16, #tpu.memory_space<vmem>>, vector<16x16x128xbf16>,
      %cst_81 = arith.constant 0.000000e+00 : f32
      %96 = vector.broadcast %cst_81 : f32 to vector<1x1x128xf32>
      %c0_82 = arith.constant 0 : index
      %c0_83 = arith.constant 0 : index
      %c0_84 = arith.constant 0 : index
      %97 = vector.load %arg8[%c0_82, %c0_83, %c0_84] : memref<1x1x128xf32, #tpu.memory_space<vmem>>, vector<1x1x128xf32>
      tpu.vector_store %arg8[%c0_82, %c0_83, %c0_84], %96 {strides = array<i32>} : memref<1x1x128xf32, #tpu.memory_space<vmem>>, vector<1x1x128xf32>,
      %cst_85 = arith.constant 0.000000e+00 : f32
      %98 = vector.broadcast %cst_85 : f32 to vector<1x1x128xf32>
      %c0_86 = arith.constant 0 : index
      %c0_87 = arith.constant 0 : index
      %c0_88 = arith.constant 0 : index
      %99 = vector.load %arg9[%c0_86, %c0_87, %c0_88] : memref<1x1x128xf32, #tpu.memory_space<vmem>>, vector<1x1x128xf32>
      tpu.vector_store %arg9[%c0_86, %c0_87, %c0_88], %98 {strides = array<i32>} : memref<1x1x128xf32, #tpu.memory_space<vmem>>, vector<1x1x128xf32>,
    } else {
    }
    %c8_i32 = arith.constant 8 : i32
    %3 = arith.muli %arg1, %c8_i32 : i32
    %4 = tpu.assume_multiple %3, 8 : i32
    %5 = arith.index_cast %4 : i32 to index
    %c0 = arith.constant 0 : index
    %c0_1 = arith.constant 0 : index
    %6 = vector.load %arg10[%5, %c0, %c0_1] : memref<18x18x128xbf16, #tpu.memory_space<vmem>>, vector<10x18x128xbf16>
    %cst = arith.constant 0.000000e+00 : f32
    %7 = vector.broadcast %cst : f32 to vector<128x128xf32>
    %8 = vector.extract_strided_slice %6 {offsets = [0, 0, 0], sizes = [8, 16, 128], strides = [1, 1, 1]} : vector<10x18x128xbf16> to vector<8x16x128xbf16>
    %9 = vector.shape_cast %8 : vector<8x16x128xbf16> to vector<128x128xbf16>
    %c0_2 = arith.constant 0 : index
    %c0_3 = arith.constant 0 : index
    %c0_4 = arith.constant 0 : index
    %c0_5 = arith.constant 0 : index
    %10 = vector.load %arg5[%c0_2, %c0_3, %c0_4, %c0_5] : memref<3x3x128x128xbf16, #tpu.memory_space<vmem>>, vector<1x1x128x128xbf16>
    %11 = vector.shape_cast %10 : vector<1x1x128x128xbf16> to vector<128x128xbf16>
    %cst_6 = arith.constant dense<0.000000e+00> : vector<128x128xf32>
    %12 = tpu.matmul %9, %11, %cst_6 {dimension_numbers = #tpu.dot_dimension_numbers<[1], [0], [0], [1], [0, 0, 1, 1], [], []>} : vector<128x128xbf16>, vector<128x128xbf16>, vector<128x128xf32> -> vector<128x128xf32>
    %13 = arith.addf %7, %12 : vector<128x128xf32>
    %14 = vector.extract_strided_slice %6 {offsets = [0, 1, 0], sizes = [8, 16, 128], strides = [1, 1, 1]} : vector<10x18x128xbf16> to vector<8x16x128xbf16>
    %15 = vector.shape_cast %14 : vector<8x16x128xbf16> to vector<128x128xbf16>
    %c0_7 = arith.constant 0 : index
    %c1 = arith.constant 1 : index
    %c0_8 = arith.constant 0 : index
    %c0_9 = arith.constant 0 : index
    %16 = vector.load %arg5[%c0_7, %c1, %c0_8, %c0_9] : memref<3x3x128x128xbf16, #tpu.memory_space<vmem>>, vector<1x1x128x128xbf16>
    %17 = vector.shape_cast %16 : vector<1x1x128x128xbf16> to vector<128x128xbf16>
    %cst_10 = arith.constant dense<0.000000e+00> : vector<128x128xf32>
    %18 = tpu.matmul %15, %17, %cst_10 {dimension_numbers = #tpu.dot_dimension_numbers<[1], [0], [0], [1], [0, 0, 1, 1], [], []>} : vector<128x128xbf16>, vector<128x128xbf16>, vector<128x128xf32> -> vector<128x128xf32>
    %19 = arith.addf %13, %18 : vector<128x128xf32>
    %20 = vector.extract_strided_slice %6 {offsets = [0, 2, 0], sizes = [8, 16, 128], strides = [1, 1, 1]} : vector<10x18x128xbf16> to vector<8x16x128xbf16>
    %21 = vector.shape_cast %20 : vector<8x16x128xbf16> to vector<128x128xbf16>
    %c0_11 = arith.constant 0 : index
    %c2 = arith.constant 2 : index
    %c0_12 = arith.constant 0 : index
    %c0_13 = arith.constant 0 : index
    %22 = vector.load %arg5[%c0_11, %c2, %c0_12, %c0_13] : memref<3x3x128x128xbf16, #tpu.memory_space<vmem>>, vector<1x1x128x128xbf16>
    %23 = vector.shape_cast %22 : vector<1x1x128x128xbf16> to vector<128x128xbf16>
    %cst_14 = arith.constant dense<0.000000e+00> : vector<128x128xf32>
    %24 = tpu.matmul %21, %23, %cst_14 {dimension_numbers = #tpu.dot_dimension_numbers<[1], [0], [0], [1], [0, 0, 1, 1], [], []>} : vector<128x128xbf16>, vector<128x128xbf16>, vector<128x128xf32> -> vector<128x128xf32>
    %25 = arith.addf %19, %24 : vector<128x128xf32>
    %26 = vector.extract_strided_slice %6 {offsets = [1, 0, 0], sizes = [8, 16, 128], strides = [1, 1, 1]} : vector<10x18x128xbf16> to vector<8x16x128xbf16>
    %27 = vector.shape_cast %26 : vector<8x16x128xbf16> to vector<128x128xbf16>
    %c1_15 = arith.constant 1 : index
    %c0_16 = arith.constant 0 : index
    %c0_17 = arith.constant 0 : index
    %c0_18 = arith.constant 0 : index
    %28 = vector.load %arg5[%c1_15, %c0_16, %c0_17, %c0_18] : memref<3x3x128x128xbf16, #tpu.memory_space<vmem>>, vector<1x1x128x128xbf16>
    %29 = vector.shape_cast %28 : vector<1x1x128x128xbf16> to vector<128x128xbf16>
    %cst_19 = arith.constant dense<0.000000e+00> : vector<128x128xf32>
    %30 = tpu.matmul %27, %29, %cst_19 {dimension_numbers = #tpu.dot_dimension_numbers<[1], [0], [0], [1], [0, 0, 1, 1], [], []>} : vector<128x128xbf16>, vector<128x128xbf16>, vector<128x128xf32> -> vector<128x128xf32>
    %31 = arith.addf %25, %30 : vector<128x128xf32>
    %32 = vector.extract_strided_slice %6 {offsets = [1, 1, 0], sizes = [8, 16, 128], strides = [1, 1, 1]} : vector<10x18x128xbf16> to vector<8x16x128xbf16>
    %33 = vector.shape_cast %32 : vector<8x16x128xbf16> to vector<128x128xbf16>
    %c1_20 = arith.constant 1 : index
    %c1_21 = arith.constant 1 : index
    %c0_22 = arith.constant 0 : index
    %c0_23 = arith.constant 0 : index
    %34 = vector.load %arg5[%c1_20, %c1_21, %c0_22, %c0_23] : memref<3x3x128x128xbf16, #tpu.memory_space<vmem>>, vector<1x1x128x128xbf16>
    %35 = vector.shape_cast %34 : vector<1x1x128x128xbf16> to vector<128x128xbf16>
    %cst_24 = arith.constant dense<0.000000e+00> : vector<128x128xf32>
    %36 = tpu.matmul %33, %35, %cst_24 {dimension_numbers = #tpu.dot_dimension_numbers<[1], [0], [0], [1], [0, 0, 1, 1], [], []>} : vector<128x128xbf16>, vector<128x128xbf16>, vector<128x128xf32> -> vector<128x128xf32>
    %37 = arith.addf %31, %36 : vector<128x128xf32>
    %38 = vector.extract_strided_slice %6 {offsets = [1, 2, 0], sizes = [8, 16, 128], strides = [1, 1, 1]} : vector<10x18x128xbf16> to vector<8x16x128xbf16>
    %39 = vector.shape_cast %38 : vector<8x16x128xbf16> to vector<128x128xbf16>
    %c1_25 = arith.constant 1 : index
    %c2_26 = arith.constant 2 : index
    %c0_27 = arith.constant 0 : index
    %c0_28 = arith.constant 0 : index
    %40 = vector.load %arg5[%c1_25, %c2_26, %c0_27, %c0_28] : memref<3x3x128x128xbf16, #tpu.memory_space<vmem>>, vector<1x1x128x128xbf16>
    %41 = vector.shape_cast %40 : vector<1x1x128x128xbf16> to vector<128x128xbf16>
    %cst_29 = arith.constant dense<0.000000e+00> : vector<128x128xf32>
    %42 = tpu.matmul %39, %41, %cst_29 {dimension_numbers = #tpu.dot_dimension_numbers<[1], [0], [0], [1], [0, 0, 1, 1], [], []>} : vector<128x128xbf16>, vector<128x128xbf16>, vector<128x128xf32> -> vector<128x128xf32>
    %43 = arith.addf %37, %42 : vector<128x128xf32>
    %44 = vector.extract_strided_slice %6 {offsets = [2, 0, 0], sizes = [8, 16, 128], strides = [1, 1, 1]} : vector<10x18x128xbf16> to vector<8x16x128xbf16>
    %45 = vector.shape_cast %44 : vector<8x16x128xbf16> to vector<128x128xbf16>
    %c2_30 = arith.constant 2 : index
    %c0_31 = arith.constant 0 : index
    %c0_32 = arith.constant 0 : index
    %c0_33 = arith.constant 0 : index
    %46 = vector.load %arg5[%c2_30, %c0_31, %c0_32, %c0_33] : memref<3x3x128x128xbf16, #tpu.memory_space<vmem>>, vector<1x1x128x128xbf16>
    %47 = vector.shape_cast %46 : vector<1x1x128x128xbf16> to vector<128x128xbf16>
    %cst_34 = arith.constant dense<0.000000e+00> : vector<128x128xf32>
    %48 = tpu.matmul %45, %47, %cst_34 {dimension_numbers = #tpu.dot_dimension_numbers<[1], [0], [0], [1], [0, 0, 1, 1], [], []>} : vector<128x128xbf16>, vector<128x128xbf16>, vector<128x128xf32> -> vector<128x128xf32>
    %49 = arith.addf %43, %48 : vector<128x128xf32>
    %50 = vector.extract_strided_slice %6 {offsets = [2, 1, 0], sizes = [8, 16, 128], strides = [1, 1, 1]} : vector<10x18x128xbf16> to vector<8x16x128xbf16>
    %51 = vector.shape_cast %50 : vector<8x16x128xbf16> to vector<128x128xbf16>
    %c2_35 = arith.constant 2 : index
    %c1_36 = arith.constant 1 : index
    %c0_37 = arith.constant 0 : index
    %c0_38 = arith.constant 0 : index
    %52 = vector.load %arg5[%c2_35, %c1_36, %c0_37, %c0_38] : memref<3x3x128x128xbf16, #tpu.memory_space<vmem>>, vector<1x1x128x128xbf16>
    %53 = vector.shape_cast %52 : vector<1x1x128x128xbf16> to vector<128x128xbf16>
    %cst_39 = arith.constant dense<0.000000e+00> : vector<128x128xf32>
    %54 = tpu.matmul %51, %53, %cst_39 {dimension_numbers = #tpu.dot_dimension_numbers<[1], [0], [0], [1], [0, 0, 1, 1], [], []>} : vector<128x128xbf16>, vector<128x128xbf16>, vector<128x128xf32> -> vector<128x128xf32>
    %55 = arith.addf %49, %54 : vector<128x128xf32>
    %56 = vector.extract_strided_slice %6 {offsets = [2, 2, 0], sizes = [8, 16, 128], strides = [1, 1, 1]} : vector<10x18x128xbf16> to vector<8x16x128xbf16>
    %57 = vector.shape_cast %56 : vector<8x16x128xbf16> to vector<128x128xbf16>
    %c2_40 = arith.constant 2 : index
    %c2_41 = arith.constant 2 : index
    %c0_42 = arith.constant 0 : index
    %c0_43 = arith.constant 0 : index
    %58 = vector.load %arg5[%c2_40, %c2_41, %c0_42, %c0_43] : memref<3x3x128x128xbf16, #tpu.memory_space<vmem>>, vector<1x1x128x128xbf16>
    %59 = vector.shape_cast %58 : vector<1x1x128x128xbf16> to vector<128x128xbf16>
    %cst_44 = arith.constant dense<0.000000e+00> : vector<128x128xf32>
    %60 = tpu.matmul %57, %59, %cst_44 {dimension_numbers = #tpu.dot_dimension_numbers<[1], [0], [0], [1], [0, 0, 1, 1], [], []>} : vector<128x128xbf16>, vector<128x128xbf16>, vector<128x128xf32> -> vector<128x128xf32>
    %61 = arith.addf %55, %60 : vector<128x128xf32>
    %c0_45 = arith.constant 0 : index
    %c0_46 = arith.constant 0 : index
    %62 = vector.load %arg6[%c0_45, %c0_46] : memref<1x128xf32, #tpu.memory_space<vmem>>, vector<1x128xf32>
    %63 = vector.broadcast %62 : vector<1x128xf32> to vector<128x128xf32>
    %64 = arith.addf %61, %63 : vector<128x128xf32>
    %65 = vector.shape_cast %64 : vector<128x128xf32> to vector<1x8x16x128xf32>
    %c0_47 = arith.constant 0 : index
    %c0_48 = arith.constant 0 : index
    %c0_49 = arith.constant 0 : index
    %c0_50 = arith.constant 0 : index
    %66 = vector.load %arg7[%c0_47, %c0_48, %c0_49, %c0_50] : memref<1x8x16x128xf32, #tpu.memory_space<vmem>>, vector<1x8x16x128xf32>
    tpu.vector_store %arg7[%c0_47, %c0_48, %c0_49, %c0_50], %65 {strides = array<i32>} : memref<1x8x16x128xf32, #tpu.memory_space<vmem>>, vector<1x8x16x128xf32>,
    %c0_51 = arith.constant 0 : index
    %c0_52 = arith.constant 0 : index
    %c0_53 = arith.constant 0 : index
    %67 = vector.load %arg8[%c0_51, %c0_52, %c0_53] : memref<1x1x128xf32, #tpu.memory_space<vmem>>, vector<1x1x128xf32>
    %cst_54 = arith.constant dense<0.000000e+00> : vector<128xf32>
    %68 = vector.multi_reduction <add>, %64, %cst_54 [0] : vector<128x128xf32> to vector<128xf32>
    %69 = vector.shape_cast %68 : vector<128xf32> to vector<1x128xf32>
    %70 = vector.shape_cast %69 : vector<1x128xf32> to vector<1x1x128xf32>
    %71 = arith.addf %67, %70 : vector<1x1x128xf32>
    %c0_55 = arith.constant 0 : index
    %c0_56 = arith.constant 0 : index
    %c0_57 = arith.constant 0 : index
    %72 = vector.load %arg8[%c0_55, %c0_56, %c0_57] : memref<1x1x128xf32, #tpu.memory_space<vmem>>, vector<1x1x128xf32>
    tpu.vector_store %arg8[%c0_55, %c0_56, %c0_57], %71 {strides = array<i32>} : memref<1x1x128xf32, #tpu.memory_space<vmem>>, vector<1x1x128xf32>,
    %c0_58 = arith.constant 0 : index
    %c0_59 = arith.constant 0 : index
    %c0_60 = arith.constant 0 : index
    %73 = vector.load %arg9[%c0_58, %c0_59, %c0_60] : memref<1x1x128xf32, #tpu.memory_space<vmem>>, vector<1x1x128xf32>
    %74 = arith.mulf %64, %64 : vector<128x128xf32>
    %cst_61 = arith.constant dense<0.000000e+00> : vector<128xf32>
    %75 = vector.multi_reduction <add>, %74, %cst_61 [0] : vector<128x128xf32> to vector<128xf32>
    %76 = vector.shape_cast %75 : vector<128xf32> to vector<1x128xf32>
    %77 = vector.shape_cast %76 : vector<1x128xf32> to vector<1x1x128xf32>
    %78 = arith.addf %73, %77 : vector<1x1x128xf32>
    %c0_62 = arith.constant 0 : index
    %c0_63 = arith.constant 0 : index
    %c0_64 = arith.constant 0 : index
    %79 = vector.load %arg9[%c0_62, %c0_63, %c0_64] : memref<1x1x128xf32, #tpu.memory_space<vmem>>, vector<1x1x128xf32>
    tpu.vector_store %arg9[%c0_62, %c0_63, %c0_64], %78 {strides = array<i32>} : memref<1x1x128xf32, #tpu.memory_space<vmem>>, vector<1x1x128xf32>,
    return
  }
  func.func @transform_0(%arg0: i32, %arg1: i32) -> (i32, i32, i32, i32) {
    %c0_i32 = arith.constant 0 : i32
    %c0_i32_0 = arith.constant 0 : i32
    %c0_i32_1 = arith.constant 0 : i32
    %c0_i32_2 = arith.constant 0 : i32
    return %arg0, %c0_i32, %c0_i32_0, %c0_i32_1 : i32, i32, i32, i32
  }
  func.func @transform_1(%arg0: i32, %arg1: i32) -> (i32, i32) {
    %c0_i32 = arith.constant 0 : i32
    %c0_i32_0 = arith.constant 0 : i32
    %c0_i32_1 = arith.constant 0 : i32
    return %c0_i32, %c0_i32_0 : i32, i32
  }
  func.func @transform_2(%arg0: i32, %arg1: i32) -> (i32, i32) {
    %c0_i32 = arith.constant 0 : i32
    %c0_i32_0 = arith.constant 0 : i32
    %c0_i32_1 = arith.constant 0 : i32
    return %c0_i32, %c0_i32_0 : i32, i32
  }
  func.func @transform_3(%arg0: i32, %arg1: i32) -> (i32, i32, i32, i32) {
    %c0_i32 = arith.constant 0 : i32
    %c0_i32_0 = arith.constant 0 : i32
    %c0_i32_1 = arith.constant 0 : i32
    %c0_i32_2 = arith.constant 0 : i32
    %c0_i32_3 = arith.constant 0 : i32
    return %c0_i32, %c0_i32_0, %c0_i32_1, %c0_i32_2 : i32, i32, i32, i32
  }
  func.func @transform_4(%arg0: i32, %arg1: i32) -> (i32, i32) {
    %c0_i32 = arith.constant 0 : i32
    %c0_i32_0 = arith.constant 0 : i32
    %c0_i32_1 = arith.constant 0 : i32
    return %c0_i32, %c0_i32_0 : i32, i32
  }
  func.func @transform_5(%arg0: i32, %arg1: i32) -> (i32, i32, i32, i32) {
    %c0_i32 = arith.constant 0 : i32
    %c0_i32_0 = arith.constant 0 : i32
    %c0_i32_1 = arith.constant 0 : i32
    return %arg0, %arg1, %c0_i32, %c0_i32_0 : i32, i32, i32, i32
  }
  func.func @transform_6(%arg0: i32, %arg1: i32) -> (i32, i32, i32) {
    %c0_i32 = arith.constant 0 : i32
    %c0_i32_0 = arith.constant 0 : i32
    %c0_i32_1 = arith.constant 0 : i32
    return %arg0, %c0_i32, %c0_i32_0 : i32, i32, i32
  }
  func.func @transform_7(%arg0: i32, %arg1: i32) -> (i32, i32, i32) {
    %c0_i32 = arith.constant 0 : i32
    %c0_i32_0 = arith.constant 0 : i32
    %c0_i32_1 = arith.constant 0 : i32
    return %arg0, %c0_i32, %c0_i32_0 : i32, i32, i32
  }
}

</mosaic_0001>

<llo_original>
// kernel: conv_block_forward.5
$region0: #{conv_block_forward.5}
  #allocation0 [shape = 'u32[]', space=smem, size = 0x4, offset = 0x4, fixed_abs, tag = 'smem constant byte address 0x4 - core index']
  #allocation1 [shape = 'u32[144,128]{1,0:T(1,128)}', space=vmem, size = 0x12000, scoped, tag = 'internal scratch']
  %s0 = inlined_call_operand.vmem [shape: f32[2,16,16,128], index: 0, kind: input, shape index: {}]
  %s1 = inlined_call_operand.vmem [shape: f32[1,128], index: 1, kind: input, shape index: {}]
  %s2 = inlined_call_operand.vmem [shape: f32[1,128], index: 2, kind: input, shape index: {}]
  %s3 = inlined_call_operand.vmem [shape: f32[2,16,16,128], index: 3, kind: output, shape index: {}]
  %s4 = sld [smem:[#allocation0]]
  $region45: #{conv_block_forward.5} parent=0
    _
  %s6 = ssub.s32 1, %s4
  %s7 = scalar_select 0, %s6, %s4
  loop: start=0, step=1, limit=6
  $region2: #{conv_block_forward.5} parent=0 // loop_pre_header
    _
  $region3: #{conv_block_forward.5} parent=0 // loop_header
    %s9 = sphi 0, %s13
    %p10 = scmp.ge.s32.totalorder %s9, 6
    %s16 = sphi 0, %s28
    %s17 = sphi 0, %s24
    %s18 = sphi 0, %s16
    %s19 = sphi 0, %s17
    %s20 = sphi 0, %s18
    %s21 = sphi 0, %s19
    %s33 = sphi 0, %s35
    %s36 = sphi 0, %s33
    %s37 = sphi 0, %s36
    %s53 = sphi 0, %s37
    %s57 = sphi 0, %s57
    %s59 = sphi 0, %s57
    %s60 = sphi 0, %s59
    %s74 = sphi 0, %s60
    %s78 = sphi 0, %s78
    %s80 = sphi 0, %s78
    %s81 = sphi 0, %s80
    %s95 = sphi 0, %s81
    %s103 = sphi 0, %s105
    %s106 = sphi 0, %s103
    %s107 = sphi 0, %s106
    %s123 = sphi 0, %s107
  $region4: #{conv_block_forward.5} parent=0 // loop_header_branch
    %12 = sbr.rel (%p10) target = $region8
  $region5: #{conv_block_forward.5} parent=0 // loop_body
    %s14 = ssub.s32 %s9, 1
    %s15 = ssub.s32 %s9, 2
    %s22 = sadd.s32 1, %s17
    %p23 = scmp.ge.s32.totalorder %s22, 2
    %s24 = scalar_select %p23, 0, %s22
    %s25 = sadd.s32 1, %s16
    %s26 = scalar_select %p23, %s25, %s16
    %p27 = scmp.ge.s32.totalorder %s26, 2
    %s28 = scalar_select %p27, 0, %s26
    %s29 = ssub.s32 %s16, %s28
    %s30 = ssub.s32 %s17, %s24
    %s31 = sor.u32 %s29, %s30
    %p32 = scmp.eq.s32.totalorder %s31, 0
    %s34 = sadd.s32 %s33, 1
    %s35 = scalar_select %p32, %s33, %s34
    %p38 = pneg %p32
    %p39 = scmp.eq.s32.totalorder %s9, 3
    %p40 = por %p38, %p39
    %p41 = scmp.ne.s32.totalorder %s33, %s36
    %p42 = scmp.eq.s32.totalorder %s9, 0
    %p43 = por %p41, %p42
    %p44 = scmp.ne.s32.totalorder %s33, %s36
    %p45 = scmp.eq.s32.totalorder %s14, 3
    %p46 = por %p44, %p45
    %p47 = scmp.ne.s32.totalorder %s36, %s37
    %p48 = scmp.eq.s32.totalorder %s14, 0
    %p49 = por %p47, %p48
    %p50 = scmp.ne.s32.totalorder %s36, %s37
    %p51 = scmp.eq.s32.totalorder %s15, 3
    %p52 = por %p50, %p51
    %p54 = scmp.ne.s32.totalorder %s37, %s53
    %p55 = scmp.eq.s32.totalorder %s15, 0
    %p56 = por %p54, %p55
    %s58 = sadd.s32 %s57, 1
    %p61 = scmp.eq.s32.totalorder %s9, 3
    %p62 = scmp.ne.s32.totalorder %s57, %s59
    %p63 = scmp.eq.s32.totalorder %s9, 0
    %p64 = por %p62, %p63
    %p65 = scmp.ne.s32.totalorder %s57, %s59
    %p66 = scmp.eq.s32.totalorder %s14, 3
    %p67 = por %p65, %p66
    %p68 = scmp.ne.s32.totalorder %s59, %s60
    %p69 = scmp.eq.s32.totalorder %s14, 0
    %p70 = por %p68, %p69
    %p71 = scmp.ne.s32.totalorder %s59, %s60
    %p72 = scmp.eq.s32.totalorder %s15, 3
    %p73 = por %p71, %p72
    %p75 = scmp.ne.s32.totalorder %s60, %s74
    %p76 = scmp.eq.s32.totalorder %s15, 0
    %p77 = por %p75, %p76
    %s79 = sadd.s32 %s78, 1
    %p82 = scmp.eq.s32.totalorder %s9, 3
    %p83 = scmp.ne.s32.totalorder %s78, %s80
    %p84 = scmp.eq.s32.totalorder %s9, 0
    %p85 = por %p83, %p84
    %p86 = scmp.ne.s32.totalorder %s78, %s80
    %p87 = scmp.eq.s32.totalorder %s14, 3
    %p88 = por %p86, %p87
    %p89 = scmp.ne.s32.totalorder %s80, %s81
    %p90 = scmp.eq.s32.totalorder %s14, 0
    %p91 = por %p89, %p90
    %p92 = scmp.ne.s32.totalorder %s80, %s81
    %p93 = scmp.eq.s32.totalorder %s15, 3
    %p94 = por %p92, %p93
    %p96 = scmp.ne.s32.totalorder %s81, %s95
    %p97 = scmp.eq.s32.totalorder %s15, 0
    %p98 = por %p96, %p97
    %s99 = ssub.s32 %s16, %s28
    %s100 = ssub.s32 %s17, %s24
    %s101 = sor.u32 %s99, %s100
    %p102 = scmp.eq.s32.totalorder %s101, 0
    %s104 = sadd.s32 %s103, 1
    %s105 = scalar_select %p102, %s103, %s104
    %p108 = pneg %p102
    %p109 = scmp.eq.s32.totalorder %s9, 3
    %p110 = por %p108, %p109
    %p111 = scmp.ne.s32.totalorder %s103, %s106
    %p112 = scmp.eq.s32.totalorder %s9, 0
    %p113 = por %p111, %p112
    %p114 = scmp.ne.s32.totalorder %s103, %s106
    %p115 = scmp.eq.s32.totalorder %s14, 3
    %p116 = por %p114, %p115
    %p117 = scmp.ne.s32.totalorder %s106, %s107
    %p118 = scmp.eq.s32.totalorder %s14, 0
    %p119 = por %p117, %p118
    %p120 = scmp.ne.s32.totalorder %s106, %s107
    %p121 = scmp.eq.s32.totalorder %s15, 3
    %p122 = por %p120, %p121
    %p124 = scmp.ne.s32.totalorder %s107, %s123
    %p125 = scmp.eq.s32.totalorder %s15, 0
    %p126 = por %p124, %p125
    %p127 = scmp.le.s32.totalorder 1, %s9
    %p128 = scmp.lt.s32.totalorder %s9, 5
    %p129 = pnand %p127, %p128
    %p130 = pneg %p129
    // Predicated region
    $region9: #{conv_block_forward.5} parent=5 // pred_check
      _
    $region10: #{conv_block_forward.5} parent=5 // pred_check_branch
      %132 = sbr.rel (%p129) target = $region12
    $region11: #{conv_block_forward.5} parent=5 // pred_region
      %s133 = ssub.s32 %s9, 1
      // Predicated region
      $region13: #{conv_block_forward.5} parent=11 // pred_check
        %p134 = pneg %p70
      $region14: #{conv_block_forward.5} parent=11 // pred_check_branch
        %136 = sbr.rel (%p134) target = $region16
      $region15: #{conv_block_forward.5} parent=11 // pred_region
        _
      $region16: #{conv_block_forward.5} parent=11 // pred_fallthru
        _
      // Predicated region
      $region17: #{conv_block_forward.5} parent=11 // pred_check
        %p137 = pneg %p91
      $region18: #{conv_block_forward.5} parent=11 // pred_check_branch
        %139 = sbr.rel (%p137) target = $region20
      $region19: #{conv_block_forward.5} parent=11 // pred_region
        _
      $region20: #{conv_block_forward.5} parent=11 // pred_fallthru
        _
    $region12: #{conv_block_forward.5} parent=5 // pred_fallthru
      _
    %p140 = scmp.lt.s32.totalorder %s9, 4
    // Predicated region
    $region21: #{conv_block_forward.5} parent=5 // pred_check
      %p141 = pneg %p140
    $region22: #{conv_block_forward.5} parent=5 // pred_check_branch
      %143 = sbr.rel (%p141) target = $region24
    $region23: #{conv_block_forward.5} parent=5 // pred_region
      // Predicated region
      $region25: #{conv_block_forward.5} parent=23 // pred_check
        %p144 = pneg %p43
      $region26: #{conv_block_forward.5} parent=23 // pred_check_branch
        %146 = sbr.rel (%p144) target = $region28
      $region27: #{conv_block_forward.5} parent=23 // pred_region
        %s147 = smul.u32 8, %s17
        %p148 = scmp.lt.s32.totalorder %s16, 1
        %s149 = scalar_select %p148, %s16, 1
        %p150 = scmp.lt.s32.totalorder %s147, 15
        %s151 = scalar_select %p150, %s147, 15
        %s152 = smul.addr %s151, 2
        %s153 = smul.addr %s149, 32
        %s154 = sadd.s32 %s152, %s153
        %s155 = smul.addr %s154, 8
        %s156 = scalar_lea.vmem %s0, %s155
        %s157 = smul.u32 8, %s17
      $region28: #{conv_block_forward.5} parent=23 // pred_fallthru
        _
    $region24: #{conv_block_forward.5} parent=5 // pred_fallthru
      _
    %p158 = scmp.le.s32.totalorder 1, %s9
    %p159 = scmp.lt.s32.totalorder %s9, 5
    %p160 = pnand %p158, %p159
    %p161 = pneg %p160
    // Predicated region
    $region29: #{conv_block_forward.5} parent=5 // pred_check
      _
    $region30: #{conv_block_forward.5} parent=5 // pred_check_branch
      %163 = sbr.rel (%p160) target = $region32
    $region31: #{conv_block_forward.5} parent=5 // pred_region
      %s164 = ssub.s32 %s9, 1
      %s165 = smul.u32 8, %s19
      %p166 = scmp.lt.s32.totalorder %s18, 1
      %s167 = scalar_select %p166, %s18, 1
      %p168 = scmp.lt.s32.totalorder %s165, 15
      %s169 = scalar_select %p168, %s165, 15
      %s170 = smul.addr %s169, 2
      %s171 = smul.addr %s167, 32
      %s172 = sadd.s32 %s170, %s171
      %s173 = smul.addr %s172, 8
      %s174 = scalar_lea.vmem %s0, %s173
      %p175 = pneg %p49
      %p176 = pneg %p46
      %p177 = pneg %p70
      %p178 = pneg %p67
      %p179 = pneg %p91
      %p180 = pneg %p88
      %p181 = pneg %p119
      %p182 = pneg %p116
      %s183 = smul.u32 8, %s19
      %p184 = scmp.lt.s32.totalorder %s18, 1
      %s185 = scalar_select %p184, %s18, 1
      %p186 = scmp.lt.s32.totalorder %s183, 15
      %s187 = scalar_select %p186, %s183, 15
      %s188 = smul.addr %s187, 2
      %s189 = smul.addr %s185, 32
      %s190 = sadd.s32 %s188, %s189
      %s191 = smul.addr %s190, 8
      %s192 = scalar_lea.vmem %s3, %s191
      %s193 = smul.u32 8, %s19
      %p194 = scmp.lt.s32.totalorder %s18, 1
      %s195 = scalar_select %p194, %s18, 1
      %p196 = scmp.lt.s32.totalorder %s193, 15
      %s197 = scalar_select %p196, %s193, 15
      %s198 = smul.addr %s197, 2
      %s199 = smul.addr %s195, 32
      %s200 = sadd.s32 %s198, %s199
      %s201 = smul.addr %s200, 8
      %s202 = scalar_lea.vmem %s0, %s201
      %s203 = smul.u32 8, %s19
      %s204 = smul.u32 8, %s19
      %p205 = scmp.lt.s32.totalorder %s18, 1
      %s206 = scalar_select %p205, %s18, 1
      %p207 = scmp.lt.s32.totalorder %s204, 15
      %s208 = scalar_select %p207, %s204, 15
      %s209 = smul.addr %s208, 2
      %s210 = smul.addr %s206, 32
      %s211 = sadd.s32 %s209, %s210
      %s212 = smul.addr %s211, 8
      %s213 = scalar_lea.vmem %s3, %s212
      %s214 = smul.u32 8, %s19
      %v215 = vld [vmem:[%s202] sm:$0xff]
      %v216 = vld [vmem:[%s202 + $0x8] sm:$0xff]
      %v217 = vld [vmem:[%s202 + $0x10] sm:$0xff]
      %v218 = vld [vmem:[%s202 + $0x18] sm:$0xff]
      %v219 = vld [vmem:[%s202 + $0x20] sm:$0xff]
      %v220 = vld [vmem:[%s202 + $0x28] sm:$0xff]
      %v221 = vld [vmem:[%s202 + $0x30] sm:$0xff]
      %v222 = vld [vmem:[%s202 + $0x38] sm:$0xff]
      %v223 = vld [vmem:[%s202 + $0x40] sm:$0xff]
      %v224 = vld [vmem:[%s202 + $0x48] sm:$0xff]
      %v225 = vld [vmem:[%s202 + $0x50] sm:$0xff]
      %v226 = vld [vmem:[%s202 + $0x58] sm:$0xff]
      %v227 = vld [vmem:[%s202 + $0x60] sm:$0xff]
      %v228 = vld [vmem:[%s202 + $0x68] sm:$0xff]
      %v229 = vld [vmem:[%s202 + $0x70] sm:$0xff]
      %v230 = vld [vmem:[%s202 + $0x78] sm:$0xff]
      %v231 = vld [vmem:[%s1] sm:$0x1]
      %v233 = vlaneseq
      %v234 = vshrl.u32 %v233, 7
      %v235 = vsub.s32 0, %v234
      %v236 = vrot.slane %v231, %v235
      %v238 = vmul.f32 %v215, %v236
      %v239 = vmul.f32 %v216, %v236
      %v240 = vmul.f32 %v217, %v236
      %v241 = vmul.f32 %v218, %v236
      %v242 = vmul.f32 %v219, %v236
      %v243 = vmul.f32 %v220, %v236
      %v244 = vmul.f32 %v221, %v236
      %v245 = vmul.f32 %v222, %v236
      %v246 = vmul.f32 %v223, %v236
      %v247 = vmul.f32 %v224, %v236
      %v248 = vmul.f32 %v225, %v236
      %v249 = vmul.f32 %v226, %v236
      %v250 = vmul.f32 %v227, %v236
      %v251 = vmul.f32 %v228, %v236
      %v252 = vmul.f32 %v229, %v236
      %v253 = vmul.f32 %v230, %v236
      %v254 = vld [vmem:[%s2] sm:$0x1]
      %v256 = vlaneseq
      %v257 = vshrl.u32 %v256, 7
      %v258 = vsub.s32 0, %v257
      %v259 = vrot.slane %v254, %v258
      %v261 = vadd.f32 %v238, %v259
      %v262 = vadd.f32 %v239, %v259
      %v263 = vadd.f32 %v240, %v259
      %v264 = vadd.f32 %v241, %v259
      %v265 = vadd.f32 %v242, %v259
      %v266 = vadd.f32 %v243, %v259
      %v267 = vadd.f32 %v244, %v259
      %v268 = vadd.f32 %v245, %v259
      %v269 = vadd.f32 %v246, %v259
      %v270 = vadd.f32 %v247, %v259
      %v271 = vadd.f32 %v248, %v259
      %v272 = vadd.f32 %v249, %v259
      %v273 = vadd.f32 %v250, %v259
      %v274 = vadd.f32 %v251, %v259
      %v275 = vadd.f32 %v252, %v259
      %v276 = vadd.f32 %v253, %v259
      %v277 = vmax.f32 %v261, 0.0
      %v278 = vmax.f32 %v262, 0.0
      %v279 = vmax.f32 %v263, 0.0
      %v280 = vmax.f32 %v264, 0.0
      %v281 = vmax.f32 %v265, 0.0
      %v282 = vmax.f32 %v266, 0.0
      %v283 = vmax.f32 %v267, 0.0
      %v284 = vmax.f32 %v268, 0.0
      %v285 = vmax.f32 %v269, 0.0
      %v286 = vmax.f32 %v270, 0.0
      %v287 = vmax.f32 %v271, 0.0
      %v288 = vmax.f32 %v272, 0.0
      %v289 = vmax.f32 %v273, 0.0
      %v290 = vmax.f32 %v274, 0.0
      %v291 = vmax.f32 %v275, 0.0
      %v292 = vmax.f32 %v276, 0.0
      %293 = vst [vmem:[%s213] sm:$0xff] %v277
      %294 = vst [vmem:[%s213 + $0x8] sm:$0xff] %v278
      %295 = vst [vmem:[%s213 + $0x10] sm:$0xff] %v279
      %296 = vst [vmem:[%s213 + $0x18] sm:$0xff] %v280
      %297 = vst [vmem:[%s213 + $0x20] sm:$0xff] %v281
      %298 = vst [vmem:[%s213 + $0x28] sm:$0xff] %v282
      %299 = vst [vmem:[%s213 + $0x30] sm:$0xff] %v283
      %300 = vst [vmem:[%s213 + $0x38] sm:$0xff] %v284
      %301 = vst [vmem:[%s213 + $0x40] sm:$0xff] %v285
      %302 = vst [vmem:[%s213 + $0x48] sm:$0xff] %v286
      %303 = vst [vmem:[%s213 + $0x50] sm:$0xff] %v287
      %304 = vst [vmem:[%s213 + $0x58] sm:$0xff] %v288
      %305 = vst [vmem:[%s213 + $0x60] sm:$0xff] %v289
      %306 = vst [vmem:[%s213 + $0x68] sm:$0xff] %v290
      %307 = vst [vmem:[%s213 + $0x70] sm:$0xff] %v291
      %308 = vst [vmem:[%s213 + $0x78] sm:$0xff] %v292
      %s309 = smul.u32 8, %s19
      %p310 = scmp.lt.s32.totalorder %s18, 1
      %s311 = scalar_select %p310, %s18, 1
      %p312 = scmp.lt.s32.totalorder %s309, 15
      %s313 = scalar_select %p312, %s309, 15
      %s314 = smul.addr %s313, 2
      %s315 = smul.addr %s311, 32
      %s316 = sadd.s32 %s314, %s315
      %s317 = smul.addr %s316, 8
      %s318 = scalar_lea.vmem %s3, %s317
      // Predicated region
      $region33: #{conv_block_forward.5} parent=31 // pred_check
        %p319 = pneg %p116
      $region34: #{conv_block_forward.5} parent=31 // pred_check_branch
        %321 = sbr.rel (%p319) target = $region36
      $region35: #{conv_block_forward.5} parent=31 // pred_region
        %s322 = smul.u32 8, %s19
      $region36: #{conv_block_forward.5} parent=31 // pred_fallthru
        _
    $region32: #{conv_block_forward.5} parent=5 // pred_fallthru
      _
    %p323 = scmp.le.s32.totalorder 2, %s9
    // Predicated region
    $region37: #{conv_block_forward.5} parent=5 // pred_check
      %p324 = pneg %p323
    $region38: #{conv_block_forward.5} parent=5 // pred_check_branch
      %326 = sbr.rel (%p324) target = $region40
    $region39: #{conv_block_forward.5} parent=5 // pred_region
      %s327 = ssub.s32 %s9, 2
      // Predicated region
      $region41: #{conv_block_forward.5} parent=39 // pred_check
        %p328 = pneg %p122
      $region42: #{conv_block_forward.5} parent=39 // pred_check_branch
        %330 = sbr.rel (%p328) target = $region44
      $region43: #{conv_block_forward.5} parent=39 // pred_region
        %s331 = smul.u32 8, %s21
        %p332 = scmp.lt.s32.totalorder %s20, 1
        %s333 = scalar_select %p332, %s20, 1
        %p334 = scmp.lt.s32.totalorder %s331, 15
        %s335 = scalar_select %p334, %s331, 15
        %s336 = smul.addr %s335, 2
        %s337 = smul.addr %s333, 32
        %s338 = sadd.s32 %s336, %s337
        %s339 = smul.addr %s338, 8
        %s340 = scalar_lea.vmem %s3, %s339
      $region44: #{conv_block_forward.5} parent=39 // pred_fallthru
        _
    $region40: #{conv_block_forward.5} parent=5 // pred_fallthru
      _
  $region6: #{conv_block_forward.5} parent=0 // loop_footer
    %s13 = sadd.s32 1, %s9
  $region7: #{conv_block_forward.5} parent=0 // loop_footer_branch
    %8 = sbr.rel target = $region3
  $region8: #{conv_block_forward.5} parent=0 // loop_exit
    _

// kernel: conv_block_forward.3
$region0: #{conv_block_forward.3}
  #allocation0 [shape = 'u32[]', space=smem, size = 0x4, offset = 0x4, fixed_abs, tag = 'smem constant byte address 0x4 - core index']
  #allocation1 [shape = 'u32[144,128]{1,0:T(1,128)}', space=vmem, size = 0x12000, scoped, tag = 'internal scratch']
  %s0 = inlined_call_operand.vmem [shape: bf16[2,18,18,128], index: 0, kind: input, shape index: {}]
  %s1 = inlined_call_operand.vmem [shape: bf16[3,3,128,128], index: 1, kind: input, shape index: {}]
  %s2 = inlined_call_operand.vmem [shape: f32[1,128], index: 2, kind: input, shape index: {}]
  %s3 = inlined_call_operand.vmem [shape: f32[2,16,16,128], index: 3, kind: output, shape index: {0}]
  %s4 = inlined_call_operand.vmem [shape: f32[2,1,128], index: 4, kind: output, shape index: {1}]
  %s5 = inlined_call_operand.vmem [shape: f32[2,1,128], index: 5, kind: output, shape index: {2}]
  %6 = xla_tuple %s3, %s4, %s5
  %s7 = sld [smem:[#allocation0]]
  $region65: #{conv_block_forward.3} parent=0
    _
  %s9 = ssub.s32 1, %s7
  %s10 = scalar_select 0, %s9, %s7
  loop: start=0, step=1, limit=6
  $region2: #{conv_block_forward.3} parent=0 // loop_pre_header
    _
  $region3: #{conv_block_forward.3} parent=0 // loop_header
    %s12 = sphi 0, %s16
    %p13 = scmp.ge.s32.totalorder %s12, 6
    %s19 = sphi 0, %s31
    %s20 = sphi 0, %s27
    %s21 = sphi 0, %s19
    %s22 = sphi 0, %s20
    %s23 = sphi 0, %s21
    %s24 = sphi 0, %s22
    %s34 = sphi 0, %s36
    %s37 = sphi 0, %s34
    %s38 = sphi 0, %s37
    %s54 = sphi 0, %s38
    %s58 = sphi 0, %s58
    %s60 = sphi 0, %s58
    %s61 = sphi 0, %s60
    %s75 = sphi 0, %s61
    %s79 = sphi 0, %s79
    %s81 = sphi 0, %s79
    %s82 = sphi 0, %s81
    %s96 = sphi 0, %s82
    %s104 = sphi 0, %s106
    %s107 = sphi 0, %s104
    %s108 = sphi 0, %s107
    %s124 = sphi 0, %s108
    %s130 = sphi 0, %s132
    %s133 = sphi 0, %s130
    %s134 = sphi 0, %s133
    %s150 = sphi 0, %s134
    %s156 = sphi 0, %s158
    %s159 = sphi 0, %s156
    %s160 = sphi 0, %s159
    %s176 = sphi 0, %s160
  $region4: #{conv_block_forward.3} parent=0 // loop_header_branch
    %15 = sbr.rel (%p13) target = $region8
  $region5: #{conv_block_forward.3} parent=0 // loop_body
    %s17 = ssub.s32 %s12, 1
    %s18 = ssub.s32 %s12, 2
    %s25 = sadd.s32 1, %s20
    %p26 = scmp.ge.s32.totalorder %s25, 2
    %s27 = scalar_select %p26, 0, %s25
    %s28 = sadd.s32 1, %s19
    %s29 = scalar_select %p26, %s28, %s19
    %p30 = scmp.ge.s32.totalorder %s29, 2
    %s31 = scalar_select %p30, 0, %s29
    %s32 = ssub.s32 %s19, %s31
    %p33 = scmp.eq.s32.totalorder %s32, 0
    %s35 = sadd.s32 %s34, 1
    %s36 = scalar_select %p33, %s34, %s35
    %p39 = pneg %p33
    %p40 = scmp.eq.s32.totalorder %s12, 3
    %p41 = por %p39, %p40
    %p42 = scmp.ne.s32.totalorder %s34, %s37
    %p43 = scmp.eq.s32.totalorder %s12, 0
    %p44 = por %p42, %p43
    %p45 = scmp.ne.s32.totalorder %s34, %s37
    %p46 = scmp.eq.s32.totalorder %s17, 3
    %p47 = por %p45, %p46
    %p48 = scmp.ne.s32.totalorder %s37, %s38
    %p49 = scmp.eq.s32.totalorder %s17, 0
    %p50 = por %p48, %p49
    %p51 = scmp.ne.s32.totalorder %s37, %s38
    %p52 = scmp.eq.s32.totalorder %s18, 3
    %p53 = por %p51, %p52
    %p55 = scmp.ne.s32.totalorder %s38, %s54
    %p56 = scmp.eq.s32.totalorder %s18, 0
    %p57 = por %p55, %p56
    %s59 = sadd.s32 %s58, 1
    %p62 = scmp.eq.s32.totalorder %s12, 3
    %p63 = scmp.ne.s32.totalorder %s58, %s60
    %p64 = scmp.eq.s32.totalorder %s12, 0
    %p65 = por %p63, %p64
    %p66 = scmp.ne.s32.totalorder %s58, %s60
    %p67 = scmp.eq.s32.totalorder %s17, 3
    %p68 = por %p66, %p67
    %p69 = scmp.ne.s32.totalorder %s60, %s61
    %p70 = scmp.eq.s32.totalorder %s17, 0
    %p71 = por %p69, %p70
    %p72 = scmp.ne.s32.totalorder %s60, %s61
    %p73 = scmp.eq.s32.totalorder %s18, 3
    %p74 = por %p72, %p73
    %p76 = scmp.ne.s32.totalorder %s61, %s75
    %p77 = scmp.eq.s32.totalorder %s18, 0
    %p78 = por %p76, %p77
    %s80 = sadd.s32 %s79, 1
    %p83 = scmp.eq.s32.totalorder %s12, 3
    %p84 = scmp.ne.s32.totalorder %s79, %s81
    %p85 = scmp.eq.s32.totalorder %s12, 0
    %p86 = por %p84, %p85
    %p87 = scmp.ne.s32.totalorder %s79, %s81
    %p88 = scmp.eq.s32.totalorder %s17, 3
    %p89 = por %p87, %p88
    %p90 = scmp.ne.s32.totalorder %s81, %s82
    %p91 = scmp.eq.s32.totalorder %s17, 0
    %p92 = por %p90, %p91
    %p93 = scmp.ne.s32.totalorder %s81, %s82
    %p94 = scmp.eq.s32.totalorder %s18, 3
    %p95 = por %p93, %p94
    %p97 = scmp.ne.s32.totalorder %s82, %s96
    %p98 = scmp.eq.s32.totalorder %s18, 0
    %p99 = por %p97, %p98
    %s100 = ssub.s32 %s19, %s31
    %s101 = ssub.s32 %s20, %s27
    %s102 = sor.u32 %s100, %s101
    %p103 = scmp.eq.s32.totalorder %s102, 0
    %s105 = sadd.s32 %s104, 1
    %s106 = scalar_select %p103, %s104, %s105
    %p109 = pneg %p103
    %p110 = scmp.eq.s32.totalorder %s12, 3
    %p111 = por %p109, %p110
    %p112 = scmp.ne.s32.totalorder %s104, %s107
    %p113 = scmp.eq.s32.totalorder %s12, 0
    %p114 = por %p112, %p113
    %p115 = scmp.ne.s32.totalorder %s104, %s107
    %p116 = scmp.eq.s32.totalorder %s17, 3
    %p117 = por %p115, %p116
    %p118 = scmp.ne.s32.totalorder %s107, %s108
    %p119 = scmp.eq.s32.totalorder %s17, 0
    %p120 = por %p118, %p119
    %p121 = scmp.ne.s32.totalorder %s107, %s108
    %p122 = scmp.eq.s32.totalorder %s18, 3
    %p123 = por %p121, %p122
    %p125 = scmp.ne.s32.totalorder %s108, %s124
    %p126 = scmp.eq.s32.totalorder %s18, 0
    %p127 = por %p125, %p126
    %s128 = ssub.s32 %s19, %s31
    %p129 = scmp.eq.s32.totalorder %s128, 0
    %s131 = sadd.s32 %s130, 1
    %s132 = scalar_select %p129, %s130, %s131
    %p135 = pneg %p129
    %p136 = scmp.eq.s32.totalorder %s12, 3
    %p137 = por %p135, %p136
    %p138 = scmp.ne.s32.totalorder %s130, %s133
    %p139 = scmp.eq.s32.totalorder %s12, 0
    %p140 = por %p138, %p139
    %p141 = scmp.ne.s32.totalorder %s130, %s133
    %p142 = scmp.eq.s32.totalorder %s17, 3
    %p143 = por %p141, %p142
    %p144 = scmp.ne.s32.totalorder %s133, %s134
    %p145 = scmp.eq.s32.totalorder %s17, 0
    %p146 = por %p144, %p145
    %p147 = scmp.ne.s32.totalorder %s133, %s134
    %p148 = scmp.eq.s32.totalorder %s18, 3
    %p149 = por %p147, %p148
    %p151 = scmp.ne.s32.totalorder %s134, %s150
    %p152 = scmp.eq.s32.totalorder %s18, 0
    %p153 = por %p151, %p152
    %s154 = ssub.s32 %s19, %s31
    %p155 = scmp.eq.s32.totalorder %s154, 0
    %s157 = sadd.s32 %s156, 1
    %s158 = scalar_select %p155, %s156, %s157
    %p161 = pneg %p155
    %p162 = scmp.eq.s32.totalorder %s12, 3
    %p163 = por %p161, %p162
    %p164 = scmp.ne.s32.totalorder %s156, %s159
    %p165 = scmp.eq.s32.totalorder %s12, 0
    %p166 = por %p164, %p165
    %p167 = scmp.ne.s32.totalorder %s156, %s159
    %p168 = scmp.eq.s32.totalorder %s17, 3
    %p169 = por %p167, %p168
    %p170 = scmp.ne.s32.totalorder %s159, %s160
    %p171 = scmp.eq.s32.totalorder %s17, 0
    %p172 = por %p170, %p171
    %p173 = scmp.ne.s32.totalorder %s159, %s160
    %p174 = scmp.eq.s32.totalorder %s18, 3
    %p175 = por %p173, %p174
    %p177 = scmp.ne.s32.totalorder %s160, %s176
    %p178 = scmp.eq.s32.totalorder %s18, 0
    %p179 = por %p177, %p178
    %p180 = scmp.le.s32.totalorder 1, %s12
    %p181 = scmp.lt.s32.totalorder %s12, 5
    %p182 = pnand %p180, %p181
    %p183 = pneg %p182
    // Predicated region
    $region9: #{conv_block_forward.3} parent=5 // pred_check
      _
    $region10: #{conv_block_forward.3} parent=5 // pred_check_branch
      %185 = sbr.rel (%p182) target = $region12
    $region11: #{conv_block_forward.3} parent=5 // pred_region
      %s186 = ssub.s32 %s12, 1
      // Predicated region
      $region13: #{conv_block_forward.3} parent=11 // pred_check
        %p187 = pneg %p71
      $region14: #{conv_block_forward.3} parent=11 // pred_check_branch
        %189 = sbr.rel (%p187) target = $region16
      $region15: #{conv_block_forward.3} parent=11 // pred_region
        _
      $region16: #{conv_block_forward.3} parent=11 // pred_fallthru
        _
      // Predicated region
      $region17: #{conv_block_forward.3} parent=11 // pred_check
        %p190 = pneg %p92
      $region18: #{conv_block_forward.3} parent=11 // pred_check_branch
        %192 = sbr.rel (%p190) target = $region20
      $region19: #{conv_block_forward.3} parent=11 // pred_region
        _
      $region20: #{conv_block_forward.3} parent=11 // pred_fallthru
        _
    $region12: #{conv_block_forward.3} parent=5 // pred_fallthru
      _
    %p193 = scmp.lt.s32.totalorder %s12, 4
    // Predicated region
    $region21: #{conv_block_forward.3} parent=5 // pred_check
      %p194 = pneg %p193
    $region22: #{conv_block_forward.3} parent=5 // pred_check_branch
      %196 = sbr.rel (%p194) target = $region24
    $region23: #{conv_block_forward.3} parent=5 // pred_region
      // Predicated region
      $region25: #{conv_block_forward.3} parent=23 // pred_check
        %p197 = pneg %p44
      $region26: #{conv_block_forward.3} parent=23 // pred_check_branch
        %199 = sbr.rel (%p197) target = $region28
      $region27: #{conv_block_forward.3} parent=23 // pred_region
        %p200 = scmp.lt.s32.totalorder %s19, 1
        %s201 = scalar_select %p200, %s19, 1
        %s202 = smul.addr %s201, 54
        %s203 = smul.addr %s202, 4
        %s204 = scalar_lea.vmem %s0, %s203
      $region28: #{conv_block_forward.3} parent=23 // pred_fallthru
        _
    $region24: #{conv_block_forward.3} parent=5 // pred_fallthru
      _
    %p205 = scmp.le.s32.totalorder 1, %s12
    %p206 = scmp.lt.s32.totalorder %s12, 5
    %p207 = pnand %p205, %p206
    %p208 = pneg %p207
    // Predicated region
    $region29: #{conv_block_forward.3} parent=5 // pred_check
      _
    $region30: #{conv_block_forward.3} parent=5 // pred_check_branch
      %210 = sbr.rel (%p207) target = $region32
    $region31: #{conv_block_forward.3} parent=5 // pred_region
      %s211 = ssub.s32 %s12, 1
      %p212 = scmp.lt.s32.totalorder %s21, 1
      %s213 = scalar_select %p212, %s21, 1
      %s214 = smul.addr %s213, 54
      %s215 = smul.addr %s214, 4
      %s216 = scalar_lea.vmem %s0, %s215
      %p217 = pneg %p50
      %p218 = pneg %p47
      %p219 = pneg %p71
      %p220 = pneg %p68
      %p221 = pneg %p92
      %p222 = pneg %p89
      %p223 = pneg %p120
      %p224 = pneg %p117
      %s225 = smul.u32 8, %s22
      %p226 = scmp.lt.s32.totalorder %s21, 1
      %s227 = scalar_select %p226, %s21, 1
      %p228 = scmp.lt.s32.totalorder %s225, 15
      %s229 = scalar_select %p228, %s225, 15
      %s230 = smul.addr %s229, 2
      %s231 = smul.addr %s227, 32
      %s232 = sadd.s32 %s230, %s231
      %s233 = smul.addr %s232, 8
      %s234 = scalar_lea.vmem %s3, %s233
      %p235 = pneg %p146
      %p236 = pneg %p143
      %p237 = scmp.lt.s32.totalorder %s21, 1
      %s238 = scalar_select %p237, %s21, 1
      %s239 = scalar_lea.vmem %s4, %s238
      %p240 = pneg %p172
      %p241 = pneg %p169
      %p242 = scmp.lt.s32.totalorder %s21, 1
      %s243 = scalar_select %p242, %s21, 1
      %s244 = scalar_lea.vmem %s5, %s243
      %p245 = scmp.lt.s32.totalorder %s21, 1
      %s246 = scalar_select %p245, %s21, 1
      %s247 = smul.addr %s246, 54
      %s248 = smul.addr %s247, 4
      %s249 = scalar_lea.vmem %s0, %s248
      %s250 = smul.u32 8, %s22
      %p251 = scmp.lt.s32.totalorder %s21, 1
      %s252 = scalar_select %p251, %s21, 1
      %p253 = scmp.lt.s32.totalorder %s250, 15
      %s254 = scalar_select %p253, %s250, 15
      %s255 = smul.addr %s254, 2
      %s256 = smul.addr %s252, 32
      %s257 = sadd.s32 %s255, %s256
      %s258 = smul.addr %s257, 8
      %s259 = scalar_lea.vmem %s3, %s258
      %s260 = smul.u32 8, %s22
      %p261 = scmp.lt.s32.totalorder %s21, 1
      %s262 = scalar_select %p261, %s21, 1
      %s263 = scalar_lea.vmem %s4, %s262
      %p264 = scmp.lt.s32.totalorder %s21, 1
      %s265 = scalar_select %p264, %s21, 1
      %s266 = scalar_lea.vmem %s5, %s265
      %p268 = scmp.eq.s32.totalorder %s22, 0
      // Predicated region
      $region33: #{conv_block_forward.3} parent=31 // pred_check
        %p269 = pneg %p268
      $region34: #{conv_block_forward.3} parent=31 // pred_check_branch
        %271 = sbr.rel (%p269) target = $region36
      $region35: #{conv_block_forward.3} parent=31 // pred_region
        %272 = vst [vmem:[%s263] sm:$0x1] 0.0
        %273 = vst [vmem:[%s266] sm:$0x1] 0.0
      $region36: #{conv_block_forward.3} parent=31 // pred_fallthru
        _
      %s274 = smul.u32 %s22, 8
      %s275 = smul.u32 %s274, 3
      %s276 = smul.addr %s275, 4
      %s277 = scalar_lea.vmem %s249, %s276
      %v278 = vld [vmem:[%s277] sm:$0xf]
      %v279 = vld [vmem:[%s277 + $0x4] sm:$0xf]
      %v280 = vld [vmem:[%s277 + $0x8] sm:$0x1]
      %v281 = vld [vmem:[%s277 + $0xc] sm:$0xf]
      %v282 = vld [vmem:[%s277 + $0x10] sm:$0xf]
      %v283 = vld [vmem:[%s277 + $0x14] sm:$0x1]
      %v284 = vld [vmem:[%s277 + $0x18] sm:$0xf]
      %v285 = vld [vmem:[%s277 + $0x1c] sm:$0xf]
      %v286 = vld [vmem:[%s277 + $0x20] sm:$0x1]
      %v287 = vld [vmem:[%s277 + $0x24] sm:$0xf]
      %v288 = vld [vmem:[%s277 + $0x28] sm:$0xf]
      %v289 = vld [vmem:[%s277 + $0x2c] sm:$0x1]
      %v290 = vld [vmem:[%s277 + $0x30] sm:$0xf]
      %v291 = vld [vmem:[%s277 + $0x34] sm:$0xf]
      %v292 = vld [vmem:[%s277 + $0x38] sm:$0x1]
      %v293 = vld [vmem:[%s277 + $0x3c] sm:$0xf]
      %v294 = vld [vmem:[%s277 + $0x40] sm:$0xf]
      %v295 = vld [vmem:[%s277 + $0x44] sm:$0x1]
      %v296 = vld [vmem:[%s277 + $0x48] sm:$0xf]
      %v297 = vld [vmem:[%s277 + $0x4c] sm:$0xf]
      %v298 = vld [vmem:[%s277 + $0x50] sm:$0x1]
      %v299 = vld [vmem:[%s277 + $0x54] sm:$0xf]
      %v300 = vld [vmem:[%s277 + $0x58] sm:$0xf]
      %v301 = vld [vmem:[%s277 + $0x5c] sm:$0x1]
      %v302 = vld [vmem:[%s277 + $0x60] sm:$0xf]
      %v303 = vld [vmem:[%s277 + $0x64] sm:$0xf]
      %v304 = vld [vmem:[%s277 + $0x68] sm:$0x1]
      %v305 = vld [vmem:[%s277 + $0x6c] sm:$0xf]
      %v306 = vld [vmem:[%s277 + $0x70] sm:$0xf]
      %v307 = vld [vmem:[%s277 + $0x74] sm:$0x1]
      %v308 = vld [vmem:[%s1] sm:$0xf]
      %v309 = vld [vmem:[%s1 + $0x4] sm:$0xf]
      %v310 = vld [vmem:[%s1 + $0x8] sm:$0xf]
      %v311 = vld [vmem:[%s1 + $0xc] sm:$0xf]
      %v312 = vld [vmem:[%s1 + $0x10] sm:$0xf]
      %v313 = vld [vmem:[%s1 + $0x14] sm:$0xf]
      %v314 = vld [vmem:[%s1 + $0x18] sm:$0xf]
      %v315 = vld [vmem:[%s1 + $0x1c] sm:$0xf]
      %v316 = vld [vmem:[%s1 + $0x20] sm:$0xf]
      %v317 = vld [vmem:[%s1 + $0x24] sm:$0xf]
      %v318 = vld [vmem:[%s1 + $0x28] sm:$0xf]
      %v319 = vld [vmem:[%s1 + $0x2c] sm:$0xf]
      %v320 = vld [vmem:[%s1 + $0x30] sm:$0xf]
      %v321 = vld [vmem:[%s1 + $0x34] sm:$0xf]
      %v322 = vld [vmem:[%s1 + $0x38] sm:$0xf]
      %v323 = vld [vmem:[%s1 + $0x3c] sm:$0xf]
      %vm324 = vsmask.f32 3328
      %vm325 = vsmask.f32 7440
      %vm326 = vmor %vm324, %vm325
      %v328 = vshrl.u32 %v278, 16
      %v330 = vrot.slane %v328, 4
      %v331 = vshll.u32 %v278, 16
      %v333 = vrot.slane %v331, 5
      %v334 = vor.u32 %v330, %v333
      %v335 = vrot.slane %v334, 4
      %v337 = vshll.u32 %v279, 16
      %v339 = vrot.slane %v337, 5
      %v340 = vsel %vm326, %v335, %v339
      %v341 = vshrl.u32 %v279, 16
      %v343 = vrot.slane %v341, 4
      %v344 = vor.u32 %v343, %v339
      %v345 = vrot.slane %v344, 4
      %v347 = vshll.u32 %v280, 16
      %v349 = vrot.slane %v347, 5
      %v350 = vsel %vm326, %v345, %v349
      %v352 = vshrl.u32 %v281, 16
      %v354 = vrot.slane %v352, 4
      %v355 = vshll.u32 %v281, 16
      %v357 = vrot.slane %v355, 5
      %v358 = vor.u32 %v354, %v357
      %v359 = vrot.slane %v358, 4
      %v361 = vshll.u32 %v282, 16
      %v363 = vrot.slane %v361, 5
      %v364 = vsel %vm326, %v359, %v363
      %v365 = vshrl.u32 %v282, 16
      %v367 = vrot.slane %v365, 4
      %v368 = vor.u32 %v367, %v363
      %v369 = vrot.slane %v368, 4
      %v371 = vshll.u32 %v283, 16
      %v373 = vrot.slane %v371, 5
      %v374 = vsel %vm326, %v369, %v373
      %v376 = vshrl.u32 %v284, 16
      %v378 = vrot.slane %v376, 4
      %v379 = vshll.u32 %v284, 16
      %v381 = vrot.slane %v379, 5
      %v382 = vor.u32 %v378, %v381
      %v383 = vrot.slane %v382, 4
      %v385 = vshll.u32 %v285, 16
      %v387 = vrot.slane %v385, 5
      %v388 = vsel %vm326, %v383, %v387
      %v389 = vshrl.u32 %v285, 16
      %v391 = vrot.slane %v389, 4
      %v392 = vor.u32 %v391, %v387
      %v393 = vrot.slane %v392, 4
      %v395 = vshll.u32 %v286, 16
      %v397 = vrot.slane %v395, 5
      %v398 = vsel %vm326, %v393, %v397
      %v400 = vshrl.u32 %v287, 16
      %v402 = vrot.slane %v400, 4
      %v403 = vshll.u32 %v287, 16
      %v405 = vrot.slane %v403, 5
      %v406 = vor.u32 %v402, %v405
      %v407 = vrot.slane %v406, 4
      %v409 = vshll.u32 %v288, 16
      %v411 = vrot.slane %v409, 5
      %v412 = vsel %vm326, %v407, %v411
      %v413 = vshrl.u32 %v288, 16
      %v415 = vrot.slane %v413, 4
      %v416 = vor.u32 %v415, %v411
      %v417 = vrot.slane %v416, 4
      %v419 = vshll.u32 %v289, 16
      %v421 = vrot.slane %v419, 5
      %v422 = vsel %vm326, %v417, %v421
      %v424 = vshrl.u32 %v290, 16
      %v426 = vrot.slane %v424, 4
      %v427 = vshll.u32 %v290, 16
      %v429 = vrot.slane %v427, 5
      %v430 = vor.u32 %v426, %v429
      %v431 = vrot.slane %v430, 4
      %v433 = vshll.u32 %v291, 16
      %v435 = vrot.slane %v433, 5
      %v436 = vsel %vm326, %v431, %v435
      %v437 = vshrl.u32 %v291, 16
      %v439 = vrot.slane %v437, 4
      %v440 = vor.u32 %v439, %v435
      %v441 = vrot.slane %v440, 4
      %v443 = vshll.u32 %v292, 16
      %v445 = vrot.slane %v443, 5
      %v446 = vsel %vm326, %v441, %v445
      %v448 = vshrl.u32 %v293, 16
      %v450 = vrot.slane %v448, 4
      %v451 = vshll.u32 %v293, 16
      %v453 = vrot.slane %v451, 5
      %v454 = vor.u32 %v450, %v453
      %v455 = vrot.slane %v454, 4
      %v457 = vshll.u32 %v294, 16
      %v459 = vrot.slane %v457, 5
      %v460 = vsel %vm326, %v455, %v459
      %v461 = vshrl.u32 %v294, 16
      %v463 = vrot.slane %v461, 4
      %v464 = vor.u32 %v463, %v459
      %v465 = vrot.slane %v464, 4
      %v467 = vshll.u32 %v295, 16
      %v469 = vrot.slane %v467, 5
      %v470 = vsel %vm326, %v465, %v469
      %v472 = vshrl.u32 %v296, 16
      %v474 = vrot.slane %v472, 4
      %v475 = vshll.u32 %v296, 16
      %v477 = vrot.slane %v475, 5
      %v478 = vor.u32 %v474, %v477
      %v479 = vrot.slane %v478, 4
      %v481 = vshll.u32 %v297, 16
      %v483 = vrot.slane %v481, 5
      %v484 = vsel %vm326, %v479, %v483
      %v485 = vshrl.u32 %v297, 16
      %v487 = vrot.slane %v485, 4
      %v488 = vor.u32 %v487, %v483
      %v489 = vrot.slane %v488, 4
      %v491 = vshll.u32 %v298, 16
      %v493 = vrot.slane %v491, 5
      %v494 = vsel %vm326, %v489, %v493
      %v496 = vshrl.u32 %v299, 16
      %v498 = vrot.slane %v496, 4
      %v499 = vshll.u32 %v299, 16
      %v501 = vrot.slane %v499, 5
      %v502 = vor.u32 %v498, %v501
      %v503 = vrot.slane %v502, 4
      %v505 = vshll.u32 %v300, 16
      %v507 = vrot.slane %v505, 5
      %v508 = vsel %vm326, %v503, %v507
      %v509 = vshrl.u32 %v300, 16
      %v511 = vrot.slane %v509, 4
      %v512 = vor.u32 %v511, %v507
      %v513 = vrot.slane %v512, 4
      %v515 = vshll.u32 %v301, 16
      %v517 = vrot.slane %v515, 5
      %v518 = vsel %vm326, %v513, %v517
      %s519 = scalar_lea.vmem %s1, 64
      %v520 = vld [vmem:[%s519] sm:$0xf]
      %v521 = vld [vmem:[%s519 + $0x4] sm:$0xf]
      %v522 = vld [vmem:[%s519 + $0x8] sm:$0xf]
      %v523 = vld [vmem:[%s519 + $0xc] sm:$0xf]
      %v524 = vld [vmem:[%s519 + $0x10] sm:$0xf]
      %v525 = vld [vmem:[%s519 + $0x14] sm:$0xf]
      %v526 = vld [vmem:[%s519 + $0x18] sm:$0xf]
      %v527 = vld [vmem:[%s519 + $0x1c] sm:$0xf]
      %v528 = vld [vmem:[%s519 + $0x20] sm:$0xf]
      %v529 = vld [vmem:[%s519 + $0x24] sm:$0xf]
      %v530 = vld [vmem:[%s519 + $0x28] sm:$0xf]
      %v531 = vld [vmem:[%s519 + $0x2c] sm:$0xf]
      %v532 = vld [vmem:[%s519 + $0x30] sm:$0xf]
      %v533 = vld [vmem:[%s519 + $0x34] sm:$0xf]
      %v534 = vld [vmem:[%s519 + $0x38] sm:$0xf]
      %v535 = vld [vmem:[%s519 + $0x3c] sm:$0xf]
      %v536 = vunpack.c.l.b16 %v340
      %v537 = vunpack.c.l.b16 %v350
      %v538 = vunpack.c.l.b16 %v364
      %v539 = vunpack.c.l.b16 %v374
      %v540 = vunpack.c.l.b16 %v388
      %v541 = vunpack.c.l.b16 %v398
      %v542 = vunpack.c.l.b16 %v412
      %v543 = vunpack.c.l.b16 %v422
      %v544 = vunpack.c.l.b16 %v436
      %v545 = vunpack.c.l.b16 %v446
      %v546 = vunpack.c.l.b16 %v460
      %v547 = vunpack.c.l.b16 %v470
      %v548 = vunpack.c.l.b16 %v484
      %v549 = vunpack.c.l.b16 %v494
      %v550 = vunpack.c.l.b16 %v508
      %v551 = vunpack.c.l.b16 %v518
      %v552 = vpack.c.b16 %v537, %v536
      %v553 = vpack.c.b16 %v539, %v538
      %v554 = vpack.c.b16 %v541, %v540
      %v555 = vpack.c.b16 %v543, %v542
      %v556 = vpack.c.b16 %v545, %v544
      %v557 = vpack.c.b16 %v547, %v546
      %v558 = vpack.c.b16 %v549, %v548
      %v559 = vpack.c.b16 %v551, %v550
      %v584 = vunpack.c.l.b16 %v520
      %v585 = vunpack.c.l.b16 %v521
      %v586 = vunpack.c.l.b16 %v522
      %v587 = vunpack.c.l.b16 %v523
      %v588 = vunpack.c.l.b16 %v524
      %v589 = vunpack.c.l.b16 %v525
      %v590 = vunpack.c.l.b16 %v526
      %v591 = vunpack.c.l.b16 %v527
      %v592 = vunpack.c.l.b16 %v528
      %v593 = vunpack.c.l.b16 %v529
      %v594 = vunpack.c.l.b16 %v530
      %v595 = vunpack.c.l.b16 %v531
      %v596 = vunpack.c.l.b16 %v532
      %v597 = vunpack.c.l.b16 %v533
      %v598 = vunpack.c.l.b16 %v534
      %v599 = vunpack.c.l.b16 %v535
      %v600 = vpack.c.b16 %v585, %v584
      %v601 = vpack.c.b16 %v587, %v586
      %v602 = vpack.c.b16 %v589, %v588
      %v603 = vpack.c.b16 %v591, %v590
      %v604 = vpack.c.b16 %v593, %v592
      %v605 = vpack.c.b16 %v595, %v594
      %v606 = vpack.c.b16 %v597, %v596
      %v607 = vpack.c.b16 %v599, %v598
      %616 = vmatprep.subr.bf16.mxu0 0
      %617 = vmatpush1.bf16.msra.mxu0 %v600
      %618 = vmatprep.subr.bf16.mxu0 0
      %619 = vmatpush1.bf16.msra.mxu0 %v601
      %620 = vmatprep.subr.bf16.mxu0 0
      %621 = vmatpush1.bf16.msra.mxu0 %v602
      %622 = vmatprep.subr.bf16.mxu0 0
      %623 = vmatpush1.bf16.msra.mxu0 %v603
      %624 = vmatprep.subr.bf16.mxu0 0
      %625 = vmatpush1.bf16.msra.mxu0 %v604
      %626 = vmatprep.subr.bf16.mxu0 0
      %627 = vmatpush1.bf16.msra.mxu0 %v605
      %628 = vmatprep.subr.bf16.mxu0 0
      %629 = vmatpush1.bf16.msra.mxu0 %v606
      %630 = vmatprep.subr.bf16.mxu0 0
      %631 = vmatpush1.bf16.msra.mxu0 %v607
      %632 = vmatprep.subr.bf16.mxu0 0
      %633 = vmatpush1.bf16.msra.mxu0 0
      %634 = vmatprep.subr.bf16.mxu0 0
      %635 = vmatpush1.bf16.msra.mxu0 0
      %636 = vmatprep.subr.bf16.mxu0 0
      %637 = vmatpush1.bf16.msra.mxu0 0
      %638 = vmatprep.subr.bf16.mxu0 0
      %639 = vmatpush1.bf16.msra.mxu0 0
      %640 = vmatprep.subr.bf16.mxu0 0
      %641 = vmatpush1.bf16.msra.mxu0 0
      %642 = vmatprep.subr.bf16.mxu0 0
      %643 = vmatpush1.bf16.msra.mxu0 0
      %644 = vmatprep.subr.bf16.mxu0 0
      %645 = vmatpush1.bf16.msra.mxu0 0
      %646 = vmatprep.subr.bf16.mxu0 0
      %647 = vmatpush1.bf16.msra.mxu0 0
      %648 = vmatprep.mubr.bf16.mxu0 0
      %649 = vmatmul.mubr.bf16.gmra.mrb[0].mxu0 %v552
      %v650 = vpop.f32.mrb[0].mxu0
      %v651 = vadd.f32 0.0, %v650
      %v652 = vpop.f32.mrb[0].mxu0
      %v653 = vpop.f32.mrb[0].mxu0
      %v654 = vadd.f32 0.0, %v653
      %v655 = vpop.f32.mrb[0].mxu0
      %656 = vmatprep.mubr.bf16.mxu0 0
      %657 = vmatmul.mubr.bf16.gmra.mrb[0].mxu0 %v553
      %v658 = vpop.f32.mrb[0].mxu0
      %v659 = vadd.f32 0.0, %v658
      %v660 = vpop.f32.mrb[0].mxu0
      %v661 = vpop.f32.mrb[0].mxu0
      %v662 = vadd.f32 0.0, %v661
      %v663 = vpop.f32.mrb[0].mxu0
      %664 = vmatprep.mubr.bf16.mxu0 0
      %665 = vmatmul.mubr.bf16.gmra.mrb[0].mxu0 %v554
      %v666 = vpop.f32.mrb[0].mxu0
      %v667 = vadd.f32 0.0, %v666
      %v668 = vpop.f32.mrb[0].mxu0
      %v669 = vpop.f32.mrb[0].mxu0
      %v670 = vadd.f32 0.0, %v669
      %v671 = vpop.f32.mrb[0].mxu0
      %672 = vmatprep.mubr.bf16.mxu0 0
      %673 = vmatmul.mubr.bf16.gmra.mrb[0].mxu0 %v555
      %v674 = vpop.f32.mrb[0].mxu0
      %v675 = vadd.f32 0.0, %v674
      %v676 = vpop.f32.mrb[0].mxu0
      %v677 = vpop.f32.mrb[0].mxu0
      %v678 = vadd.f32 0.0, %v677
      %v679 = vpop.f32.mrb[0].mxu0
      %680 = vmatprep.mubr.bf16.mxu0 0
      %681 = vmatmul.mubr.bf16.gmra.mrb[0].mxu0 %v556
      %v682 = vpop.f32.mrb[0].mxu0
      %v683 = vadd.f32 0.0, %v682
      %v684 = vpop.f32.mrb[0].mxu0
      %v685 = vpop.f32.mrb[0].mxu0
      %v686 = vadd.f32 0.0, %v685
      %v687 = vpop.f32.mrb[0].mxu0
      %688 = vmatprep.mubr.bf16.mxu0 0
      %689 = vmatmul.mubr.bf16.gmra.mrb[0].mxu0 %v557
      %v690 = vpop.f32.mrb[0].mxu0
      %v691 = vadd.f32 0.0, %v690
      %v692 = vpop.f32.mrb[0].mxu0
      %v693 = vpop.f32.mrb[0].mxu0
      %v694 = vadd.f32 0.0, %v693
      %v695 = vpop.f32.mrb[0].mxu0
      %696 = vmatprep.mubr.bf16.mxu0 0
      %697 = vmatmul.mubr.bf16.gmra.mrb[0].mxu0 %v558
      %v698 = vpop.f32.mrb[0].mxu0
      %v699 = vadd.f32 0.0, %v698
      %v700 = vpop.f32.mrb[0].mxu0
      %v701 = vpop.f32.mrb[0].mxu0
      %v702 = vadd.f32 0.0, %v701
      %v703 = vpop.f32.mrb[0].mxu0
      %704 = vmatprep.mubr.bf16.mxu0 0
      %705 = vmatmul.mubr.bf16.gmra.mrb[0].mxu0 %v559
      %v706 = vpop.f32.mrb[0].mxu0
      %v707 = vadd.f32 0.0, %v706
      %v708 = vpop.f32.mrb[0].mxu0
      %v709 = vpop.f32.mrb[0].mxu0
      %v710 = vadd.f32 0.0, %v709
      %v711 = vpop.f32.mrb[0].mxu0
      %712 = vdwg.mxu0
      %v729 = vunpack.c.l.b16 %v278
      %v730 = vunpack.c.l.b16 %v279
      %v731 = vunpack.c.l.b16 %v281
      %v732 = vunpack.c.l.b16 %v282
      %v733 = vunpack.c.l.b16 %v284
      %v734 = vunpack.c.l.b16 %v285
      %v735 = vunpack.c.l.b16 %v287
      %v736 = vunpack.c.l.b16 %v288
      %v737 = vunpack.c.l.b16 %v290
      %v738 = vunpack.c.l.b16 %v291
      %v739 = vunpack.c.l.b16 %v293
      %v740 = vunpack.c.l.b16 %v294
      %v741 = vunpack.c.l.b16 %v296
      %v742 = vunpack.c.l.b16 %v297
      %v743 = vunpack.c.l.b16 %v299
      %v744 = vunpack.c.l.b16 %v300
      %v745 = vpack.c.b16 %v730, %v729
      %v746 = vpack.c.b16 %v732, %v731
      %v747 = vpack.c.b16 %v734, %v733
      %v748 = vpack.c.b16 %v736, %v735
      %v749 = vpack.c.b16 %v738, %v737
      %v750 = vpack.c.b16 %v740, %v739
      %v751 = vpack.c.b16 %v742, %v741
      %v752 = vpack.c.b16 %v744, %v743
      %v777 = vunpack.c.l.b16 %v308
      %v778 = vunpack.c.l.b16 %v309
      %v779 = vunpack.c.l.b16 %v310
      %v780 = vunpack.c.l.b16 %v311
      %v781 = vunpack.c.l.b16 %v312
      %v782 = vunpack.c.l.b16 %v313
      %v783 = vunpack.c.l.b16 %v314
      %v784 = vunpack.c.l.b16 %v315
      %v785 = vunpack.c.l.b16 %v316
      %v786 = vunpack.c.l.b16 %v317
      %v787 = vunpack.c.l.b16 %v318
      %v788 = vunpack.c.l.b16 %v319
      %v789 = vunpack.c.l.b16 %v320
      %v790 = vunpack.c.l.b16 %v321
      %v791 = vunpack.c.l.b16 %v322
      %v792 = vunpack.c.l.b16 %v323
      %v793 = vpack.c.b16 %v778, %v777
      %v794 = vpack.c.b16 %v780, %v779
      %v795 = vpack.c.b16 %v782, %v781
      %v796 = vpack.c.b16 %v784, %v783
      %v797 = vpack.c.b16 %v786, %v785
      %v798 = vpack.c.b16 %v788, %v787
      %v799 = vpack.c.b16 %v790, %v789
      %v800 = vpack.c.b16 %v792, %v791
      %809 = vmatprep.subr.bf16.mxu0 0
      %810 = vmatpush1.bf16.msra.mxu0 %v793
      %811 = vmatprep.subr.bf16.mxu0 0
      %812 = vmatpush1.bf16.msra.mxu0 %v794
      %813 = vmatprep.subr.bf16.mxu0 0
      %814 = vmatpush1.bf16.msra.mxu0 %v795
      %815 = vmatprep.subr.bf16.mxu0 0
      %816 = vmatpush1.bf16.msra.mxu0 %v796
      %817 = vmatprep.subr.bf16.mxu0 0
      %818 = vmatpush1.bf16.msra.mxu0 %v797
      %819 = vmatprep.subr.bf16.mxu0 0
      %820 = vmatpush1.bf16.msra.mxu0 %v798
      %821 = vmatprep.subr.bf16.mxu0 0
      %822 = vmatpush1.bf16.msra.mxu0 %v799
      %823 = vmatprep.subr.bf16.mxu0 0
      %824 = vmatpush1.bf16.msra.mxu0 %v800
      %825 = vmatprep.subr.bf16.mxu0 0
      %826 = vmatpush1.bf16.msra.mxu0 0
      %827 = vmatprep.subr.bf16.mxu0 0
      %828 = vmatpush1.bf16.msra.mxu0 0
      %829 = vmatprep.subr.bf16.mxu0 0
      %830 = vmatpush1.bf16.msra.mxu0 0
      %831 = vmatprep.subr.bf16.mxu0 0
      %832 = vmatpush1.bf16.msra.mxu0 0
      %833 = vmatprep.subr.bf16.mxu0 0
      %834 = vmatpush1.bf16.msra.mxu0 0
      %835 = vmatprep.subr.bf16.mxu0 0
      %836 = vmatpush1.bf16.msra.mxu0 0
      %837 = vmatprep.subr.bf16.mxu0 0
      %838 = vmatpush1.bf16.msra.mxu0 0
      %839 = vmatprep.subr.bf16.mxu0 0
      %840 = vmatpush1.bf16.msra.mxu0 0
      %841 = vmatprep.mubr.bf16.mxu0 0
      %842 = vmatmul.mubr.bf16.gmra.mrb[0].mxu0 %v745
      %v843 = vpop.f32.mrb[0].mxu0
      %v844 = vadd.f32 %v651, %v843
      %v845 = vpop.f32.mrb[0].mxu0
      %v846 = vpop.f32.mrb[0].mxu0
      %v847 = vadd.f32 %v654, %v846
      %v848 = vpop.f32.mrb[0].mxu0
      %849 = vmatprep.mubr.bf16.mxu0 0
      %850 = vmatmul.mubr.bf16.gmra.mrb[0].mxu0 %v746
      %v851 = vpop.f32.mrb[0].mxu0
      %v852 = vadd.f32 %v659, %v851
      %v853 = vpop.f32.mrb[0].mxu0
      %v854 = vpop.f32.mrb[0].mxu0
      %v855 = vadd.f32 %v662, %v854
      %v856 = vpop.f32.mrb[0].mxu0
      %857 = vmatprep.mubr.bf16.mxu0 0
      %858 = vmatmul.mubr.bf16.gmra.mrb[0].mxu0 %v747
      %v859 = vpop.f32.mrb[0].mxu0
      %v860 = vadd.f32 %v667, %v859
      %v861 = vpop.f32.mrb[0].mxu0
      %v862 = vpop.f32.mrb[0].mxu0
      %v863 = vadd.f32 %v670, %v862
      %v864 = vpop.f32.mrb[0].mxu0
      %865 = vmatprep.mubr.bf16.mxu0 0
      %866 = vmatmul.mubr.bf16.gmra.mrb[0].mxu0 %v748
      %v867 = vpop.f32.mrb[0].mxu0
      %v868 = vadd.f32 %v675, %v867
      %v869 = vpop.f32.mrb[0].mxu0
      %v870 = vpop.f32.mrb[0].mxu0
      %v871 = vadd.f32 %v678, %v870
      %v872 = vpop.f32.mrb[0].mxu0
      %873 = vmatprep.mubr.bf16.mxu0 0
      %874 = vmatmul.mubr.bf16.gmra.mrb[0].mxu0 %v749
      %v875 = vpop.f32.mrb[0].mxu0
      %v876 = vadd.f32 %v683, %v875
      %v877 = vpop.f32.mrb[0].mxu0
      %v878 = vpop.f32.mrb[0].mxu0
      %v879 = vadd.f32 %v686, %v878
      %v880 = vpop.f32.mrb[0].mxu0
      %881 = vmatprep.mubr.bf16.mxu0 0
      %882 = vmatmul.mubr.bf16.gmra.mrb[0].mxu0 %v750
      %v883 = vpop.f32.mrb[0].mxu0
      %v884 = vadd.f32 %v691, %v883
      %v885 = vpop.f32.mrb[0].mxu0
      %v886 = vpop.f32.mrb[0].mxu0
      %v887 = vadd.f32 %v694, %v886
      %v888 = vpop.f32.mrb[0].mxu0
      %889 = vmatprep.mubr.bf16.mxu0 0
      %890 = vmatmul.mubr.bf16.gmra.mrb[0].mxu0 %v751
      %v891 = vpop.f32.mrb[0].mxu0
      %v892 = vadd.f32 %v699, %v891
      %v893 = vpop.f32.mrb[0].mxu0
      %v894 = vpop.f32.mrb[0].mxu0
      %v895 = vadd.f32 %v702, %v894
      %v896 = vpop.f32.mrb[0].mxu0
      %897 = vmatprep.mubr.bf16.mxu0 0
      %898 = vmatmul.mubr.bf16.gmra.mrb[0].mxu0 %v752
      %v899 = vpop.f32.mrb[0].mxu0
      %v900 = vadd.f32 %v707, %v899
      %v901 = vpop.f32.mrb[0].mxu0
      %v902 = vpop.f32.mrb[0].mxu0
      %v903 = vadd.f32 %v710, %v902
      %v904 = vpop.f32.mrb[0].mxu0
      %905 = vdwg.mxu0
      %vm914 = vcmask 1042432
      %vm915 = vcmask 1046532
      %vm916 = vmor %vm914, %vm915
      %v917 = vrot.slane %v278, 5
      %v918 = vrot.slane %v917, 4
      %v919 = vrot.slane %v279, 5
      %v920 = vsel %vm916, %v918, %v919
      %v921 = vrot.slane %v919, 4
      %v922 = vrot.slane %v280, 5
      %v923 = vsel %vm916, %v921, %v922
      %v924 = vrot.slane %v281, 5
      %v925 = vrot.slane %v924, 4
      %v926 = vrot.slane %v282, 5
      %v927 = vsel %vm916, %v925, %v926
      %v928 = vrot.slane %v926, 4
      %v929 = vrot.slane %v283, 5
      %v930 = vsel %vm916, %v928, %v929
      %v931 = vrot.slane %v284, 5
      %v932 = vrot.slane %v931, 4
      %v933 = vrot.slane %v285, 5
      %v934 = vsel %vm916, %v932, %v933
      %v935 = vrot.slane %v933, 4
      %v936 = vrot.slane %v286, 5
      %v937 = vsel %vm916, %v935, %v936
      %v938 = vrot.slane %v287, 5
      %v939 = vrot.slane %v938, 4
      %v940 = vrot.slane %v288, 5
      %v941 = vsel %vm916, %v939, %v940
      %v942 = vrot.slane %v940, 4
      %v943 = vrot.slane %v289, 5
      %v944 = vsel %vm916, %v942, %v943
      %v945 = vrot.slane %v290, 5
      %v946 = vrot.slane %v945, 4
      %v947 = vrot.slane %v291, 5
      %v948 = vsel %vm916, %v946, %v947
      %v949 = vrot.slane %v947, 4
      %v950 = vrot.slane %v292, 5
      %v951 = vsel %vm916, %v949, %v950
      %v952 = vrot.slane %v293, 5
      %v953 = vrot.slane %v952, 4
      %v954 = vrot.slane %v294, 5
      %v955 = vsel %vm916, %v953, %v954
      %v956 = vrot.slane %v954, 4
      %v957 = vrot.slane %v295, 5
      %v958 = vsel %vm916, %v956, %v957
      %v959 = vrot.slane %v296, 5
      %v960 = vrot.slane %v959, 4
      %v961 = vrot.slane %v297, 5
      %v962 = vsel %vm916, %v960, %v961
      %v963 = vrot.slane %v961, 4
      %v964 = vrot.slane %v298, 5
      %v965 = vsel %vm916, %v963, %v964
      %v966 = vrot.slane %v299, 5
      %v967 = vrot.slane %v966, 4
      %v968 = vrot.slane %v300, 5
      %v969 = vsel %vm916, %v967, %v968
      %v970 = vrot.slane %v968, 4
      %v971 = vrot.slane %v301, 5
      %v972 = vsel %vm916, %v970, %v971
      %s973 = scalar_lea.vmem %s1, 128
      %v974 = vld [vmem:[%s973] sm:$0xf]
      %v975 = vld [vmem:[%s973 + $0x4] sm:$0xf]
      %v976 = vld [vmem:[%s973 + $0x8] sm:$0xf]
      %v977 = vld [vmem:[%s973 + $0xc] sm:$0xf]
      %v978 = vld [vmem:[%s973 + $0x10] sm:$0xf]
      %v979 = vld [vmem:[%s973 + $0x14] sm:$0xf]
      %v980 = vld [vmem:[%s973 + $0x18] sm:$0xf]
      %v981 = vld [vmem:[%s973 + $0x1c] sm:$0xf]
      %v982 = vld [vmem:[%s973 + $0x20] sm:$0xf]
      %v983 = vld [vmem:[%s973 + $0x24] sm:$0xf]
      %v984 = vld [vmem:[%s973 + $0x28] sm:$0xf]
      %v985 = vld [vmem:[%s973 + $0x2c] sm:$0xf]
      %v986 = vld [vmem:[%s973 + $0x30] sm:$0xf]
      %v987 = vld [vmem:[%s973 + $0x34] sm:$0xf]
      %v988 = vld [vmem:[%s973 + $0x38] sm:$0xf]
      %v989 = vld [vmem:[%s973 + $0x3c] sm:$0xf]
      %v990 = vunpack.c.l.b16 %v920
      %v991 = vunpack.c.l.b16 %v923
      %v992 = vunpack.c.l.b16 %v927
      %v993 = vunpack.c.l.b16 %v930
      %v994 = vunpack.c.l.b16 %v934
      %v995 = vunpack.c.l.b16 %v937
      %v996 = vunpack.c.l.b16 %v941
      %v997 = vunpack.c.l.b16 %v944
      %v998 = vunpack.c.l.b16 %v948
      %v999 = vunpack.c.l.b16 %v951
      %v1000 = vunpack.c.l.b16 %v955
      %v1001 = vunpack.c.l.b16 %v958
      %v1002 = vunpack.c.l.b16 %v962
      %v1003 = vunpack.c.l.b16 %v965
      %v1004 = vunpack.c.l.b16 %v969
      %v1005 = vunpack.c.l.b16 %v972
      %v1006 = vpack.c.b16 %v991, %v990
      %v1007 = vpack.c.b16 %v993, %v992
      %v1008 = vpack.c.b16 %v995, %v994
      %v1009 = vpack.c.b16 %v997, %v996
      %v1010 = vpack.c.b16 %v999, %v998
      %v1011 = vpack.c.b16 %v1001, %v1000
      %v1012 = vpack.c.b16 %v1003, %v1002
      %v1013 = vpack.c.b16 %v1005, %v1004
      %v1038 = vunpack.c.l.b16 %v974
      %v1039 = vunpack.c.l.b16 %v975
      %v1040 = vunpack.c.l.b16 %v976
      %v1041 = vunpack.c.l.b16 %v977
      %v1042 = vunpack.c.l.b16 %v978
      %v1043 = vunpack.c.l.b16 %v979
      %v1044 = vunpack.c.l.b16 %v980
      %v1045 = vunpack.c.l.b16 %v981
      %v1046 = vunpack.c.l.b16 %v982
      %v1047 = vunpack.c.l.b16 %v983
      %v1048 = vunpack.c.l.b16 %v984
      %v1049 = vunpack.c.l.b16 %v985
      %v1050 = vunpack.c.l.b16 %v986
      %v1051 = vunpack.c.l.b16 %v987
      %v1052 = vunpack.c.l.b16 %v988
      %v1053 = vunpack.c.l.b16 %v989
      %v1054 = vpack.c.b16 %v1039, %v1038
      %v1055 = vpack.c.b16 %v1041, %v1040
      %v1056 = vpack.c.b16 %v1043, %v1042
      %v1057 = vpack.c.b16 %v1045, %v1044
      %v1058 = vpack.c.b16 %v1047, %v1046
      %v1059 = vpack.c.b16 %v1049, %v1048
      %v1060 = vpack.c.b16 %v1051, %v1050
      %v1061 = vpack.c.b16 %v1053, %v1052
      %1070 = vmatprep.subr.bf16.mxu0 0
      %1071 = vmatpush1.bf16.msra.mxu0 %v1054
      %1072 = vmatprep.subr.bf16.mxu0 0
      %1073 = vmatpush1.bf16.msra.mxu0 %v1055
      %1074 = vmatprep.subr.bf16.mxu0 0
      %1075 = vmatpush1.bf16.msra.mxu0 %v1056
      %1076 = vmatprep.subr.bf16.mxu0 0
      %1077 = vmatpush1.bf16.msra.mxu0 %v1057
      %1078 = vmatprep.subr.bf16.mxu0 0
      %1079 = vmatpush1.bf16.msra.mxu0 %v1058
      %1080 = vmatprep.subr.bf16.mxu0 0
      %1081 = vmatpush1.bf16.msra.mxu0 %v1059
      %1082 = vmatprep.subr.bf16.mxu0 0
      %1083 = vmatpush1.bf16.msra.mxu0 %v1060
      %1084 = vmatprep.subr.bf16.mxu0 0
      %1085 = vmatpush1.bf16.msra.mxu0 %v1061
      %1086 = vmatprep.subr.bf16.mxu0 0
      %1087 = vmatpush1.bf16.msra.mxu0 0
      %1088 = vmatprep.subr.bf16.mxu0 0
      %1089 = vmatpush1.bf16.msra.mxu0 0
      %1090 = vmatprep.subr.bf16.mxu0 0
      %1091 = vmatpush1.bf16.msra.mxu0 0
      %1092 = vmatprep.subr.bf16.mxu0 0
      %1093 = vmatpush1.bf16.msra.mxu0 0
      %1094 = vmatprep.subr.bf16.mxu0 0
      %1095 = vmatpush1.bf16.msra.mxu0 0
      %1096 = vmatprep.subr.bf16.mxu0 0
      %1097 = vmatpush1.bf16.msra.mxu0 0
      %1098 = vmatprep.subr.bf16.mxu0 0
      %1099 = vmatpush1.bf16.msra.mxu0 0
      %1100 = vmatprep.subr.bf16.mxu0 0
      %1101 = vmatpush1.bf16.msra.mxu0 0
      %1102 = vmatprep.mubr.bf16.mxu0 0
      %1103 = vmatmul.mubr.bf16.gmra.mrb[0].mxu0 %v1006
      %v1104 = vpop.f32.mrb[0].mxu0
      %v1105 = vadd.f32 0.0, %v1104
      %v1106 = vpop.f32.mrb[0].mxu0
      %v1107 = vpop.f32.mrb[0].mxu0
      %v1108 = vadd.f32 0.0, %v1107
      %v1109 = vpop.f32.mrb[0].mxu0
      %1110 = vmatprep.mubr.bf16.mxu0 0
      %1111 = vmatmul.mubr.bf16.gmra.mrb[0].mxu0 %v1007
      %v1112 = vpop.f32.mrb[0].mxu0
      %v1113 = vadd.f32 0.0, %v1112
      %v1114 = vpop.f32.mrb[0].mxu0
      %v1115 = vpop.f32.mrb[0].mxu0
      %v1116 = vadd.f32 0.0, %v1115
      %v1117 = vpop.f32.mrb[0].mxu0
      %1118 = vmatprep.mubr.bf16.mxu0 0
      %1119 = vmatmul.mubr.bf16.gmra.mrb[0].mxu0 %v1008
      %v1120 = vpop.f32.mrb[0].mxu0
      %v1121 = vadd.f32 0.0, %v1120
      %v1122 = vpop.f32.mrb[0].mxu0
      %v1123 = vpop.f32.mrb[0].mxu0
      %v1124 = vadd.f32 0.0, %v1123
      %v1125 = vpop.f32.mrb[0].mxu0
      %1126 = vmatprep.mubr.bf16.mxu0 0
      %1127 = vmatmul.mubr.bf16.gmra.mrb[0].mxu0 %v1009
      %v1128 = vpop.f32.mrb[0].mxu0
      %v1129 = vadd.f32 0.0, %v1128
      %v1130 = vpop.f32.mrb[0].mxu0
      %v1131 = vpop.f32.mrb[0].mxu0
      %v1132 = vadd.f32 0.0, %v1131
      %v1133 = vpop.f32.mrb[0].mxu0
      %1134 = vmatprep.mubr.bf16.mxu0 0
      %1135 = vmatmul.mubr.bf16.gmra.mrb[0].mxu0 %v1010
      %v1136 = vpop.f32.mrb[0].mxu0
      %v1137 = vadd.f32 0.0, %v1136
      %v1138 = vpop.f32.mrb[0].mxu0
      %v1139 = vpop.f32.mrb[0].mxu0
      %v1140 = vadd.f32 0.0, %v1139
      %v1141 = vpop.f32.mrb[0].mxu0
      %1142 = vmatprep.mubr.bf16.mxu0 0
      %1143 = vmatmul.mubr.bf16.gmra.mrb[0].mxu0 %v1011
      %v1144 = vpop.f32.mrb[0].mxu0
      %v1145 = vadd.f32 0.0, %v1144
      %v1146 = vpop.f32.mrb[0].mxu0
      %v1147 = vpop.f32.mrb[0].mxu0
      %v1148 = vadd.f32 0.0, %v1147
      %v1149 = vpop.f32.mrb[0].mxu0
      %1150 = vmatprep.mubr.bf16.mxu0 0
      %1151 = vmatmul.mubr.bf16.gmra.mrb[0].mxu0 %v1012
      %v1152 = vpop.f32.mrb[0].mxu0
      %v1153 = vadd.f32 0.0, %v1152
      %v1154 = vpop.f32.mrb[0].mxu0
      %v1155 = vpop.f32.mrb[0].mxu0
      %v1156 = vadd.f32 0.0, %v1155
      %v1157 = vpop.f32.mrb[0].mxu0
      %1158 = vmatprep.mubr.bf16.mxu0 0
      %1159 = vmatmul.mubr.bf16.gmra.mrb[0].mxu0 %v1013
      %v1160 = vpop.f32.mrb[0].mxu0
      %v1161 = vadd.f32 0.0, %v1160
      %v1162 = vpop.f32.mrb[0].mxu0
      %v1163 = vpop.f32.mrb[0].mxu0
      %v1164 = vadd.f32 0.0, %v1163
      %v1165 = vpop.f32.mrb[0].mxu0
      %1166 = vdwg.mxu0
      %v1167 = vadd.f32 %v844, %v1105
      %v1168 = vadd.f32 %v847, %v1108
      %v1169 = vadd.f32 %v852, %v1113
      %v1170 = vadd.f32 %v855, %v1116
      %v1171 = vadd.f32 %v860, %v1121
      %v1172 = vadd.f32 %v863, %v1124
      %v1173 = vadd.f32 %v868, %v1129
      %v1174 = vadd.f32 %v871, %v1132
      %v1175 = vadd.f32 %v876, %v1137
      %v1176 = vadd.f32 %v879, %v1140
      %v1177 = vadd.f32 %v884, %v1145
      %v1178 = vadd.f32 %v887, %v1148
      %v1179 = vadd.f32 %v892, %v1153
      %v1180 = vadd.f32 %v895, %v1156
      %v1181 = vadd.f32 %v900, %v1161
      %v1182 = vadd.f32 %v903, %v1164
      %s1183 = scalar_lea.vmem %s1, 192
      %v1184 = vld [vmem:[%s1183] sm:$0xf]
      %v1185 = vld [vmem:[%s1183 + $0x4] sm:$0xf]
      %v1186 = vld [vmem:[%s1183 + $0x8] sm:$0xf]
      %v1187 = vld [vmem:[%s1183 + $0xc] sm:$0xf]
      %v1188 = vld [vmem:[%s1183 + $0x10] sm:$0xf]
      %v1189 = vld [vmem:[%s1183 + $0x14] sm:$0xf]
      %v1190 = vld [vmem:[%s1183 + $0x18] sm:$0xf]
      %v1191 = vld [vmem:[%s1183 + $0x1c] sm:$0xf]
      %v1192 = vld [vmem:[%s1183 + $0x20] sm:$0xf]
      %v1193 = vld [vmem:[%s1183 + $0x24] sm:$0xf]
      %v1194 = vld [vmem:[%s1183 + $0x28] sm:$0xf]
      %v1195 = vld [vmem:[%s1183 + $0x2c] sm:$0xf]
      %v1196 = vld [vmem:[%s1183 + $0x30] sm:$0xf]
      %v1197 = vld [vmem:[%s1183 + $0x34] sm:$0xf]
      %v1198 = vld [vmem:[%s1183 + $0x38] sm:$0xf]
      %v1199 = vld [vmem:[%s1183 + $0x3c] sm:$0xf]
      %v1202 = vunpack.c.l.b16 %v302
      %v1203 = vunpack.c.l.b16 %v303
      %v1204 = vpack.c.b16 %v1203, %v1202
      %v1222 = vunpack.c.l.b16 %v1184
      %v1223 = vunpack.c.l.b16 %v1185
      %v1224 = vunpack.c.l.b16 %v1186
      %v1225 = vunpack.c.l.b16 %v1187
      %v1226 = vunpack.c.l.b16 %v1188
      %v1227 = vunpack.c.l.b16 %v1189
      %v1228 = vunpack.c.l.b16 %v1190
      %v1229 = vunpack.c.l.b16 %v1191
      %v1230 = vunpack.c.l.b16 %v1192
      %v1231 = vunpack.c.l.b16 %v1193
      %v1232 = vunpack.c.l.b16 %v1194
      %v1233 = vunpack.c.l.b16 %v1195
      %v1234 = vunpack.c.l.b16 %v1196
      %v1235 = vunpack.c.l.b16 %v1197
      %v1236 = vunpack.c.l.b16 %v1198
      %v1237 = vunpack.c.l.b16 %v1199
      %v1238 = vpack.c.b16 %v1223, %v1222
      %v1239 = vpack.c.b16 %v1225, %v1224
      %v1240 = vpack.c.b16 %v1227, %v1226
      %v1241 = vpack.c.b16 %v1229, %v1228
      %v1242 = vpack.c.b16 %v1231, %v1230
      %v1243 = vpack.c.b16 %v1233, %v1232
      %v1244 = vpack.c.b16 %v1235, %v1234
      %v1245 = vpack.c.b16 %v1237, %v1236
      %1254 = vmatprep.subr.bf16.mxu0 0
      %1255 = vmatpush1.bf16.msra.mxu0 %v1238
      %1256 = vmatprep.subr.bf16.mxu0 0
      %1257 = vmatpush1.bf16.msra.mxu0 %v1239
      %1258 = vmatprep.subr.bf16.mxu0 0
      %1259 = vmatpush1.bf16.msra.mxu0 %v1240
      %1260 = vmatprep.subr.bf16.mxu0 0
      %1261 = vmatpush1.bf16.msra.mxu0 %v1241
      %1262 = vmatprep.subr.bf16.mxu0 0
      %1263 = vmatpush1.bf16.msra.mxu0 %v1242
      %1264 = vmatprep.subr.bf16.mxu0 0
      %1265 = vmatpush1.bf16.msra.mxu0 %v1243
      %1266 = vmatprep.subr.bf16.mxu0 0
      %1267 = vmatpush1.bf16.msra.mxu0 %v1244
      %1268 = vmatprep.subr.bf16.mxu0 0
      %1269 = vmatpush1.bf16.msra.mxu0 %v1245
      %1270 = vmatprep.subr.bf16.mxu0 0
      %1271 = vmatpush1.bf16.msra.mxu0 0
      %1272 = vmatprep.subr.bf16.mxu0 0
      %1273 = vmatpush1.bf16.msra.mxu0 0
      %1274 = vmatprep.subr.bf16.mxu0 0
      %1275 = vmatpush1.bf16.msra.mxu0 0
      %1276 = vmatprep.subr.bf16.mxu0 0
      %1277 = vmatpush1.bf16.msra.mxu0 0
      %1278 = vmatprep.subr.bf16.mxu0 0
      %1279 = vmatpush1.bf16.msra.mxu0 0
      %1280 = vmatprep.subr.bf16.mxu0 0
      %1281 = vmatpush1.bf16.msra.mxu0 0
      %1282 = vmatprep.subr.bf16.mxu0 0
      %1283 = vmatpush1.bf16.msra.mxu0 0
      %1284 = vmatprep.subr.bf16.mxu0 0
      %1285 = vmatpush1.bf16.msra.mxu0 0
      %1286 = vmatprep.mubr.bf16.mxu0 0
      %1287 = vmatmul.mubr.bf16.gmra.mrb[0].mxu0 %v746
      %v1288 = vpop.f32.mrb[0].mxu0
      %v1289 = vadd.f32 0.0, %v1288
      %v1290 = vpop.f32.mrb[0].mxu0
      %v1291 = vpop.f32.mrb[0].mxu0
      %v1292 = vadd.f32 0.0, %v1291
      %v1293 = vpop.f32.mrb[0].mxu0
      %1294 = vmatprep.mubr.bf16.mxu0 0
      %1295 = vmatmul.mubr.bf16.gmra.mrb[0].mxu0 %v747
      %v1296 = vpop.f32.mrb[0].mxu0
      %v1297 = vadd.f32 0.0, %v1296
      %v1298 = vpop.f32.mrb[0].mxu0
      %v1299 = vpop.f32.mrb[0].mxu0
      %v1300 = vadd.f32 0.0, %v1299
      %v1301 = vpop.f32.mrb[0].mxu0
      %1302 = vmatprep.mubr.bf16.mxu0 0
      %1303 = vmatmul.mubr.bf16.gmra.mrb[0].mxu0 %v748
      %v1304 = vpop.f32.mrb[0].mxu0
      %v1305 = vadd.f32 0.0, %v1304
      %v1306 = vpop.f32.mrb[0].mxu0
      %v1307 = vpop.f32.mrb[0].mxu0
      %v1308 = vadd.f32 0.0, %v1307
      %v1309 = vpop.f32.mrb[0].mxu0
      %1310 = vmatprep.mubr.bf16.mxu0 0
      %1311 = vmatmul.mubr.bf16.gmra.mrb[0].mxu0 %v749
      %v1312 = vpop.f32.mrb[0].mxu0
      %v1313 = vadd.f32 0.0, %v1312
      %v1314 = vpop.f32.mrb[0].mxu0
      %v1315 = vpop.f32.mrb[0].mxu0
      %v1316 = vadd.f32 0.0, %v1315
      %v1317 = vpop.f32.mrb[0].mxu0
      %1318 = vmatprep.mubr.bf16.mxu0 0
      %1319 = vmatmul.mubr.bf16.gmra.mrb[0].mxu0 %v750
      %v1320 = vpop.f32.mrb[0].mxu0
      %v1321 = vadd.f32 0.0, %v1320
      %v1322 = vpop.f32.mrb[0].mxu0
      %v1323 = vpop.f32.mrb[0].mxu0
      %v1324 = vadd.f32 0.0, %v1323
      %v1325 = vpop.f32.mrb[0].mxu0
      %1326 = vmatprep.mubr.bf16.mxu0 0
      %1327 = vmatmul.mubr.bf16.gmra.mrb[0].mxu0 %v751
      %v1328 = vpop.f32.mrb[0].mxu0
      %v1329 = vadd.f32 0.0, %v1328
      %v1330 = vpop.f32.mrb[0].mxu0
      %v1331 = vpop.f32.mrb[0].mxu0
      %v1332 = vadd.f32 0.0, %v1331
      %v1333 = vpop.f32.mrb[0].mxu0
      %1334 = vmatprep.mubr.bf16.mxu0 0
      %1335 = vmatmul.mubr.bf16.gmra.mrb[0].mxu0 %v752
      %v1336 = vpop.f32.mrb[0].mxu0
      %v1337 = vadd.f32 0.0, %v1336
      %v1338 = vpop.f32.mrb[0].mxu0
      %v1339 = vpop.f32.mrb[0].mxu0
      %v1340 = vadd.f32 0.0, %v1339
      %v1341 = vpop.f32.mrb[0].mxu0
      %1342 = vmatprep.mubr.bf16.mxu0 0
      %1343 = vmatmul.mubr.bf16.gmra.mrb[0].mxu0 %v1204
      %v1344 = vpop.f32.mrb[0].mxu0
      %v1345 = vadd.f32 0.0, %v1344
      %v1346 = vpop.f32.mrb[0].mxu0
      %v1347 = vpop.f32.mrb[0].mxu0
      %v1348 = vadd.f32 0.0, %v1347
      %v1349 = vpop.f32.mrb[0].mxu0
      %1350 = vdwg.mxu0
      %v1351 = vadd.f32 %v1167, %v1289
      %v1352 = vadd.f32 %v1168, %v1292
      %v1353 = vadd.f32 %v1169, %v1297
      %v1354 = vadd.f32 %v1170, %v1300
      %v1355 = vadd.f32 %v1171, %v1305
      %v1356 = vadd.f32 %v1172, %v1308
      %v1357 = vadd.f32 %v1173, %v1313
      %v1358 = vadd.f32 %v1174, %v1316
      %v1359 = vadd.f32 %v1175, %v1321
      %v1360 = vadd.f32 %v1176, %v1324
      %v1361 = vadd.f32 %v1177, %v1329
      %v1362 = vadd.f32 %v1178, %v1332
      %v1363 = vadd.f32 %v1179, %v1337
      %v1364 = vadd.f32 %v1180, %v1340
      %v1365 = vadd.f32 %v1181, %v1345
      %v1366 = vadd.f32 %v1182, %v1348
      %v1368 = vshrl.u32 %v302, 16
      %v1370 = vrot.slane %v1368, 4
      %v1371 = vshll.u32 %v302, 16
      %v1373 = vrot.slane %v1371, 5
      %v1374 = vor.u32 %v1370, %v1373
      %v1375 = vrot.slane %v1374, 4
      %v1377 = vshll.u32 %v303, 16
      %v1379 = vrot.slane %v1377, 5
      %v1380 = vsel %vm326, %v1375, %v1379
      %v1381 = vshrl.u32 %v303, 16
      %v1383 = vrot.slane %v1381, 4
      %v1384 = vor.u32 %v1383, %v1379
      %v1385 = vrot.slane %v1384, 4
      %v1387 = vshll.u32 %v304, 16
      %v1389 = vrot.slane %v1387, 5
      %v1390 = vsel %vm326, %v1385, %v1389
      %s1391 = scalar_lea.vmem %s1, 256
      %v1392 = vld [vmem:[%s1391] sm:$0xf]
      %v1393 = vld [vmem:[%s1391 + $0x4] sm:$0xf]
      %v1394 = vld [vmem:[%s1391 + $0x8] sm:$0xf]
      %v1395 = vld [vmem:[%s1391 + $0xc] sm:$0xf]
      %v1396 = vld [vmem:[%s1391 + $0x10] sm:$0xf]
      %v1397 = vld [vmem:[%s1391 + $0x14] sm:$0xf]
      %v1398 = vld [vmem:[%s1391 + $0x18] sm:$0xf]
      %v1399 = vld [vmem:[%s1391 + $0x1c] sm:$0xf]
      %v1400 = vld [vmem:[%s1391 + $0x20] sm:$0xf]
      %v1401 = vld [vmem:[%s1391 + $0x24] sm:$0xf]
      %v1402 = vld [vmem:[%s1391 + $0x28] sm:$0xf]
      %v1403 = vld [vmem:[%s1391 + $0x2c] sm:$0xf]
      %v1404 = vld [vmem:[%s1391 + $0x30] sm:$0xf]
      %v1405 = vld [vmem:[%s1391 + $0x34] sm:$0xf]
      %v1406 = vld [vmem:[%s1391 + $0x38] sm:$0xf]
      %v1407 = vld [vmem:[%s1391 + $0x3c] sm:$0xf]
      %v1408 = vunpack.c.l.b16 %v1380
      %v1409 = vunpack.c.l.b16 %v1390
      %v1410 = vpack.c.b16 %v1409, %v1408
      %v1428 = vunpack.c.l.b16 %v1392
      %v1429 = vunpack.c.l.b16 %v1393
      %v1430 = vunpack.c.l.b16 %v1394
      %v1431 = vunpack.c.l.b16 %v1395
      %v1432 = vunpack.c.l.b16 %v1396
      %v1433 = vunpack.c.l.b16 %v1397
      %v1434 = vunpack.c.l.b16 %v1398
      %v1435 = vunpack.c.l.b16 %v1399
      %v1436 = vunpack.c.l.b16 %v1400
      %v1437 = vunpack.c.l.b16 %v1401
      %v1438 = vunpack.c.l.b16 %v1402
      %v1439 = vunpack.c.l.b16 %v1403
      %v1440 = vunpack.c.l.b16 %v1404
      %v1441 = vunpack.c.l.b16 %v1405
      %v1442 = vunpack.c.l.b16 %v1406
      %v1443 = vunpack.c.l.b16 %v1407
      %v1444 = vpack.c.b16 %v1429, %v1428
      %v1445 = vpack.c.b16 %v1431, %v1430
      %v1446 = vpack.c.b16 %v1433, %v1432
      %v1447 = vpack.c.b16 %v1435, %v1434
      %v1448 = vpack.c.b16 %v1437, %v1436
      %v1449 = vpack.c.b16 %v1439, %v1438
      %v1450 = vpack.c.b16 %v1441, %v1440
      %v1451 = vpack.c.b16 %v1443, %v1442
      %1460 = vmatprep.subr.bf16.mxu0 0
      %1461 = vmatpush1.bf16.msra.mxu0 %v1444
      %1462 = vmatprep.subr.bf16.mxu0 0
      %1463 = vmatpush1.bf16.msra.mxu0 %v1445
      %1464 = vmatprep.subr.bf16.mxu0 0
      %1465 = vmatpush1.bf16.msra.mxu0 %v1446
      %1466 = vmatprep.subr.bf16.mxu0 0
      %1467 = vmatpush1.bf16.msra.mxu0 %v1447
      %1468 = vmatprep.subr.bf16.mxu0 0
      %1469 = vmatpush1.bf16.msra.mxu0 %v1448
      %1470 = vmatprep.subr.bf16.mxu0 0
      %1471 = vmatpush1.bf16.msra.mxu0 %v1449
      %1472 = vmatprep.subr.bf16.mxu0 0
      %1473 = vmatpush1.bf16.msra.mxu0 %v1450
      %1474 = vmatprep.subr.bf16.mxu0 0
      %1475 = vmatpush1.bf16.msra.mxu0 %v1451
      %1476 = vmatprep.subr.bf16.mxu0 0
      %1477 = vmatpush1.bf16.msra.mxu0 0
      %1478 = vmatprep.subr.bf16.mxu0 0
      %1479 = vmatpush1.bf16.msra.mxu0 0
      %1480 = vmatprep.subr.bf16.mxu0 0
      %1481 = vmatpush1.bf16.msra.mxu0 0
      %1482 = vmatprep.subr.bf16.mxu0 0
      %1483 = vmatpush1.bf16.msra.mxu0 0
      %1484 = vmatprep.subr.bf16.mxu0 0
      %1485 = vmatpush1.bf16.msra.mxu0 0
      %1486 = vmatprep.subr.bf16.mxu0 0
      %1487 = vmatpush1.bf16.msra.mxu0 0
      %1488 = vmatprep.subr.bf16.mxu0 0
      %1489 = vmatpush1.bf16.msra.mxu0 0
      %1490 = vmatprep.subr.bf16.mxu0 0
      %1491 = vmatpush1.bf16.msra.mxu0 0
      %1492 = vmatprep.mubr.bf16.mxu0 0
      %1493 = vmatmul.mubr.bf16.gmra.mrb[0].mxu0 %v553
      %v1494 = vpop.f32.mrb[0].mxu0
      %v1495 = vadd.f32 0.0, %v1494
      %v1496 = vpop.f32.mrb[0].mxu0
      %v1497 = vpop.f32.mrb[0].mxu0
      %v1498 = vadd.f32 0.0, %v1497
      %v1499 = vpop.f32.mrb[0].mxu0
      %1500 = vmatprep.mubr.bf16.mxu0 0
      %1501 = vmatmul.mubr.bf16.gmra.mrb[0].mxu0 %v554
      %v1502 = vpop.f32.mrb[0].mxu0
      %v1503 = vadd.f32 0.0, %v1502
      %v1504 = vpop.f32.mrb[0].mxu0
      %v1505 = vpop.f32.mrb[0].mxu0
      %v1506 = vadd.f32 0.0, %v1505
      %v1507 = vpop.f32.mrb[0].mxu0
      %1508 = vmatprep.mubr.bf16.mxu0 0
      %1509 = vmatmul.mubr.bf16.gmra.mrb[0].mxu0 %v555
      %v1510 = vpop.f32.mrb[0].mxu0
      %v1511 = vadd.f32 0.0, %v1510
      %v1512 = vpop.f32.mrb[0].mxu0
      %v1513 = vpop.f32.mrb[0].mxu0
      %v1514 = vadd.f32 0.0, %v1513
      %v1515 = vpop.f32.mrb[0].mxu0
      %1516 = vmatprep.mubr.bf16.mxu0 0
      %1517 = vmatmul.mubr.bf16.gmra.mrb[0].mxu0 %v556
      %v1518 = vpop.f32.mrb[0].mxu0
      %v1519 = vadd.f32 0.0, %v1518
      %v1520 = vpop.f32.mrb[0].mxu0
      %v1521 = vpop.f32.mrb[0].mxu0
      %v1522 = vadd.f32 0.0, %v1521
      %v1523 = vpop.f32.mrb[0].mxu0
      %1524 = vmatprep.mubr.bf16.mxu0 0
      %1525 = vmatmul.mubr.bf16.gmra.mrb[0].mxu0 %v557
      %v1526 = vpop.f32.mrb[0].mxu0
      %v1527 = vadd.f32 0.0, %v1526
      %v1528 = vpop.f32.mrb[0].mxu0
      %v1529 = vpop.f32.mrb[0].mxu0
      %v1530 = vadd.f32 0.0, %v1529
      %v1531 = vpop.f32.mrb[0].mxu0
      %1532 = vmatprep.mubr.bf16.mxu0 0
      %1533 = vmatmul.mubr.bf16.gmra.mrb[0].mxu0 %v558
      %v1534 = vpop.f32.mrb[0].mxu0
      %v1535 = vadd.f32 0.0, %v1534
      %v1536 = vpop.f32.mrb[0].mxu0
      %v1537 = vpop.f32.mrb[0].mxu0
      %v1538 = vadd.f32 0.0, %v1537
      %v1539 = vpop.f32.mrb[0].mxu0
      %1540 = vmatprep.mubr.bf16.mxu0 0
      %1541 = vmatmul.mubr.bf16.gmra.mrb[0].mxu0 %v559
      %v1542 = vpop.f32.mrb[0].mxu0
      %v1543 = vadd.f32 0.0, %v1542
      %v1544 = vpop.f32.mrb[0].mxu0
      %v1545 = vpop.f32.mrb[0].mxu0
      %v1546 = vadd.f32 0.0, %v1545
      %v1547 = vpop.f32.mrb[0].mxu0
      %1548 = vmatprep.mubr.bf16.mxu0 0
      %1549 = vmatmul.mubr.bf16.gmra.mrb[0].mxu0 %v1410
      %v1550 = vpop.f32.mrb[0].mxu0
      %v1551 = vadd.f32 0.0, %v1550
      %v1552 = vpop.f32.mrb[0].mxu0
      %v1553 = vpop.f32.mrb[0].mxu0
      %v1554 = vadd.f32 0.0, %v1553
      %v1555 = vpop.f32.mrb[0].mxu0
      %1556 = vdwg.mxu0
      %v1557 = vadd.f32 %v1351, %v1495
      %v1558 = vadd.f32 %v1352, %v1498
      %v1559 = vadd.f32 %v1353, %v1503
      %v1560 = vadd.f32 %v1354, %v1506
      %v1561 = vadd.f32 %v1355, %v1511
      %v1562 = vadd.f32 %v1356, %v1514
      %v1563 = vadd.f32 %v1357, %v1519
      %v1564 = vadd.f32 %v1358, %v1522
      %v1565 = vadd.f32 %v1359, %v1527
      %v1566 = vadd.f32 %v1360, %v1530
      %v1567 = vadd.f32 %v1361, %v1535
      %v1568 = vadd.f32 %v1362, %v1538
      %v1569 = vadd.f32 %v1363, %v1543
      %v1570 = vadd.f32 %v1364, %v1546
      %v1571 = vadd.f32 %v1365, %v1551
      %v1572 = vadd.f32 %v1366, %v1554
      %v1574 = vrot.slane %v302, 5
      %v1575 = vrot.slane %v1574, 4
      %v1576 = vrot.slane %v303, 5
      %v1577 = vsel %vm916, %v1575, %v1576
      %v1578 = vrot.slane %v1576, 4
      %v1579 = vrot.slane %v304, 5
      %v1580 = vsel %vm916, %v1578, %v1579
      %s1581 = scalar_lea.vmem %s1, 320
      %v1582 = vld [vmem:[%s1581] sm:$0xf]
      %v1583 = vld [vmem:[%s1581 + $0x4] sm:$0xf]
      %v1584 = vld [vmem:[%s1581 + $0x8] sm:$0xf]
      %v1585 = vld [vmem:[%s1581 + $0xc] sm:$0xf]
      %v1586 = vld [vmem:[%s1581 + $0x10] sm:$0xf]
      %v1587 = vld [vmem:[%s1581 + $0x14] sm:$0xf]
      %v1588 = vld [vmem:[%s1581 + $0x18] sm:$0xf]
      %v1589 = vld [vmem:[%s1581 + $0x1c] sm:$0xf]
      %v1590 = vld [vmem:[%s1581 + $0x20] sm:$0xf]
      %v1591 = vld [vmem:[%s1581 + $0x24] sm:$0xf]
      %v1592 = vld [vmem:[%s1581 + $0x28] sm:$0xf]
      %v1593 = vld [vmem:[%s1581 + $0x2c] sm:$0xf]
      %v1594 = vld [vmem:[%s1581 + $0x30] sm:$0xf]
      %v1595 = vld [vmem:[%s1581 + $0x34] sm:$0xf]
      %v1596 = vld [vmem:[%s1581 + $0x38] sm:$0xf]
      %v1597 = vld [vmem:[%s1581 + $0x3c] sm:$0xf]
      %v1598 = vunpack.c.l.b16 %v1577
      %v1599 = vunpack.c.l.b16 %v1580
      %v1600 = vpack.c.b16 %v1599, %v1598
      %v1618 = vunpack.c.l.b16 %v1582
      %v1619 = vunpack.c.l.b16 %v1583
      %v1620 = vunpack.c.l.b16 %v1584
      %v1621 = vunpack.c.l.b16 %v1585
      %v1622 = vunpack.c.l.b16 %v1586
      %v1623 = vunpack.c.l.b16 %v1587
      %v1624 = vunpack.c.l.b16 %v1588
      %v1625 = vunpack.c.l.b16 %v1589
      %v1626 = vunpack.c.l.b16 %v1590
      %v1627 = vunpack.c.l.b16 %v1591
      %v1628 = vunpack.c.l.b16 %v1592
      %v1629 = vunpack.c.l.b16 %v1593
      %v1630 = vunpack.c.l.b16 %v1594
      %v1631 = vunpack.c.l.b16 %v1595
      %v1632 = vunpack.c.l.b16 %v1596
      %v1633 = vunpack.c.l.b16 %v1597
      %v1634 = vpack.c.b16 %v1619, %v1618
      %v1635 = vpack.c.b16 %v1621, %v1620
      %v1636 = vpack.c.b16 %v1623, %v1622
      %v1637 = vpack.c.b16 %v1625, %v1624
      %v1638 = vpack.c.b16 %v1627, %v1626
      %v1639 = vpack.c.b16 %v1629, %v1628
      %v1640 = vpack.c.b16 %v1631, %v1630
      %v1641 = vpack.c.b16 %v1633, %v1632
      %1650 = vmatprep.subr.bf16.mxu0 0
      %1651 = vmatpush1.bf16.msra.mxu0 %v1634
      %1652 = vmatprep.subr.bf16.mxu0 0
      %1653 = vmatpush1.bf16.msra.mxu0 %v1635
      %1654 = vmatprep.subr.bf16.mxu0 0
      %1655 = vmatpush1.bf16.msra.mxu0 %v1636
      %1656 = vmatprep.subr.bf16.mxu0 0
      %1657 = vmatpush1.bf16.msra.mxu0 %v1637
      %1658 = vmatprep.subr.bf16.mxu0 0
      %1659 = vmatpush1.bf16.msra.mxu0 %v1638
      %1660 = vmatprep.subr.bf16.mxu0 0
      %1661 = vmatpush1.bf16.msra.mxu0 %v1639
      %1662 = vmatprep.subr.bf16.mxu0 0
      %1663 = vmatpush1.bf16.msra.mxu0 %v1640
      %1664 = vmatprep.subr.bf16.mxu0 0
      %1665 = vmatpush1.bf16.msra.mxu0 %v1641
      %1666 = vmatprep.subr.bf16.mxu0 0
      %1667 = vmatpush1.bf16.msra.mxu0 0
      %1668 = vmatprep.subr.bf16.mxu0 0
      %1669 = vmatpush1.bf16.msra.mxu0 0
      %1670 = vmatprep.subr.bf16.mxu0 0
      %1671 = vmatpush1.bf16.msra.mxu0 0
      %1672 = vmatprep.subr.bf16.mxu0 0
      %1673 = vmatpush1.bf16.msra.mxu0 0
      %1674 = vmatprep.subr.bf16.mxu0 0
      %1675 = vmatpush1.bf16.msra.mxu0 0
      %1676 = vmatprep.subr.bf16.mxu0 0
      %1677 = vmatpush1.bf16.msra.mxu0 0
      %1678 = vmatprep.subr.bf16.mxu0 0
      %1679 = vmatpush1.bf16.msra.mxu0 0
      %1680 = vmatprep.subr.bf16.mxu0 0
      %1681 = vmatpush1.bf16.msra.mxu0 0
      %1682 = vmatprep.mubr.bf16.mxu0 0
      %1683 = vmatmul.mubr.bf16.gmra.mrb[0].mxu0 %v1007
      %v1684 = vpop.f32.mrb[0].mxu0
      %v1685 = vadd.f32 0.0, %v1684
      %v1686 = vpop.f32.mrb[0].mxu0
      %v1687 = vpop.f32.mrb[0].mxu0
      %v1688 = vadd.f32 0.0, %v1687
      %v1689 = vpop.f32.mrb[0].mxu0
      %1690 = vmatprep.mubr.bf16.mxu0 0
      %1691 = vmatmul.mubr.bf16.gmra.mrb[0].mxu0 %v1008
      %v1692 = vpop.f32.mrb[0].mxu0
      %v1693 = vadd.f32 0.0, %v1692
      %v1694 = vpop.f32.mrb[0].mxu0
      %v1695 = vpop.f32.mrb[0].mxu0
      %v1696 = vadd.f32 0.0, %v1695
      %v1697 = vpop.f32.mrb[0].mxu0
      %1698 = vmatprep.mubr.bf16.mxu0 0
      %1699 = vmatmul.mubr.bf16.gmra.mrb[0].mxu0 %v1009
      %v1700 = vpop.f32.mrb[0].mxu0
      %v1701 = vadd.f32 0.0, %v1700
      %v1702 = vpop.f32.mrb[0].mxu0
      %v1703 = vpop.f32.mrb[0].mxu0
      %v1704 = vadd.f32 0.0, %v1703
      %v1705 = vpop.f32.mrb[0].mxu0
      %1706 = vmatprep.mubr.bf16.mxu0 0
      %1707 = vmatmul.mubr.bf16.gmra.mrb[0].mxu0 %v1010
      %v1708 = vpop.f32.mrb[0].mxu0
      %v1709 = vadd.f32 0.0, %v1708
      %v1710 = vpop.f32.mrb[0].mxu0
      %v1711 = vpop.f32.mrb[0].mxu0
      %v1712 = vadd.f32 0.0, %v1711
      %v1713 = vpop.f32.mrb[0].mxu0
      %1714 = vmatprep.mubr.bf16.mxu0 0
      %1715 = vmatmul.mubr.bf16.gmra.mrb[0].mxu0 %v1011
      %v1716 = vpop.f32.mrb[0].mxu0
      %v1717 = vadd.f32 0.0, %v1716
      %v1718 = vpop.f32.mrb[0].mxu0
      %v1719 = vpop.f32.mrb[0].mxu0
      %v1720 = vadd.f32 0.0, %v1719
      %v1721 = vpop.f32.mrb[0].mxu0
      %1722 = vmatprep.mubr.bf16.mxu0 0
      %1723 = vmatmul.mubr.bf16.gmra.mrb[0].mxu0 %v1012
      %v1724 = vpop.f32.mrb[0].mxu0
      %v1725 = vadd.f32 0.0, %v1724
      %v1726 = vpop.f32.mrb[0].mxu0
      %v1727 = vpop.f32.mrb[0].mxu0
      %v1728 = vadd.f32 0.0, %v1727
      %v1729 = vpop.f32.mrb[0].mxu0
      %1730 = vmatprep.mubr.bf16.mxu0 0
      %1731 = vmatmul.mubr.bf16.gmra.mrb[0].mxu0 %v1013
      %v1732 = vpop.f32.mrb[0].mxu0
      %v1733 = vadd.f32 0.0, %v1732
      %v1734 = vpop.f32.mrb[0].mxu0
      %v1735 = vpop.f32.mrb[0].mxu0
      %v1736 = vadd.f32 0.0, %v1735
      %v1737 = vpop.f32.mrb[0].mxu0
      %1738 = vmatprep.mubr.bf16.mxu0 0
      %1739 = vmatmul.mubr.bf16.gmra.mrb[0].mxu0 %v1600
      %v1740 = vpop.f32.mrb[0].mxu0
      %v1741 = vadd.f32 0.0, %v1740
      %v1742 = vpop.f32.mrb[0].mxu0
      %v1743 = vpop.f32.mrb[0].mxu0
      %v1744 = vadd.f32 0.0, %v1743
      %v1745 = vpop.f32.mrb[0].mxu0
      %1746 = vdwg.mxu0
      %v1747 = vadd.f32 %v1557, %v1685
      %v1748 = vadd.f32 %v1558, %v1688
      %v1749 = vadd.f32 %v1559, %v1693
      %v1750 = vadd.f32 %v1560, %v1696
      %v1751 = vadd.f32 %v1561, %v1701
      %v1752 = vadd.f32 %v1562, %v1704
      %v1753 = vadd.f32 %v1563, %v1709
      %v1754 = vadd.f32 %v1564, %v1712
      %v1755 = vadd.f32 %v1565, %v1717
      %v1756 = vadd.f32 %v1566, %v1720
      %v1757 = vadd.f32 %v1567, %v1725
      %v1758 = vadd.f32 %v1568, %v1728
      %v1759 = vadd.f32 %v1569, %v1733
      %v1760 = vadd.f32 %v1570, %v1736
      %v1761 = vadd.f32 %v1571, %v1741
      %v1762 = vadd.f32 %v1572, %v1744
      %s1763 = scalar_lea.vmem %s1, 384
      %v1764 = vld [vmem:[%s1763] sm:$0xf]
      %v1765 = vld [vmem:[%s1763 + $0x4] sm:$0xf]
      %v1766 = vld [vmem:[%s1763 + $0x8] sm:$0xf]
      %v1767 = vld [vmem:[%s1763 + $0xc] sm:$0xf]
      %v1768 = vld [vmem:[%s1763 + $0x10] sm:$0xf]
      %v1769 = vld [vmem:[%s1763 + $0x14] sm:$0xf]
      %v1770 = vld [vmem:[%s1763 + $0x18] sm:$0xf]
      %v1771 = vld [vmem:[%s1763 + $0x1c] sm:$0xf]
      %v1772 = vld [vmem:[%s1763 + $0x20] sm:$0xf]
      %v1773 = vld [vmem:[%s1763 + $0x24] sm:$0xf]
      %v1774 = vld [vmem:[%s1763 + $0x28] sm:$0xf]
      %v1775 = vld [vmem:[%s1763 + $0x2c] sm:$0xf]
      %v1776 = vld [vmem:[%s1763 + $0x30] sm:$0xf]
      %v1777 = vld [vmem:[%s1763 + $0x34] sm:$0xf]
      %v1778 = vld [vmem:[%s1763 + $0x38] sm:$0xf]
      %v1779 = vld [vmem:[%s1763 + $0x3c] sm:$0xf]
      %v1782 = vunpack.c.l.b16 %v305
      %v1783 = vunpack.c.l.b16 %v306
      %v1784 = vpack.c.b16 %v1783, %v1782
      %v1802 = vunpack.c.l.b16 %v1764
      %v1803 = vunpack.c.l.b16 %v1765
      %v1804 = vunpack.c.l.b16 %v1766
      %v1805 = vunpack.c.l.b16 %v1767
      %v1806 = vunpack.c.l.b16 %v1768
      %v1807 = vunpack.c.l.b16 %v1769
      %v1808 = vunpack.c.l.b16 %v1770
      %v1809 = vunpack.c.l.b16 %v1771
      %v1810 = vunpack.c.l.b16 %v1772
      %v1811 = vunpack.c.l.b16 %v1773
      %v1812 = vunpack.c.l.b16 %v1774
      %v1813 = vunpack.c.l.b16 %v1775
      %v1814 = vunpack.c.l.b16 %v1776
      %v1815 = vunpack.c.l.b16 %v1777
      %v1816 = vunpack.c.l.b16 %v1778
      %v1817 = vunpack.c.l.b16 %v1779
      %v1818 = vpack.c.b16 %v1803, %v1802
      %v1819 = vpack.c.b16 %v1805, %v1804
      %v1820 = vpack.c.b16 %v1807, %v1806
      %v1821 = vpack.c.b16 %v1809, %v1808
      %v1822 = vpack.c.b16 %v1811, %v1810
      %v1823 = vpack.c.b16 %v1813, %v1812
      %v1824 = vpack.c.b16 %v1815, %v1814
      %v1825 = vpack.c.b16 %v1817, %v1816
      %1834 = vmatprep.subr.bf16.mxu0 0
      %1835 = vmatpush1.bf16.msra.mxu0 %v1818
      %1836 = vmatprep.subr.bf16.mxu0 0
      %1837 = vmatpush1.bf16.msra.mxu0 %v1819
      %1838 = vmatprep.subr.bf16.mxu0 0
      %1839 = vmatpush1.bf16.msra.mxu0 %v1820
      %1840 = vmatprep.subr.bf16.mxu0 0
      %1841 = vmatpush1.bf16.msra.mxu0 %v1821
      %1842 = vmatprep.subr.bf16.mxu0 0
      %1843 = vmatpush1.bf16.msra.mxu0 %v1822
      %1844 = vmatprep.subr.bf16.mxu0 0
      %1845 = vmatpush1.bf16.msra.mxu0 %v1823
      %1846 = vmatprep.subr.bf16.mxu0 0
      %1847 = vmatpush1.bf16.msra.mxu0 %v1824
      %1848 = vmatprep.subr.bf16.mxu0 0
      %1849 = vmatpush1.bf16.msra.mxu0 %v1825
      %1850 = vmatprep.subr.bf16.mxu0 0
      %1851 = vmatpush1.bf16.msra.mxu0 0
      %1852 = vmatprep.subr.bf16.mxu0 0
      %1853 = vmatpush1.bf16.msra.mxu0 0
      %1854 = vmatprep.subr.bf16.mxu0 0
      %1855 = vmatpush1.bf16.msra.mxu0 0
      %1856 = vmatprep.subr.bf16.mxu0 0
      %1857 = vmatpush1.bf16.msra.mxu0 0
      %1858 = vmatprep.subr.bf16.mxu0 0
      %1859 = vmatpush1.bf16.msra.mxu0 0
      %1860 = vmatprep.subr.bf16.mxu0 0
      %1861 = vmatpush1.bf16.msra.mxu0 0
      %1862 = vmatprep.subr.bf16.mxu0 0
      %1863 = vmatpush1.bf16.msra.mxu0 0
      %1864 = vmatprep.subr.bf16.mxu0 0
      %1865 = vmatpush1.bf16.msra.mxu0 0
      %1866 = vmatprep.mubr.bf16.mxu0 0
      %1867 = vmatmul.mubr.bf16.gmra.mrb[0].mxu0 %v747
      %v1868 = vpop.f32.mrb[0].mxu0
      %v1869 = vadd.f32 0.0, %v1868
      %v1870 = vpop.f32.mrb[0].mxu0
      %v1871 = vpop.f32.mrb[0].mxu0
      %v1872 = vadd.f32 0.0, %v1871
      %v1873 = vpop.f32.mrb[0].mxu0
      %1874 = vmatprep.mubr.bf16.mxu0 0
      %1875 = vmatmul.mubr.bf16.gmra.mrb[0].mxu0 %v748
      %v1876 = vpop.f32.mrb[0].mxu0
      %v1877 = vadd.f32 0.0, %v1876
      %v1878 = vpop.f32.mrb[0].mxu0
      %v1879 = vpop.f32.mrb[0].mxu0
      %v1880 = vadd.f32 0.0, %v1879
      %v1881 = vpop.f32.mrb[0].mxu0
      %1882 = vmatprep.mubr.bf16.mxu0 0
      %1883 = vmatmul.mubr.bf16.gmra.mrb[0].mxu0 %v749
      %v1884 = vpop.f32.mrb[0].mxu0
      %v1885 = vadd.f32 0.0, %v1884
      %v1886 = vpop.f32.mrb[0].mxu0
      %v1887 = vpop.f32.mrb[0].mxu0
      %v1888 = vadd.f32 0.0, %v1887
      %v1889 = vpop.f32.mrb[0].mxu0
      %1890 = vmatprep.mubr.bf16.mxu0 0
      %1891 = vmatmul.mubr.bf16.gmra.mrb[0].mxu0 %v750
      %v1892 = vpop.f32.mrb[0].mxu0
      %v1893 = vadd.f32 0.0, %v1892
      %v1894 = vpop.f32.mrb[0].mxu0
      %v1895 = vpop.f32.mrb[0].mxu0
      %v1896 = vadd.f32 0.0, %v1895
      %v1897 = vpop.f32.mrb[0].mxu0
      %1898 = vmatprep.mubr.bf16.mxu0 0
      %1899 = vmatmul.mubr.bf16.gmra.mrb[0].mxu0 %v751
      %v1900 = vpop.f32.mrb[0].mxu0
      %v1901 = vadd.f32 0.0, %v1900
      %v1902 = vpop.f32.mrb[0].mxu0
      %v1903 = vpop.f32.mrb[0].mxu0
      %v1904 = vadd.f32 0.0, %v1903
      %v1905 = vpop.f32.mrb[0].mxu0
      %1906 = vmatprep.mubr.bf16.mxu0 0
      %1907 = vmatmul.mubr.bf16.gmra.mrb[0].mxu0 %v752
      %v1908 = vpop.f32.mrb[0].mxu0
      %v1909 = vadd.f32 0.0, %v1908
      %v1910 = vpop.f32.mrb[0].mxu0
      %v1911 = vpop.f32.mrb[0].mxu0
      %v1912 = vadd.f32 0.0, %v1911
      %v1913 = vpop.f32.mrb[0].mxu0
      %1914 = vmatprep.mubr.bf16.mxu0 0
      %1915 = vmatmul.mubr.bf16.gmra.mrb[0].mxu0 %v1204
      %v1916 = vpop.f32.mrb[0].mxu0
      %v1917 = vadd.f32 0.0, %v1916
      %v1918 = vpop.f32.mrb[0].mxu0
      %v1919 = vpop.f32.mrb[0].mxu0
      %v1920 = vadd.f32 0.0, %v1919
      %v1921 = vpop.f32.mrb[0].mxu0
      %1922 = vmatprep.mubr.bf16.mxu0 0
      %1923 = vmatmul.mubr.bf16.gmra.mrb[0].mxu0 %v1784
      %v1924 = vpop.f32.mrb[0].mxu0
      %v1925 = vadd.f32 0.0, %v1924
      %v1926 = vpop.f32.mrb[0].mxu0
      %v1927 = vpop.f32.mrb[0].mxu0
      %v1928 = vadd.f32 0.0, %v1927
      %v1929 = vpop.f32.mrb[0].mxu0
      %1930 = vdwg.mxu0
      %v1931 = vadd.f32 %v1747, %v1869
      %v1932 = vadd.f32 %v1748, %v1872
      %v1933 = vadd.f32 %v1749, %v1877
      %v1934 = vadd.f32 %v1750, %v1880
      %v1935 = vadd.f32 %v1751, %v1885
      %v1936 = vadd.f32 %v1752, %v1888
      %v1937 = vadd.f32 %v1753, %v1893
      %v1938 = vadd.f32 %v1754, %v1896
      %v1939 = vadd.f32 %v1755, %v1901
      %v1940 = vadd.f32 %v1756, %v1904
      %v1941 = vadd.f32 %v1757, %v1909
      %v1942 = vadd.f32 %v1758, %v1912
      %v1943 = vadd.f32 %v1759, %v1917
      %v1944 = vadd.f32 %v1760, %v1920
      %v1945 = vadd.f32 %v1761, %v1925
      %v1946 = vadd.f32 %v1762, %v1928
      %v1948 = vshrl.u32 %v305, 16
      %v1950 = vrot.slane %v1948, 4
      %v1951 = vshll.u32 %v305, 16
      %v1953 = vrot.slane %v1951, 5
      %v1954 = vor.u32 %v1950, %v1953
      %v1955 = vrot.slane %v1954, 4
      %v1957 = vshll.u32 %v306, 16
      %v1959 = vrot.slane %v1957, 5
      %v1960 = vsel %vm326, %v1955, %v1959
      %v1961 = vshrl.u32 %v306, 16
      %v1963 = vrot.slane %v1961, 4
      %v1964 = vor.u32 %v1963, %v1959
      %v1965 = vrot.slane %v1964, 4
      %v1967 = vshll.u32 %v307, 16
      %v1969 = vrot.slane %v1967, 5
      %v1970 = vsel %vm326, %v1965, %v1969
      %s1971 = scalar_lea.vmem %s1, 448
      %v1972 = vld [vmem:[%s1971] sm:$0xf]
      %v1973 = vld [vmem:[%s1971 + $0x4] sm:$0xf]
      %v1974 = vld [vmem:[%s1971 + $0x8] sm:$0xf]
      %v1975 = vld [vmem:[%s1971 + $0xc] sm:$0xf]
      %v1976 = vld [vmem:[%s1971 + $0x10] sm:$0xf]
      %v1977 = vld [vmem:[%s1971 + $0x14] sm:$0xf]
      %v1978 = vld [vmem:[%s1971 + $0x18] sm:$0xf]
      %v1979 = vld [vmem:[%s1971 + $0x1c] sm:$0xf]
      %v1980 = vld [vmem:[%s1971 + $0x20] sm:$0xf]
      %v1981 = vld [vmem:[%s1971 + $0x24] sm:$0xf]
      %v1982 = vld [vmem:[%s1971 + $0x28] sm:$0xf]
      %v1983 = vld [vmem:[%s1971 + $0x2c] sm:$0xf]
      %v1984 = vld [vmem:[%s1971 + $0x30] sm:$0xf]
      %v1985 = vld [vmem:[%s1971 + $0x34] sm:$0xf]
      %v1986 = vld [vmem:[%s1971 + $0x38] sm:$0xf]
      %v1987 = vld [vmem:[%s1971 + $0x3c] sm:$0xf]
      %v1988 = vunpack.c.l.b16 %v1960
      %v1989 = vunpack.c.l.b16 %v1970
      %v1990 = vpack.c.b16 %v1989, %v1988
      %v2008 = vunpack.c.l.b16 %v1972
      %v2009 = vunpack.c.l.b16 %v1973
      %v2010 = vunpack.c.l.b16 %v1974
      %v2011 = vunpack.c.l.b16 %v1975
      %v2012 = vunpack.c.l.b16 %v1976
      %v2013 = vunpack.c.l.b16 %v1977
      %v2014 = vunpack.c.l.b16 %v1978
      %v2015 = vunpack.c.l.b16 %v1979
      %v2016 = vunpack.c.l.b16 %v1980
      %v2017 = vunpack.c.l.b16 %v1981
      %v2018 = vunpack.c.l.b16 %v1982
      %v2019 = vunpack.c.l.b16 %v1983
      %v2020 = vunpack.c.l.b16 %v1984
      %v2021 = vunpack.c.l.b16 %v1985
      %v2022 = vunpack.c.l.b16 %v1986
      %v2023 = vunpack.c.l.b16 %v1987
      %v2024 = vpack.c.b16 %v2009, %v2008
      %v2025 = vpack.c.b16 %v2011, %v2010
      %v2026 = vpack.c.b16 %v2013, %v2012
      %v2027 = vpack.c.b16 %v2015, %v2014
      %v2028 = vpack.c.b16 %v2017, %v2016
      %v2029 = vpack.c.b16 %v2019, %v2018
      %v2030 = vpack.c.b16 %v2021, %v2020
      %v2031 = vpack.c.b16 %v2023, %v2022
      %2040 = vmatprep.subr.bf16.mxu0 0
      %2041 = vmatpush1.bf16.msra.mxu0 %v2024
      %2042 = vmatprep.subr.bf16.mxu0 0
      %2043 = vmatpush1.bf16.msra.mxu0 %v2025
      %2044 = vmatprep.subr.bf16.mxu0 0
      %2045 = vmatpush1.bf16.msra.mxu0 %v2026
      %2046 = vmatprep.subr.bf16.mxu0 0
      %2047 = vmatpush1.bf16.msra.mxu0 %v2027
      %2048 = vmatprep.subr.bf16.mxu0 0
      %2049 = vmatpush1.bf16.msra.mxu0 %v2028
      %2050 = vmatprep.subr.bf16.mxu0 0
      %2051 = vmatpush1.bf16.msra.mxu0 %v2029
      %2052 = vmatprep.subr.bf16.mxu0 0
      %2053 = vmatpush1.bf16.msra.mxu0 %v2030
      %2054 = vmatprep.subr.bf16.mxu0 0
      %2055 = vmatpush1.bf16.msra.mxu0 %v2031
      %2056 = vmatprep.subr.bf16.mxu0 0
      %2057 = vmatpush1.bf16.msra.mxu0 0
      %2058 = vmatprep.subr.bf16.mxu0 0
      %2059 = vmatpush1.bf16.msra.mxu0 0
      %2060 = vmatprep.subr.bf16.mxu0 0
      %2061 = vmatpush1.bf16.msra.mxu0 0
      %2062 = vmatprep.subr.bf16.mxu0 0
      %2063 = vmatpush1.bf16.msra.mxu0 0
      %2064 = vmatprep.subr.bf16.mxu0 0
      %2065 = vmatpush1.bf16.msra.mxu0 0
      %2066 = vmatprep.subr.bf16.mxu0 0
      %2067 = vmatpush1.bf16.msra.mxu0 0
      %2068 = vmatprep.subr.bf16.mxu0 0
      %2069 = vmatpush1.bf16.msra.mxu0 0
      %2070 = vmatprep.subr.bf16.mxu0 0
      %2071 = vmatpush1.bf16.msra.mxu0 0
      %2072 = vmatprep.mubr.bf16.mxu0 0
      %2073 = vmatmul.mubr.bf16.gmra.mrb[0].mxu0 %v554
      %v2074 = vpop.f32.mrb[0].mxu0
      %v2075 = vadd.f32 0.0, %v2074
      %v2076 = vpop.f32.mrb[0].mxu0
      %v2077 = vpop.f32.mrb[0].mxu0
      %v2078 = vadd.f32 0.0, %v2077
      %v2079 = vpop.f32.mrb[0].mxu0
      %2080 = vmatprep.mubr.bf16.mxu0 0
      %2081 = vmatmul.mubr.bf16.gmra.mrb[0].mxu0 %v555
      %v2082 = vpop.f32.mrb[0].mxu0
      %v2083 = vadd.f32 0.0, %v2082
      %v2084 = vpop.f32.mrb[0].mxu0
      %v2085 = vpop.f32.mrb[0].mxu0
      %v2086 = vadd.f32 0.0, %v2085
      %v2087 = vpop.f32.mrb[0].mxu0
      %2088 = vmatprep.mubr.bf16.mxu0 0
      %2089 = vmatmul.mubr.bf16.gmra.mrb[0].mxu0 %v556
      %v2090 = vpop.f32.mrb[0].mxu0
      %v2091 = vadd.f32 0.0, %v2090
      %v2092 = vpop.f32.mrb[0].mxu0
      %v2093 = vpop.f32.mrb[0].mxu0
      %v2094 = vadd.f32 0.0, %v2093
      %v2095 = vpop.f32.mrb[0].mxu0
      %2096 = vmatprep.mubr.bf16.mxu0 0
      %2097 = vmatmul.mubr.bf16.gmra.mrb[0].mxu0 %v557
      %v2098 = vpop.f32.mrb[0].mxu0
      %v2099 = vadd.f32 0.0, %v2098
      %v2100 = vpop.f32.mrb[0].mxu0
      %v2101 = vpop.f32.mrb[0].mxu0
      %v2102 = vadd.f32 0.0, %v2101
      %v2103 = vpop.f32.mrb[0].mxu0
      %2104 = vmatprep.mubr.bf16.mxu0 0
      %2105 = vmatmul.mubr.bf16.gmra.mrb[0].mxu0 %v558
      %v2106 = vpop.f32.mrb[0].mxu0
      %v2107 = vadd.f32 0.0, %v2106
      %v2108 = vpop.f32.mrb[0].mxu0
      %v2109 = vpop.f32.mrb[0].mxu0
      %v2110 = vadd.f32 0.0, %v2109
      %v2111 = vpop.f32.mrb[0].mxu0
      %2112 = vmatprep.mubr.bf16.mxu0 0
      %2113 = vmatmul.mubr.bf16.gmra.mrb[0].mxu0 %v559
      %v2114 = vpop.f32.mrb[0].mxu0
      %v2115 = vadd.f32 0.0, %v2114
      %v2116 = vpop.f32.mrb[0].mxu0
      %v2117 = vpop.f32.mrb[0].mxu0
      %v2118 = vadd.f32 0.0, %v2117
      %v2119 = vpop.f32.mrb[0].mxu0
      %2120 = vmatprep.mubr.bf16.mxu0 0
      %2121 = vmatmul.mubr.bf16.gmra.mrb[0].mxu0 %v1410
      %v2122 = vpop.f32.mrb[0].mxu0
      %v2123 = vadd.f32 0.0, %v2122
      %v2124 = vpop.f32.mrb[0].mxu0
      %v2125 = vpop.f32.mrb[0].mxu0
      %v2126 = vadd.f32 0.0, %v2125
      %v2127 = vpop.f32.mrb[0].mxu0
      %2128 = vmatprep.mubr.bf16.mxu0 0
      %2129 = vmatmul.mubr.bf16.gmra.mrb[0].mxu0 %v1990
      %v2130 = vpop.f32.mrb[0].mxu0
      %v2131 = vadd.f32 0.0, %v2130
      %v2132 = vpop.f32.mrb[0].mxu0
      %v2133 = vpop.f32.mrb[0].mxu0
      %v2134 = vadd.f32 0.0, %v2133
      %v2135 = vpop.f32.mrb[0].mxu0
      %2136 = vdwg.mxu0
      %v2137 = vadd.f32 %v1931, %v2075
      %v2138 = vadd.f32 %v1932, %v2078
      %v2139 = vadd.f32 %v1933, %v2083
      %v2140 = vadd.f32 %v1934, %v2086
      %v2141 = vadd.f32 %v1935, %v2091
      %v2142 = vadd.f32 %v1936, %v2094
      %v2143 = vadd.f32 %v1937, %v2099
      %v2144 = vadd.f32 %v1938, %v2102
      %v2145 = vadd.f32 %v1939, %v2107
      %v2146 = vadd.f32 %v1940, %v2110
      %v2147 = vadd.f32 %v1941, %v2115
      %v2148 = vadd.f32 %v1942, %v2118
      %v2149 = vadd.f32 %v1943, %v2123
      %v2150 = vadd.f32 %v1944, %v2126
      %v2151 = vadd.f32 %v1945, %v2131
      %v2152 = vadd.f32 %v1946, %v2134
      %v2154 = vrot.slane %v305, 5
      %v2155 = vrot.slane %v2154, 4
      %v2156 = vrot.slane %v306, 5
      %v2157 = vsel %vm916, %v2155, %v2156
      %v2158 = vrot.slane %v2156, 4
      %v2159 = vrot.slane %v307, 5
      %v2160 = vsel %vm916, %v2158, %v2159
      %s2161 = scalar_lea.vmem %s1, 512
      %v2162 = vld [vmem:[%s2161] sm:$0xf]
      %v2163 = vld [vmem:[%s2161 + $0x4] sm:$0xf]
      %v2164 = vld [vmem:[%s2161 + $0x8] sm:$0xf]
      %v2165 = vld [vmem:[%s2161 + $0xc] sm:$0xf]
      %v2166 = vld [vmem:[%s2161 + $0x10] sm:$0xf]
      %v2167 = vld [vmem:[%s2161 + $0x14] sm:$0xf]
      %v2168 = vld [vmem:[%s2161 + $0x18] sm:$0xf]
      %v2169 = vld [vmem:[%s2161 + $0x1c] sm:$0xf]
      %v2170 = vld [vmem:[%s2161 + $0x20] sm:$0xf]
      %v2171 = vld [vmem:[%s2161 + $0x24] sm:$0xf]
      %v2172 = vld [vmem:[%s2161 + $0x28] sm:$0xf]
      %v2173 = vld [vmem:[%s2161 + $0x2c] sm:$0xf]
      %v2174 = vld [vmem:[%s2161 + $0x30] sm:$0xf]
      %v2175 = vld [vmem:[%s2161 + $0x34] sm:$0xf]
      %v2176 = vld [vmem:[%s2161 + $0x38] sm:$0xf]
      %v2177 = vld [vmem:[%s2161 + $0x3c] sm:$0xf]
      %v2178 = vunpack.c.l.b16 %v2157
      %v2179 = vunpack.c.l.b16 %v2160
      %v2180 = vpack.c.b16 %v2179, %v2178
      %v2198 = vunpack.c.l.b16 %v2162
      %v2199 = vunpack.c.l.b16 %v2163
      %v2200 = vunpack.c.l.b16 %v2164
      %v2201 = vunpack.c.l.b16 %v2165
      %v2202 = vunpack.c.l.b16 %v2166
      %v2203 = vunpack.c.l.b16 %v2167
      %v2204 = vunpack.c.l.b16 %v2168
      %v2205 = vunpack.c.l.b16 %v2169
      %v2206 = vunpack.c.l.b16 %v2170
      %v2207 = vunpack.c.l.b16 %v2171
      %v2208 = vunpack.c.l.b16 %v2172
      %v2209 = vunpack.c.l.b16 %v2173
      %v2210 = vunpack.c.l.b16 %v2174
      %v2211 = vunpack.c.l.b16 %v2175
      %v2212 = vunpack.c.l.b16 %v2176
      %v2213 = vunpack.c.l.b16 %v2177
      %v2214 = vpack.c.b16 %v2199, %v2198
      %v2215 = vpack.c.b16 %v2201, %v2200
      %v2216 = vpack.c.b16 %v2203, %v2202
      %v2217 = vpack.c.b16 %v2205, %v2204
      %v2218 = vpack.c.b16 %v2207, %v2206
      %v2219 = vpack.c.b16 %v2209, %v2208
      %v2220 = vpack.c.b16 %v2211, %v2210
      %v2221 = vpack.c.b16 %v2213, %v2212
      %2230 = vmatprep.subr.bf16.mxu0 0
      %2231 = vmatpush1.bf16.msra.mxu0 %v2214
      %2232 = vmatprep.subr.bf16.mxu0 0
      %2233 = vmatpush1.bf16.msra.mxu0 %v2215
      %2234 = vmatprep.subr.bf16.mxu0 0
      %2235 = vmatpush1.bf16.msra.mxu0 %v2216
      %2236 = vmatprep.subr.bf16.mxu0 0
      %2237 = vmatpush1.bf16.msra.mxu0 %v2217
      %2238 = vmatprep.subr.bf16.mxu0 0
      %2239 = vmatpush1.bf16.msra.mxu0 %v2218
      %2240 = vmatprep.subr.bf16.mxu0 0
      %2241 = vmatpush1.bf16.msra.mxu0 %v2219
      %2242 = vmatprep.subr.bf16.mxu0 0
      %2243 = vmatpush1.bf16.msra.mxu0 %v2220
      %2244 = vmatprep.subr.bf16.mxu0 0
      %2245 = vmatpush1.bf16.msra.mxu0 %v2221
      %2246 = vmatprep.subr.bf16.mxu0 0
      %2247 = vmatpush1.bf16.msra.mxu0 0
      %2248 = vmatprep.subr.bf16.mxu0 0
      %2249 = vmatpush1.bf16.msra.mxu0 0
      %2250 = vmatprep.subr.bf16.mxu0 0
      %2251 = vmatpush1.bf16.msra.mxu0 0
      %2252 = vmatprep.subr.bf16.mxu0 0
      %2253 = vmatpush1.bf16.msra.mxu0 0
      %2254 = vmatprep.subr.bf16.mxu0 0
      %2255 = vmatpush1.bf16.msra.mxu0 0
      %2256 = vmatprep.subr.bf16.mxu0 0
      %2257 = vmatpush1.bf16.msra.mxu0 0
      %2258 = vmatprep.subr.bf16.mxu0 0
      %2259 = vmatpush1.bf16.msra.mxu0 0
      %2260 = vmatprep.subr.bf16.mxu0 0
      %2261 = vmatpush1.bf16.msra.mxu0 0
      %2262 = vmatprep.mubr.bf16.mxu0 0
      %2263 = vmatmul.mubr.bf16.gmra.mrb[0].mxu0 %v1008
      %v2264 = vpop.f32.mrb[0].mxu0
      %v2265 = vadd.f32 0.0, %v2264
      %v2266 = vpop.f32.mrb[0].mxu0
      %v2267 = vpop.f32.mrb[0].mxu0
      %v2268 = vadd.f32 0.0, %v2267
      %v2269 = vpop.f32.mrb[0].mxu0
      %2270 = vmatprep.mubr.bf16.mxu0 0
      %2271 = vmatmul.mubr.bf16.gmra.mrb[0].mxu0 %v1009
      %v2272 = vpop.f32.mrb[0].mxu0
      %v2273 = vadd.f32 0.0, %v2272
      %v2274 = vpop.f32.mrb[0].mxu0
      %v2275 = vpop.f32.mrb[0].mxu0
      %v2276 = vadd.f32 0.0, %v2275
      %v2277 = vpop.f32.mrb[0].mxu0
      %2278 = vmatprep.mubr.bf16.mxu0 0
      %2279 = vmatmul.mubr.bf16.gmra.mrb[0].mxu0 %v1010
      %v2280 = vpop.f32.mrb[0].mxu0
      %v2281 = vadd.f32 0.0, %v2280
      %v2282 = vpop.f32.mrb[0].mxu0
      %v2283 = vpop.f32.mrb[0].mxu0
      %v2284 = vadd.f32 0.0, %v2283
      %v2285 = vpop.f32.mrb[0].mxu0
      %2286 = vmatprep.mubr.bf16.mxu0 0
      %2287 = vmatmul.mubr.bf16.gmra.mrb[0].mxu0 %v1011
      %v2288 = vpop.f32.mrb[0].mxu0
      %v2289 = vadd.f32 0.0, %v2288
      %v2290 = vpop.f32.mrb[0].mxu0
      %v2291 = vpop.f32.mrb[0].mxu0
      %v2292 = vadd.f32 0.0, %v2291
      %v2293 = vpop.f32.mrb[0].mxu0
      %2294 = vmatprep.mubr.bf16.mxu0 0
      %2295 = vmatmul.mubr.bf16.gmra.mrb[0].mxu0 %v1012
      %v2296 = vpop.f32.mrb[0].mxu0
      %v2297 = vadd.f32 0.0, %v2296
      %v2298 = vpop.f32.mrb[0].mxu0
      %v2299 = vpop.f32.mrb[0].mxu0
      %v2300 = vadd.f32 0.0, %v2299
      %v2301 = vpop.f32.mrb[0].mxu0
      %2302 = vmatprep.mubr.bf16.mxu0 0
      %2303 = vmatmul.mubr.bf16.gmra.mrb[0].mxu0 %v1013
      %v2304 = vpop.f32.mrb[0].mxu0
      %v2305 = vadd.f32 0.0, %v2304
      %v2306 = vpop.f32.mrb[0].mxu0
      %v2307 = vpop.f32.mrb[0].mxu0
      %v2308 = vadd.f32 0.0, %v2307
      %v2309 = vpop.f32.mrb[0].mxu0
      %2310 = vmatprep.mubr.bf16.mxu0 0
      %2311 = vmatmul.mubr.bf16.gmra.mrb[0].mxu0 %v1600
      %v2312 = vpop.f32.mrb[0].mxu0
      %v2313 = vadd.f32 0.0, %v2312
      %v2314 = vpop.f32.mrb[0].mxu0
      %v2315 = vpop.f32.mrb[0].mxu0
      %v2316 = vadd.f32 0.0, %v2315
      %v2317 = vpop.f32.mrb[0].mxu0
      %2318 = vmatprep.mubr.bf16.mxu0 0
      %2319 = vmatmul.mubr.bf16.gmra.mrb[0].mxu0 %v2180
      %v2320 = vpop.f32.mrb[0].mxu0
      %v2321 = vadd.f32 0.0, %v2320
      %v2322 = vpop.f32.mrb[0].mxu0
      %v2323 = vpop.f32.mrb[0].mxu0
      %v2324 = vadd.f32 0.0, %v2323
      %v2325 = vpop.f32.mrb[0].mxu0
      %2326 = vdwg.mxu0
      %v2327 = vadd.f32 %v2137, %v2265
      %v2328 = vadd.f32 %v2138, %v2268
      %v2329 = vadd.f32 %v2139, %v2273
      %v2330 = vadd.f32 %v2140, %v2276
      %v2331 = vadd.f32 %v2141, %v2281
      %v2332 = vadd.f32 %v2142, %v2284
      %v2333 = vadd.f32 %v2143, %v2289
      %v2334 = vadd.f32 %v2144, %v2292
      %v2335 = vadd.f32 %v2145, %v2297
      %v2336 = vadd.f32 %v2146, %v2300
      %v2337 = vadd.f32 %v2147, %v2305
      %v2338 = vadd.f32 %v2148, %v2308
      %v2339 = vadd.f32 %v2149, %v2313
      %v2340 = vadd.f32 %v2150, %v2316
      %v2341 = vadd.f32 %v2151, %v2321
      %v2342 = vadd.f32 %v2152, %v2324
      %v2343 = vld [vmem:[%s2] sm:$0x1]
      %v2345 = vlaneseq
      %v2346 = vshrl.u32 %v2345, 7
      %v2347 = vsub.s32 0, %v2346
      %v2348 = vrot.slane %v2343, %v2347
      %v2350 = vadd.f32 %v2327, %v2348
      %v2351 = vadd.f32 %v2328, %v2348
      %v2352 = vadd.f32 %v2329, %v2348
      %v2353 = vadd.f32 %v2330, %v2348
      %v2354 = vadd.f32 %v2331, %v2348
      %v2355 = vadd.f32 %v2332, %v2348
      %v2356 = vadd.f32 %v2333, %v2348
      %v2357 = vadd.f32 %v2334, %v2348
      %v2358 = vadd.f32 %v2335, %v2348
      %v2359 = vadd.f32 %v2336, %v2348
      %v2360 = vadd.f32 %v2337, %v2348
      %v2361 = vadd.f32 %v2338, %v2348
      %v2362 = vadd.f32 %v2339, %v2348
      %v2363 = vadd.f32 %v2340, %v2348
      %v2364 = vadd.f32 %v2341, %v2348
      %v2365 = vadd.f32 %v2342, %v2348
      %2366 = vst [vmem:[%s259] sm:$0xff] %v2350
      %2367 = vst [vmem:[%s259 + $0x8] sm:$0xff] %v2351
      %2368 = vst [vmem:[%s259 + $0x10] sm:$0xff] %v2352
      %2369 = vst [vmem:[%s259 + $0x18] sm:$0xff] %v2353
      %2370 = vst [vmem:[%s259 + $0x20] sm:$0xff] %v2354
      %2371 = vst [vmem:[%s259 + $0x28] sm:$0xff] %v2355
      %2372 = vst [vmem:[%s259 + $0x30] sm:$0xff] %v2356
      %2373 = vst [vmem:[%s259 + $0x38] sm:$0xff] %v2357
      %2374 = vst [vmem:[%s259 + $0x40] sm:$0xff] %v2358
      %2375 = vst [vmem:[%s259 + $0x48] sm:$0xff] %v2359
      %2376 = vst [vmem:[%s259 + $0x50] sm:$0xff] %v2360
      %2377 = vst [vmem:[%s259 + $0x58] sm:$0xff] %v2361
      %2378 = vst [vmem:[%s259 + $0x60] sm:$0xff] %v2362
      %2379 = vst [vmem:[%s259 + $0x68] sm:$0xff] %v2363
      %2380 = vst [vmem:[%s259 + $0x70] sm:$0xff] %v2364
      %2381 = vst [vmem:[%s259 + $0x78] sm:$0xff] %v2365
      %v2382 = vld [vmem:[%s263] sm:$0x1]
      %v2383 = vadd.f32 %v2350, %v2351
      %v2384 = vadd.f32 %v2383, %v2352
      %v2385 = vadd.f32 %v2384, %v2353
      %v2386 = vadd.f32 %v2385, %v2354
      %v2387 = vadd.f32 %v2386, %v2355
      %v2388 = vadd.f32 %v2387, %v2356
      %v2389 = vadd.f32 %v2388, %v2357
      %v2390 = vadd.f32 %v2389, %v2358
      %v2391 = vadd.f32 %v2390, %v2359
      %v2392 = vadd.f32 %v2391, %v2360
      %v2393 = vadd.f32 %v2392, %v2361
      %v2394 = vadd.f32 %v2393, %v2362
      %v2395 = vadd.f32 %v2394, %v2363
      %v2396 = vadd.f32 %v2395, %v2364
      %v2397 = vadd.f32 %v2396, %v2365
      %v2398 = vrot.slane %v2397, 4
      %v2399 = vadd.f32 %v2397, %v2398
      %v2400 = vrot.slane %v2399, 2
      %v2401 = vadd.f32 %v2399, %v2400
      %v2402 = vrot.slane %v2401, 1
      %v2403 = vadd.f32 %v2401, %v2402
      %v2404 = vadd.f32 %v2382, %v2403
      %2405 = vst [vmem:[%s263] sm:$0x1] %v2404
      %v2406 = vld [vmem:[%s266] sm:$0x1]
      %v2407 = vmul.f32 %v2350, %v2350
      %v2408 = vmul.f32 %v2351, %v2351
      %v2409 = vmul.f32 %v2352, %v2352
      %v2410 = vmul.f32 %v2353, %v2353
      %v2411 = vmul.f32 %v2354, %v2354
      %v2412 = vmul.f32 %v2355, %v2355
      %v2413 = vmul.f32 %v2356, %v2356
      %v2414 = vmul.f32 %v2357, %v2357
      %v2415 = vmul.f32 %v2358, %v2358
      %v2416 = vmul.f32 %v2359, %v2359
      %v2417 = vmul.f32 %v2360, %v2360
      %v2418 = vmul.f32 %v2361, %v2361
      %v2419 = vmul.f32 %v2362, %v2362
      %v2420 = vmul.f32 %v2363, %v2363
      %v2421 = vmul.f32 %v2364, %v2364
      %v2422 = vmul.f32 %v2365, %v2365
      %v2423 = vadd.f32 %v2407, %v2408
      %v2424 = vadd.f32 %v2423, %v2409
      %v2425 = vadd.f32 %v2424, %v2410
      %v2426 = vadd.f32 %v2425, %v2411
      %v2427 = vadd.f32 %v2426, %v2412
      %v2428 = vadd.f32 %v2427, %v2413
      %v2429 = vadd.f32 %v2428, %v2414
      %v2430 = vadd.f32 %v2429, %v2415
      %v2431 = vadd.f32 %v2430, %v2416
      %v2432 = vadd.f32 %v2431, %v2417
      %v2433 = vadd.f32 %v2432, %v2418
      %v2434 = vadd.f32 %v2433, %v2419
      %v2435 = vadd.f32 %v2434, %v2420
      %v2436 = vadd.f32 %v2435, %v2421
      %v2437 = vadd.f32 %v2436, %v2422
      %v2438 = vrot.slane %v2437, 4
      %v2439 = vadd.f32 %v2437, %v2438
      %v2440 = vrot.slane %v2439, 2
      %v2441 = vadd.f32 %v2439, %v2440
      %v2442 = vrot.slane %v2441, 1
      %v2443 = vadd.f32 %v2441, %v2442
      %v2444 = vadd.f32 %v2406, %v2443
      %2445 = vst [vmem:[%s266] sm:$0x1] %v2444
      %s2446 = smul.u32 8, %s22
      %p2447 = scmp.lt.s32.totalorder %s21, 1
      %s2448 = scalar_select %p2447, %s21, 1
      %p2449 = scmp.lt.s32.totalorder %s2446, 15
      %s2450 = scalar_select %p2449, %s2446, 15
      %s2451 = smul.addr %s2450, 2
      %s2452 = smul.addr %s2448, 32
      %s2453 = sadd.s32 %s2451, %s2452
      %s2454 = smul.addr %s2453, 8
      %s2455 = scalar_lea.vmem %s3, %s2454
      %p2456 = scmp.lt.s32.totalorder %s21, 1
      %s2457 = scalar_select %p2456, %s21, 1
      %s2458 = scalar_lea.vmem %s4, %s2457
      %p2459 = scmp.lt.s32.totalorder %s21, 1
      %s2460 = scalar_select %p2459, %s21, 1
      %s2461 = scalar_lea.vmem %s5, %s2460
      // Predicated region
      $region37: #{conv_block_forward.3} parent=31 // pred_check
        %p2462 = pneg %p117
      $region38: #{conv_block_forward.3} parent=31 // pred_check_branch
        %2464 = sbr.rel (%p2462) target = $region40
      $region39: #{conv_block_forward.3} parent=31 // pred_region
        %s2465 = smul.u32 8, %s22
      $region40: #{conv_block_forward.3} parent=31 // pred_fallthru
        _
      // Predicated region
      $region41: #{conv_block_forward.3} parent=31 // pred_check
        %p2466 = pneg %p143
      $region42: #{conv_block_forward.3} parent=31 // pred_check_branch
        %2468 = sbr.rel (%p2466) target = $region44
      $region43: #{conv_block_forward.3} parent=31 // pred_region
        _
      $region44: #{conv_block_forward.3} parent=31 // pred_fallthru
        _
      // Predicated region
      $region45: #{conv_block_forward.3} parent=31 // pred_check
        %p2469 = pneg %p169
      $region46: #{conv_block_forward.3} parent=31 // pred_check_branch
        %2471 = sbr.rel (%p2469) target = $region48
      $region47: #{conv_block_forward.3} parent=31 // pred_region
        _
      $region48: #{conv_block_forward.3} parent=31 // pred_fallthru
        _
    $region32: #{conv_block_forward.3} parent=5 // pred_fallthru
      _
    %p2472 = scmp.le.s32.totalorder 2, %s12
    // Predicated region
    $region49: #{conv_block_forward.3} parent=5 // pred_check
      %p2473 = pneg %p2472
    $region50: #{conv_block_forward.3} parent=5 // pred_check_branch
      %2475 = sbr.rel (%p2473) target = $region52
    $region51: #{conv_block_forward.3} parent=5 // pred_region
      %s2476 = ssub.s32 %s12, 2
      // Predicated region
      $region53: #{conv_block_forward.3} parent=51 // pred_check
        %p2477 = pneg %p123
      $region54: #{conv_block_forward.3} parent=51 // pred_check_branch
        %2479 = sbr.rel (%p2477) target = $region56
      $region55: #{conv_block_forward.3} parent=51 // pred_region
        %s2480 = smul.u32 8, %s24
        %p2481 = scmp.lt.s32.totalorder %s23, 1
        %s2482 = scalar_select %p2481, %s23, 1
        %p2483 = scmp.lt.s32.totalorder %s2480, 15
        %s2484 = scalar_select %p2483, %s2480, 15
        %s2485 = smul.addr %s2484, 2
        %s2486 = smul.addr %s2482, 32
        %s2487 = sadd.s32 %s2485, %s2486
        %s2488 = smul.addr %s2487, 8
        %s2489 = scalar_lea.vmem %s3, %s2488
      $region56: #{conv_block_forward.3} parent=51 // pred_fallthru
        _
      // Predicated region
      $region57: #{conv_block_forward.3} parent=51 // pred_check
        %p2490 = pneg %p149
      $region58: #{conv_block_forward.3} parent=51 // pred_check_branch
        %2492 = sbr.rel (%p2490) target = $region60
      $region59: #{conv_block_forward.3} parent=51 // pred_region
        %p2493 = scmp.lt.s32.totalorder %s23, 1
        %s2494 = scalar_select %p2493, %s23, 1
        %s2495 = scalar_lea.vmem %s4, %s2494
      $region60: #{conv_block_forward.3} parent=51 // pred_fallthru
        _
      // Predicated region
      $region61: #{conv_block_forward.3} parent=51 // pred_check
        %p2496 = pneg %p175
      $region62: #{conv_block_forward.3} parent=51 // pred_check_branch
        %2498 = sbr.rel (%p2496) target = $region64
      $region63: #{conv_block_forward.3} parent=51 // pred_region
        %p2499 = scmp.lt.s32.totalorder %s23, 1
        %s2500 = scalar_select %p2499, %s23, 1
        %s2501 = scalar_lea.vmem %s5, %s2500
      $region64: #{conv_block_forward.3} parent=51 // pred_fallthru
        _
    $region52: #{conv_block_forward.3} parent=5 // pred_fallthru
      _
  $region6: #{conv_block_forward.3} parent=0 // loop_footer
    %s16 = sadd.s32 1, %s12
  $region7: #{conv_block_forward.3} parent=0 // loop_footer_branch
    %11 = sbr.rel target = $region3
  $region8: #{conv_block_forward.3} parent=0 // loop_exit
    _

// kernel: conv_block_forward.4
$region0: #{conv_block_forward.4}
  #allocation0 [shape = 'u32[]', space=smem, size = 0x4, offset = 0x4, fixed_abs, tag = 'smem constant byte address 0x4 - core index']
  #allocation1 [shape = 'u32[144,128]{1,0:T(1,128)}', space=vmem, size = 0x12000, scoped, tag = 'internal scratch']
  #allocation2 [shape = 'bf16[18,18,128]{2,1,0:T(8,128)(2,1)}', space=vmem, size = 0x1b000, scoped, tag = 'scratch operand']
  %s0 = inlined_call_operand.vmem [shape: f32[2,16,16,128], index: 0, kind: input, shape index: {}]
  %s1 = inlined_call_operand.vmem [shape: f32[1,128], index: 1, kind: input, shape index: {}]
  %s2 = inlined_call_operand.vmem [shape: f32[1,128], index: 2, kind: input, shape index: {}]
  %s3 = inlined_call_operand.vmem [shape: bf16[3,3,128,128], index: 3, kind: input, shape index: {}]
  %s4 = inlined_call_operand.vmem [shape: f32[1,128], index: 4, kind: input, shape index: {}]
  %s5 = inlined_call_operand.vmem [shape: f32[2,16,16,128], index: 5, kind: output, shape index: {0}]
  %s6 = inlined_call_operand.vmem [shape: f32[2,1,128], index: 6, kind: output, shape index: {1}]
  %s7 = inlined_call_operand.vmem [shape: f32[2,1,128], index: 7, kind: output, shape index: {2}]
  %8 = xla_tuple %s5, %s6, %s7
  %s9 = sld [smem:[#allocation0]]
  $region73: #{conv_block_forward.4} parent=0
    _
  %s11 = ssub.s32 1, %s9
  %s12 = scalar_select 0, %s11, %s9
  loop: start=0, step=1, limit=6
  $region2: #{conv_block_forward.4} parent=0 // loop_pre_header
    _
  $region3: #{conv_block_forward.4} parent=0 // loop_header
    %s14 = sphi 0, %s18
    %p15 = scmp.ge.s32.totalorder %s14, 6
    %s21 = sphi 0, %s33
    %s22 = sphi 0, %s29
    %s23 = sphi 0, %s21
    %s24 = sphi 0, %s22
    %s25 = sphi 0, %s23
    %s26 = sphi 0, %s24
    %s36 = sphi 0, %s38
    %s39 = sphi 0, %s36
    %s40 = sphi 0, %s39
    %s56 = sphi 0, %s40
    %s60 = sphi 0, %s60
    %s62 = sphi 0, %s60
    %s63 = sphi 0, %s62
    %s77 = sphi 0, %s63
    %s81 = sphi 0, %s81
    %s83 = sphi 0, %s81
    %s84 = sphi 0, %s83
    %s98 = sphi 0, %s84
    %s102 = sphi 0, %s102
    %s104 = sphi 0, %s102
    %s105 = sphi 0, %s104
    %s119 = sphi 0, %s105
    %s123 = sphi 0, %s123
    %s125 = sphi 0, %s123
    %s126 = sphi 0, %s125
    %s140 = sphi 0, %s126
    %s148 = sphi 0, %s150
    %s151 = sphi 0, %s148
    %s152 = sphi 0, %s151
    %s168 = sphi 0, %s152
    %s174 = sphi 0, %s176
    %s177 = sphi 0, %s174
    %s178 = sphi 0, %s177
    %s194 = sphi 0, %s178
    %s200 = sphi 0, %s202
    %s203 = sphi 0, %s200
    %s204 = sphi 0, %s203
    %s220 = sphi 0, %s204
  $region4: #{conv_block_forward.4} parent=0 // loop_header_branch
    %17 = sbr.rel (%p15) target = $region8
  $region5: #{conv_block_forward.4} parent=0 // loop_body
    %s19 = ssub.s32 %s14, 1
    %s20 = ssub.s32 %s14, 2
    %s27 = sadd.s32 1, %s22
    %p28 = scmp.ge.s32.totalorder %s27, 2
    %s29 = scalar_select %p28, 0, %s27
    %s30 = sadd.s32 1, %s21
    %s31 = scalar_select %p28, %s30, %s21
    %p32 = scmp.ge.s32.totalorder %s31, 2
    %s33 = scalar_select %p32, 0, %s31
    %s34 = ssub.s32 %s21, %s33
    %p35 = scmp.eq.s32.totalorder %s34, 0
    %s37 = sadd.s32 %s36, 1
    %s38 = scalar_select %p35, %s36, %s37
    %p41 = pneg %p35
    %p42 = scmp.eq.s32.totalorder %s14, 3
    %p43 = por %p41, %p42
    %p44 = scmp.ne.s32.totalorder %s36, %s39
    %p45 = scmp.eq.s32.totalorder %s14, 0
    %p46 = por %p44, %p45
    %p47 = scmp.ne.s32.totalorder %s36, %s39
    %p48 = scmp.eq.s32.totalorder %s19, 3
    %p49 = por %p47, %p48
    %p50 = scmp.ne.s32.totalorder %s39, %s40
    %p51 = scmp.eq.s32.totalorder %s19, 0
    %p52 = por %p50, %p51
    %p53 = scmp.ne.s32.totalorder %s39, %s40
    %p54 = scmp.eq.s32.totalorder %s20, 3
    %p55 = por %p53, %p54
    %p57 = scmp.ne.s32.totalorder %s40, %s56
    %p58 = scmp.eq.s32.totalorder %s20, 0
    %p59 = por %p57, %p58
    %s61 = sadd.s32 %s60, 1
    %p64 = scmp.eq.s32.totalorder %s14, 3
    %p65 = scmp.ne.s32.totalorder %s60, %s62
    %p66 = scmp.eq.s32.totalorder %s14, 0
    %p67 = por %p65, %p66
    %p68 = scmp.ne.s32.totalorder %s60, %s62
    %p69 = scmp.eq.s32.totalorder %s19, 3
    %p70 = por %p68, %p69
    %p71 = scmp.ne.s32.totalorder %s62, %s63
    %p72 = scmp.eq.s32.totalorder %s19, 0
    %p73 = por %p71, %p72
    %p74 = scmp.ne.s32.totalorder %s62, %s63
    %p75 = scmp.eq.s32.totalorder %s20, 3
    %p76 = por %p74, %p75
    %p78 = scmp.ne.s32.totalorder %s63, %s77
    %p79 = scmp.eq.s32.totalorder %s20, 0
    %p80 = por %p78, %p79
    %s82 = sadd.s32 %s81, 1
    %p85 = scmp.eq.s32.totalorder %s14, 3
    %p86 = scmp.ne.s32.totalorder %s81, %s83
    %p87 = scmp.eq.s32.totalorder %s14, 0
    %p88 = por %p86, %p87
    %p89 = scmp.ne.s32.totalorder %s81, %s83
    %p90 = scmp.eq.s32.totalorder %s19, 3
    %p91 = por %p89, %p90
    %p92 = scmp.ne.s32.totalorder %s83, %s84
    %p93 = scmp.eq.s32.totalorder %s19, 0
    %p94 = por %p92, %p93
    %p95 = scmp.ne.s32.totalorder %s83, %s84
    %p96 = scmp.eq.s32.totalorder %s20, 3
    %p97 = por %p95, %p96
    %p99 = scmp.ne.s32.totalorder %s84, %s98
    %p100 = scmp.eq.s32.totalorder %s20, 0
    %p101 = por %p99, %p100
    %s103 = sadd.s32 %s102, 1
    %p106 = scmp.eq.s32.totalorder %s14, 3
    %p107 = scmp.ne.s32.totalorder %s102, %s104
    %p108 = scmp.eq.s32.totalorder %s14, 0
    %p109 = por %p107, %p108
    %p110 = scmp.ne.s32.totalorder %s102, %s104
    %p111 = scmp.eq.s32.totalorder %s19, 3
    %p112 = por %p110, %p111
    %p113 = scmp.ne.s32.totalorder %s104, %s105
    %p114 = scmp.eq.s32.totalorder %s19, 0
    %p115 = por %p113, %p114
    %p116 = scmp.ne.s32.totalorder %s104, %s105
    %p117 = scmp.eq.s32.totalorder %s20, 3
    %p118 = por %p116, %p117
    %p120 = scmp.ne.s32.totalorder %s105, %s119
    %p121 = scmp.eq.s32.totalorder %s20, 0
    %p122 = por %p120, %p121
    %s124 = sadd.s32 %s123, 1
    %p127 = scmp.eq.s32.totalorder %s14, 3
    %p128 = scmp.ne.s32.totalorder %s123, %s125
    %p129 = scmp.eq.s32.totalorder %s14, 0
    %p130 = por %p128, %p129
    %p131 = scmp.ne.s32.totalorder %s123, %s125
    %p132 = scmp.eq.s32.totalorder %s19, 3
    %p133 = por %p131, %p132
    %p134 = scmp.ne.s32.totalorder %s125, %s126
    %p135 = scmp.eq.s32.totalorder %s19, 0
    %p136 = por %p134, %p135
    %p137 = scmp.ne.s32.totalorder %s125, %s126
    %p138 = scmp.eq.s32.totalorder %s20, 3
    %p139 = por %p137, %p138
    %p141 = scmp.ne.s32.totalorder %s126, %s140
    %p142 = scmp.eq.s32.totalorder %s20, 0
    %p143 = por %p141, %p142
    %s144 = ssub.s32 %s21, %s33
    %s145 = ssub.s32 %s22, %s29
    %s146 = sor.u32 %s144, %s145
    %p147 = scmp.eq.s32.totalorder %s146, 0
    %s149 = sadd.s32 %s148, 1
    %s150 = scalar_select %p147, %s148, %s149
    %p153 = pneg %p147
    %p154 = scmp.eq.s32.totalorder %s14, 3
    %p155 = por %p153, %p154
    %p156 = scmp.ne.s32.totalorder %s148, %s151
    %p157 = scmp.eq.s32.totalorder %s14, 0
    %p158 = por %p156, %p157
    %p159 = scmp.ne.s32.totalorder %s148, %s151
    %p160 = scmp.eq.s32.totalorder %s19, 3
    %p161 = por %p159, %p160
    %p162 = scmp.ne.s32.totalorder %s151, %s152
    %p163 = scmp.eq.s32.totalorder %s19, 0
    %p164 = por %p162, %p163
    %p165 = scmp.ne.s32.totalorder %s151, %s152
    %p166 = scmp.eq.s32.totalorder %s20, 3
    %p167 = por %p165, %p166
    %p169 = scmp.ne.s32.totalorder %s152, %s168
    %p170 = scmp.eq.s32.totalorder %s20, 0
    %p171 = por %p169, %p170
    %s172 = ssub.s32 %s21, %s33
    %p173 = scmp.eq.s32.totalorder %s172, 0
    %s175 = sadd.s32 %s174, 1
    %s176 = scalar_select %p173, %s174, %s175
    %p179 = pneg %p173
    %p180 = scmp.eq.s32.totalorder %s14, 3
    %p181 = por %p179, %p180
    %p182 = scmp.ne.s32.totalorder %s174, %s177
    %p183 = scmp.eq.s32.totalorder %s14, 0
    %p184 = por %p182, %p183
    %p185 = scmp.ne.s32.totalorder %s174, %s177
    %p186 = scmp.eq.s32.totalorder %s19, 3
    %p187 = por %p185, %p186
    %p188 = scmp.ne.s32.totalorder %s177, %s178
    %p189 = scmp.eq.s32.totalorder %s19, 0
    %p190 = por %p188, %p189
    %p191 = scmp.ne.s32.totalorder %s177, %s178
    %p192 = scmp.eq.s32.totalorder %s20, 3
    %p193 = por %p191, %p192
    %p195 = scmp.ne.s32.totalorder %s178, %s194
    %p196 = scmp.eq.s32.totalorder %s20, 0
    %p197 = por %p195, %p196
    %s198 = ssub.s32 %s21, %s33
    %p199 = scmp.eq.s32.totalorder %s198, 0
    %s201 = sadd.s32 %s200, 1
    %s202 = scalar_select %p199, %s200, %s201
    %p205 = pneg %p199
    %p206 = scmp.eq.s32.totalorder %s14, 3
    %p207 = por %p205, %p206
    %p208 = scmp.ne.s32.totalorder %s200, %s203
    %p209 = scmp.eq.s32.totalorder %s14, 0
    %p210 = por %p208, %p209
    %p211 = scmp.ne.s32.totalorder %s200, %s203
    %p212 = scmp.eq.s32.totalorder %s19, 3
    %p213 = por %p211, %p212
    %p214 = scmp.ne.s32.totalorder %s203, %s204
    %p215 = scmp.eq.s32.totalorder %s19, 0
    %p216 = por %p214, %p215
    %p217 = scmp.ne.s32.totalorder %s203, %s204
    %p218 = scmp.eq.s32.totalorder %s20, 3
    %p219 = por %p217, %p218
    %p221 = scmp.ne.s32.totalorder %s204, %s220
    %p222 = scmp.eq.s32.totalorder %s20, 0
    %p223 = por %p221, %p222
    %p224 = scmp.le.s32.totalorder 1, %s14
    %p225 = scmp.lt.s32.totalorder %s14, 5
    %p226 = pnand %p224, %p225
    %p227 = pneg %p226
    // Predicated region
    $region9: #{conv_block_forward.4} parent=5 // pred_check
      _
    $region10: #{conv_block_forward.4} parent=5 // pred_check_branch
      %229 = sbr.rel (%p226) target = $region12
    $region11: #{conv_block_forward.4} parent=5 // pred_region
      %s230 = ssub.s32 %s14, 1
      // Predicated region
      $region13: #{conv_block_forward.4} parent=11 // pred_check
        %p231 = pneg %p73
      $region14: #{conv_block_forward.4} parent=11 // pred_check_branch
        %233 = sbr.rel (%p231) target = $region16
      $region15: #{conv_block_forward.4} parent=11 // pred_region
        _
      $region16: #{conv_block_forward.4} parent=11 // pred_fallthru
        _
      // Predicated region
      $region17: #{conv_block_forward.4} parent=11 // pred_check
        %p234 = pneg %p94
      $region18: #{conv_block_forward.4} parent=11 // pred_check_branch
        %236 = sbr.rel (%p234) target = $region20
      $region19: #{conv_block_forward.4} parent=11 // pred_region
        _
      $region20: #{conv_block_forward.4} parent=11 // pred_fallthru
        _
      // Predicated region
      $region21: #{conv_block_forward.4} parent=11 // pred_check
        %p237 = pneg %p115
      $region22: #{conv_block_forward.4} parent=11 // pred_check_branch
        %239 = sbr.rel (%p237) target = $region24
      $region23: #{conv_block_forward.4} parent=11 // pred_region
        _
      $region24: #{conv_block_forward.4} parent=11 // pred_fallthru
        _
      // Predicated region
      $region25: #{conv_block_forward.4} parent=11 // pred_check
        %p240 = pneg %p136
      $region26: #{conv_block_forward.4} parent=11 // pred_check_branch
        %242 = sbr.rel (%p240) target = $region28
      $region27: #{conv_block_forward.4} parent=11 // pred_region
        _
      $region28: #{conv_block_forward.4} parent=11 // pred_fallthru
        _
    $region12: #{conv_block_forward.4} parent=5 // pred_fallthru
      _
    %p243 = scmp.lt.s32.totalorder %s14, 4
    // Predicated region
    $region29: #{conv_block_forward.4} parent=5 // pred_check
      %p244 = pneg %p243
    $region30: #{conv_block_forward.4} parent=5 // pred_check_branch
      %246 = sbr.rel (%p244) target = $region32
    $region31: #{conv_block_forward.4} parent=5 // pred_region
      // Predicated region
      $region33: #{conv_block_forward.4} parent=31 // pred_check
        %p247 = pneg %p46
      $region34: #{conv_block_forward.4} parent=31 // pred_check_branch
        %249 = sbr.rel (%p247) target = $region36
      $region35: #{conv_block_forward.4} parent=31 // pred_region
        %p250 = scmp.lt.s32.totalorder %s21, 1
        %s251 = scalar_select %p250, %s21, 1
        %s252 = smul.addr %s251, 32
        %s253 = smul.addr %s252, 8
        %s254 = scalar_lea.vmem %s0, %s253
      $region36: #{conv_block_forward.4} parent=31 // pred_fallthru
        _
    $region32: #{conv_block_forward.4} parent=5 // pred_fallthru
      _
    %p255 = scmp.le.s32.totalorder 1, %s14
    %p256 = scmp.lt.s32.totalorder %s14, 5
    %p257 = pnand %p255, %p256
    %p258 = pneg %p257
    // Predicated region
    $region37: #{conv_block_forward.4} parent=5 // pred_check
      _
    $region38: #{conv_block_forward.4} parent=5 // pred_check_branch
      %260 = sbr.rel (%p257) target = $region40
    $region39: #{conv_block_forward.4} parent=5 // pred_region
      %s261 = ssub.s32 %s14, 1
      %p262 = scmp.lt.s32.totalorder %s23, 1
      %s263 = scalar_select %p262, %s23, 1
      %s264 = smul.addr %s263, 32
      %s265 = smul.addr %s264, 8
      %s266 = scalar_lea.vmem %s0, %s265
      %p267 = pneg %p52
      %p268 = pneg %p49
      %p269 = pneg %p73
      %p270 = pneg %p70
      %p271 = pneg %p94
      %p272 = pneg %p91
      %p273 = pneg %p115
      %p274 = pneg %p112
      %p275 = pneg %p136
      %p276 = pneg %p133
      %p277 = pneg %p164
      %p278 = pneg %p161
      %s279 = smul.u32 8, %s24
      %p280 = scmp.lt.s32.totalorder %s23, 1
      %s281 = scalar_select %p280, %s23, 1
      %p282 = scmp.lt.s32.totalorder %s279, 15
      %s283 = scalar_select %p282, %s279, 15
      %s284 = smul.addr %s283, 2
      %s285 = smul.addr %s281, 32
      %s286 = sadd.s32 %s284, %s285
      %s287 = smul.addr %s286, 8
      %s288 = scalar_lea.vmem %s5, %s287
      %p289 = pneg %p190
      %p290 = pneg %p187
      %p291 = scmp.lt.s32.totalorder %s23, 1
      %s292 = scalar_select %p291, %s23, 1
      %s293 = scalar_lea.vmem %s6, %s292
      %p294 = pneg %p216
      %p295 = pneg %p213
      %p296 = scmp.lt.s32.totalorder %s23, 1
      %s297 = scalar_select %p296, %s23, 1
      %s298 = scalar_lea.vmem %s7, %s297
      %p299 = scmp.lt.s32.totalorder %s23, 1
      %s300 = scalar_select %p299, %s23, 1
      %s301 = smul.addr %s300, 32
      %s302 = smul.addr %s301, 8
      %s303 = scalar_lea.vmem %s0, %s302
      %s304 = smul.u32 8, %s24
      %p305 = scmp.lt.s32.totalorder %s23, 1
      %s306 = scalar_select %p305, %s23, 1
      %p307 = scmp.lt.s32.totalorder %s304, 15
      %s308 = scalar_select %p307, %s304, 15
      %s309 = smul.addr %s308, 2
      %s310 = smul.addr %s306, 32
      %s311 = sadd.s32 %s309, %s310
      %s312 = smul.addr %s311, 8
      %s313 = scalar_lea.vmem %s5, %s312
      %s314 = smul.u32 8, %s24
      %p315 = scmp.lt.s32.totalorder %s23, 1
      %s316 = scalar_select %p315, %s23, 1
      %s317 = scalar_lea.vmem %s6, %s316
      %p318 = scmp.lt.s32.totalorder %s23, 1
      %s319 = scalar_select %p318, %s23, 1
      %s320 = scalar_lea.vmem %s7, %s319
      %p322 = scmp.eq.s32.totalorder %s24, 0
      // Predicated region
      $region41: #{conv_block_forward.4} parent=39 // pred_check
        %p323 = pneg %p322
      $region42: #{conv_block_forward.4} parent=39 // pred_check_branch
        %325 = sbr.rel (%p323) target = $region44
      $region43: #{conv_block_forward.4} parent=39 // pred_region
        %326 = vst [vmem:[#allocation2] sm:$0xf] 0
        %327 = vst [vmem:[#allocation2 + $0x4] sm:$0xf] 0
        %328 = vst [vmem:[#allocation2 + $0x8] sm:$0x1] 0
        %329 = vst [vmem:[#allocation2 + $0xc] sm:$0xf] 0
        %330 = vst [vmem:[#allocation2 + $0x10] sm:$0xf] 0
        %331 = vst [vmem:[#allocation2 + $0x14] sm:$0x1] 0
        %332 = vst [vmem:[#allocation2 + $0x18] sm:$0xf] 0
        %333 = vst [vmem:[#allocation2 + $0x1c] sm:$0xf] 0
        %334 = vst [vmem:[#allocation2 + $0x20] sm:$0x1] 0
        %335 = vst [vmem:[#allocation2 + $0x24] sm:$0xf] 0
        %336 = vst [vmem:[#allocation2 + $0x28] sm:$0xf] 0
        %337 = vst [vmem:[#allocation2 + $0x2c] sm:$0x1] 0
        %338 = vst [vmem:[#allocation2 + $0x30] sm:$0xf] 0
        %339 = vst [vmem:[#allocation2 + $0x34] sm:$0xf] 0
        %340 = vst [vmem:[#allocation2 + $0x38] sm:$0x1] 0
        %341 = vst [vmem:[#allocation2 + $0x3c] sm:$0xf] 0
        %342 = vst [vmem:[#allocation2 + $0x40] sm:$0xf] 0
        %343 = vst [vmem:[#allocation2 + $0x44] sm:$0x1] 0
        %344 = vst [vmem:[#allocation2 + $0x48] sm:$0xf] 0
        %345 = vst [vmem:[#allocation2 + $0x4c] sm:$0xf] 0
        %346 = vst [vmem:[#allocation2 + $0x50] sm:$0x1] 0
        %347 = vst [vmem:[#allocation2 + $0x54] sm:$0xf] 0
        %348 = vst [vmem:[#allocation2 + $0x58] sm:$0xf] 0
        %349 = vst [vmem:[#allocation2 + $0x5c] sm:$0x1] 0
        %350 = vst [vmem:[#allocation2 + $0x60] sm:$0xf] 0
        %351 = vst [vmem:[#allocation2 + $0x64] sm:$0xf] 0
        %352 = vst [vmem:[#allocation2 + $0x68] sm:$0x1] 0
        %353 = vst [vmem:[#allocation2 + $0x6c] sm:$0xf] 0
        %354 = vst [vmem:[#allocation2 + $0x70] sm:$0xf] 0
        %355 = vst [vmem:[#allocation2 + $0x74] sm:$0x1] 0
        %356 = vst [vmem:[#allocation2 + $0x78] sm:$0xf] 0
        %357 = vst [vmem:[#allocation2 + $0x7c] sm:$0xf] 0
        %358 = vst [vmem:[#allocation2 + $0x80] sm:$0x1] 0
        %359 = vst [vmem:[#allocation2 + $0x84] sm:$0xf] 0
        %360 = vst [vmem:[#allocation2 + $0x88] sm:$0xf] 0
        %361 = vst [vmem:[#allocation2 + $0x8c] sm:$0x1] 0
        %362 = vst [vmem:[#allocation2 + $0x90] sm:$0xf] 0
        %363 = vst [vmem:[#allocation2 + $0x94] sm:$0xf] 0
        %364 = vst [vmem:[#allocation2 + $0x98] sm:$0x1] 0
        %365 = vst [vmem:[#allocation2 + $0x9c] sm:$0xf] 0
        %366 = vst [vmem:[#allocation2 + $0xa0] sm:$0xf] 0
        %367 = vst [vmem:[#allocation2 + $0xa4] sm:$0x1] 0
        %368 = vst [vmem:[#allocation2 + $0xa8] sm:$0xf] 0
        %369 = vst [vmem:[#allocation2 + $0xac] sm:$0xf] 0
        %370 = vst [vmem:[#allocation2 + $0xb0] sm:$0x1] 0
        %371 = vst [vmem:[#allocation2 + $0xb4] sm:$0xf] 0
        %372 = vst [vmem:[#allocation2 + $0xb8] sm:$0xf] 0
        %373 = vst [vmem:[#allocation2 + $0xbc] sm:$0x1] 0
        %374 = vst [vmem:[#allocation2 + $0xc0] sm:$0xf] 0
        %375 = vst [vmem:[#allocation2 + $0xc4] sm:$0xf] 0
        %376 = vst [vmem:[#allocation2 + $0xc8] sm:$0x1] 0
        %377 = vst [vmem:[#allocation2 + $0xcc] sm:$0xf] 0
        %378 = vst [vmem:[#allocation2 + $0xd0] sm:$0xf] 0
        %379 = vst [vmem:[#allocation2 + $0xd4] sm:$0x1] 0
        %v380 = vld [vmem:[%s303] sm:$0xff]
        %v381 = vld [vmem:[%s303 + $0x8] sm:$0xff]
        %v382 = vld [vmem:[%s303 + $0x10] sm:$0xff]
        %v383 = vld [vmem:[%s303 + $0x18] sm:$0xff]
        %v384 = vld [vmem:[%s303 + $0x20] sm:$0xff]
        %v385 = vld [vmem:[%s303 + $0x28] sm:$0xff]
        %v386 = vld [vmem:[%s303 + $0x30] sm:$0xff]
        %v387 = vld [vmem:[%s303 + $0x38] sm:$0xff]
        %v388 = vld [vmem:[%s303 + $0x40] sm:$0xff]
        %v389 = vld [vmem:[%s303 + $0x48] sm:$0xff]
        %v390 = vld [vmem:[%s303 + $0x50] sm:$0xff]
        %v391 = vld [vmem:[%s303 + $0x58] sm:$0xff]
        %v392 = vld [vmem:[%s303 + $0x60] sm:$0xff]
        %v393 = vld [vmem:[%s303 + $0x68] sm:$0xff]
        %v394 = vld [vmem:[%s303 + $0x70] sm:$0xff]
        %v395 = vld [vmem:[%s303 + $0x78] sm:$0xff]
        %v396 = vld [vmem:[%s303 + $0x80] sm:$0xff]
        %v397 = vld [vmem:[%s303 + $0x88] sm:$0xff]
        %v398 = vld [vmem:[%s303 + $0x90] sm:$0xff]
        %v399 = vld [vmem:[%s303 + $0x98] sm:$0xff]
        %v400 = vld [vmem:[%s303 + $0xa0] sm:$0xff]
        %v401 = vld [vmem:[%s303 + $0xa8] sm:$0xff]
        %v402 = vld [vmem:[%s303 + $0xb0] sm:$0xff]
        %v403 = vld [vmem:[%s303 + $0xb8] sm:$0xff]
        %v404 = vld [vmem:[%s303 + $0xc0] sm:$0xff]
        %v405 = vld [vmem:[%s303 + $0xc8] sm:$0xff]
        %v406 = vld [vmem:[%s303 + $0xd0] sm:$0xff]
        %v407 = vld [vmem:[%s303 + $0xd8] sm:$0xff]
        %v408 = vld [vmem:[%s303 + $0xe0] sm:$0xff]
        %v409 = vld [vmem:[%s303 + $0xe8] sm:$0xff]
        %v410 = vld [vmem:[%s303 + $0xf0] sm:$0xff]
        %v411 = vld [vmem:[%s303 + $0xf8] sm:$0xff]
        %v412 = vld [vmem:[%s1] sm:$0x1]
        %v414 = vlaneseq
        %v415 = vshrl.u32 %v414, 7
        %v416 = vsub.s32 0, %v415
        %v417 = vrot.slane %v412, %v416
        %v419 = vmul.f32 %v380, %v417
        %v420 = vmul.f32 %v381, %v417
        %v421 = vmul.f32 %v382, %v417
        %v422 = vmul.f32 %v383, %v417
        %v423 = vmul.f32 %v384, %v417
        %v424 = vmul.f32 %v385, %v417
        %v425 = vmul.f32 %v386, %v417
        %v426 = vmul.f32 %v387, %v417
        %v427 = vmul.f32 %v388, %v417
        %v428 = vmul.f32 %v389, %v417
        %v429 = vmul.f32 %v390, %v417
        %v430 = vmul.f32 %v391, %v417
        %v431 = vmul.f32 %v392, %v417
        %v432 = vmul.f32 %v393, %v417
        %v433 = vmul.f32 %v394, %v417
        %v434 = vmul.f32 %v395, %v417
        %v435 = vmul.f32 %v396, %v417
        %v436 = vmul.f32 %v397, %v417
        %v437 = vmul.f32 %v398, %v417
        %v438 = vmul.f32 %v399, %v417
        %v439 = vmul.f32 %v400, %v417
        %v440 = vmul.f32 %v401, %v417
        %v441 = vmul.f32 %v402, %v417
        %v442 = vmul.f32 %v403, %v417
        %v443 = vmul.f32 %v404, %v417
        %v444 = vmul.f32 %v405, %v417
        %v445 = vmul.f32 %v406, %v417
        %v446 = vmul.f32 %v407, %v417
        %v447 = vmul.f32 %v408, %v417
        %v448 = vmul.f32 %v409, %v417
        %v449 = vmul.f32 %v410, %v417
        %v450 = vmul.f32 %v411, %v417
        %v451 = vld [vmem:[%s2] sm:$0x1]
        %v453 = vlaneseq
        %v454 = vshrl.u32 %v453, 7
        %v455 = vsub.s32 0, %v454
        %v456 = vrot.slane %v451, %v455
        %v458 = vadd.f32 %v419, %v456
        %v459 = vadd.f32 %v420, %v456
        %v460 = vadd.f32 %v421, %v456
        %v461 = vadd.f32 %v422, %v456
        %v462 = vadd.f32 %v423, %v456
        %v463 = vadd.f32 %v424, %v456
        %v464 = vadd.f32 %v425, %v456
        %v465 = vadd.f32 %v426, %v456
        %v466 = vadd.f32 %v427, %v456
        %v467 = vadd.f32 %v428, %v456
        %v468 = vadd.f32 %v429, %v456
        %v469 = vadd.f32 %v430, %v456
        %v470 = vadd.f32 %v431, %v456
        %v471 = vadd.f32 %v432, %v456
        %v472 = vadd.f32 %v433, %v456
        %v473 = vadd.f32 %v434, %v456
        %v474 = vadd.f32 %v435, %v456
        %v475 = vadd.f32 %v436, %v456
        %v476 = vadd.f32 %v437, %v456
        %v477 = vadd.f32 %v438, %v456
        %v478 = vadd.f32 %v439, %v456
        %v479 = vadd.f32 %v440, %v456
        %v480 = vadd.f32 %v441, %v456
        %v481 = vadd.f32 %v442, %v456
        %v482 = vadd.f32 %v443, %v456
        %v483 = vadd.f32 %v444, %v456
        %v484 = vadd.f32 %v445, %v456
        %v485 = vadd.f32 %v446, %v456
        %v486 = vadd.f32 %v447, %v456
        %v487 = vadd.f32 %v448, %v456
        %v488 = vadd.f32 %v449, %v456
        %v489 = vadd.f32 %v450, %v456
        %v490 = vmax.f32 %v458, 0.0
        %v491 = vmax.f32 %v459, 0.0
        %v492 = vmax.f32 %v460, 0.0
        %v493 = vmax.f32 %v461, 0.0
        %v494 = vmax.f32 %v462, 0.0
        %v495 = vmax.f32 %v463, 0.0
        %v496 = vmax.f32 %v464, 0.0
        %v497 = vmax.f32 %v465, 0.0
        %v498 = vmax.f32 %v466, 0.0
        %v499 = vmax.f32 %v467, 0.0
        %v500 = vmax.f32 %v468, 0.0
        %v501 = vmax.f32 %v469, 0.0
        %v502 = vmax.f32 %v470, 0.0
        %v503 = vmax.f32 %v471, 0.0
        %v504 = vmax.f32 %v472, 0.0
        %v505 = vmax.f32 %v473, 0.0
        %v506 = vmax.f32 %v474, 0.0
        %v507 = vmax.f32 %v475, 0.0
        %v508 = vmax.f32 %v476, 0.0
        %v509 = vmax.f32 %v477, 0.0
        %v510 = vmax.f32 %v478, 0.0
        %v511 = vmax.f32 %v479, 0.0
        %v512 = vmax.f32 %v480, 0.0
        %v513 = vmax.f32 %v481, 0.0
        %v514 = vmax.f32 %v482, 0.0
        %v515 = vmax.f32 %v483, 0.0
        %v516 = vmax.f32 %v484, 0.0
        %v517 = vmax.f32 %v485, 0.0
        %v518 = vmax.f32 %v486, 0.0
        %v519 = vmax.f32 %v487, 0.0
        %v520 = vmax.f32 %v488, 0.0
        %v521 = vmax.f32 %v489, 0.0
        %v522 = vpack.c.bf16 %v491, %v490
        %v523 = vpack.c.bf16 %v493, %v492
        %v524 = vpack.c.bf16 %v495, %v494
        %v525 = vpack.c.bf16 %v497, %v496
        %v526 = vpack.c.bf16 %v499, %v498
        %v527 = vpack.c.bf16 %v501, %v500
        %v528 = vpack.c.bf16 %v503, %v502
        %v529 = vpack.c.bf16 %v505, %v504
        %v530 = vpack.c.bf16 %v507, %v506
        %v531 = vpack.c.bf16 %v509, %v508
        %v532 = vpack.c.bf16 %v511, %v510
        %v533 = vpack.c.bf16 %v513, %v512
        %v534 = vpack.c.bf16 %v515, %v514
        %v535 = vpack.c.bf16 %v517, %v516
        %v536 = vpack.c.bf16 %v519, %v518
        %v537 = vpack.c.bf16 %v521, %v520
        %v554 = vunpack.c.l.b16 %v522
        %v555 = vunpack.c.h.b16 %v522
        %v556 = vunpack.c.l.b16 %v523
        %v557 = vunpack.c.h.b16 %v523
        %v558 = vunpack.c.l.b16 %v524
        %v559 = vunpack.c.h.b16 %v524
        %v560 = vunpack.c.l.b16 %v525
        %v561 = vunpack.c.h.b16 %v525
        %v562 = vunpack.c.l.b16 %v526
        %v563 = vunpack.c.h.b16 %v526
        %v564 = vunpack.c.l.b16 %v527
        %v565 = vunpack.c.h.b16 %v527
        %v566 = vunpack.c.l.b16 %v528
        %v567 = vunpack.c.h.b16 %v528
        %v568 = vunpack.c.l.b16 %v529
        %v569 = vunpack.c.h.b16 %v529
        %v570 = vunpack.c.l.b16 %v530
        %v571 = vunpack.c.h.b16 %v530
        %v572 = vunpack.c.l.b16 %v531
        %v573 = vunpack.c.h.b16 %v531
        %v574 = vunpack.c.l.b16 %v532
        %v575 = vunpack.c.h.b16 %v532
        %v576 = vunpack.c.l.b16 %v533
        %v577 = vunpack.c.h.b16 %v533
        %v578 = vunpack.c.l.b16 %v534
        %v579 = vunpack.c.h.b16 %v534
        %v580 = vunpack.c.l.b16 %v535
        %v581 = vunpack.c.h.b16 %v535
        %v582 = vunpack.c.l.b16 %v536
        %v583 = vunpack.c.h.b16 %v536
        %v584 = vunpack.c.l.b16 %v537
        %v585 = vunpack.c.h.b16 %v537
        %v586 = vpack.c.b16 %v554, %v554
        %v587 = vpack.c.b16 %v555, %v555
        %v588 = vpack.c.b16 %v556, %v556
        %v589 = vpack.c.b16 %v557, %v557
        %v590 = vpack.c.b16 %v558, %v558
        %v591 = vpack.c.b16 %v559, %v559
        %v592 = vpack.c.b16 %v560, %v560
        %v593 = vpack.c.b16 %v561, %v561
        %v594 = vpack.c.b16 %v562, %v562
        %v595 = vpack.c.b16 %v563, %v563
        %v596 = vpack.c.b16 %v564, %v564
        %v597 = vpack.c.b16 %v565, %v565
        %v598 = vpack.c.b16 %v566, %v566
        %v599 = vpack.c.b16 %v567, %v567
        %v600 = vpack.c.b16 %v568, %v568
        %v601 = vpack.c.b16 %v569, %v569
        %v602 = vpack.c.b16 %v570, %v570
        %v603 = vpack.c.b16 %v571, %v571
        %v604 = vpack.c.b16 %v572, %v572
        %v605 = vpack.c.b16 %v573, %v573
        %v606 = vpack.c.b16 %v574, %v574
        %v607 = vpack.c.b16 %v575, %v575
        %v608 = vpack.c.b16 %v576, %v576
        %v609 = vpack.c.b16 %v577, %v577
        %v610 = vpack.c.b16 %v578, %v578
        %v611 = vpack.c.b16 %v579, %v579
        %v612 = vpack.c.b16 %v580, %v580
        %v613 = vpack.c.b16 %v581, %v581
        %v614 = vpack.c.b16 %v582, %v582
        %v615 = vpack.c.b16 %v583, %v583
        %v616 = vpack.c.b16 %v584, %v584
        %v617 = vpack.c.b16 %v585, %v585
        %vm618 = vsmask.f32 256
        %vm619 = vsmask.f32 4368
        %vm620 = vmor %vm618, %vm619
        %v622 = vshrl.u32 %v586, 16
        %v624 = vrot.slane %v622, 7
        %v625 = vshll.u32 %v586, 16
        %v627 = vor.u32 %v624, %v625
        %v628 = vrot.slane %v624, 4
        %v630 = vshrl.u32 %v587, 16
        %v632 = vrot.slane %v630, 7
        %v633 = vshll.u32 %v587, 16
        %v635 = vor.u32 %v632, %v633
        %v636 = vsel %vm620, %v628, %v635
        %v637 = vrot.slane %v632, 4
        %v639 = vshrl.u32 %v588, 16
        %v641 = vrot.slane %v639, 7
        %v642 = vshll.u32 %v588, 16
        %v644 = vor.u32 %v641, %v642
        %v645 = vrot.slane %v641, 4
        %v647 = vshrl.u32 %v589, 16
        %v649 = vrot.slane %v647, 7
        %v650 = vshll.u32 %v589, 16
        %v652 = vor.u32 %v649, %v650
        %v653 = vsel %vm620, %v645, %v652
        %v654 = vrot.slane %v649, 4
        %v656 = vshrl.u32 %v590, 16
        %v658 = vrot.slane %v656, 7
        %v659 = vshll.u32 %v590, 16
        %v661 = vor.u32 %v658, %v659
        %v662 = vrot.slane %v658, 4
        %v664 = vshrl.u32 %v591, 16
        %v666 = vrot.slane %v664, 7
        %v667 = vshll.u32 %v591, 16
        %v669 = vor.u32 %v666, %v667
        %v670 = vsel %vm620, %v662, %v669
        %v671 = vrot.slane %v666, 4
        %v673 = vshrl.u32 %v592, 16
        %v675 = vrot.slane %v673, 7
        %v676 = vshll.u32 %v592, 16
        %v678 = vor.u32 %v675, %v676
        %v679 = vrot.slane %v675, 4
        %v681 = vshrl.u32 %v593, 16
        %v683 = vrot.slane %v681, 7
        %v684 = vshll.u32 %v593, 16
        %v686 = vor.u32 %v683, %v684
        %v687 = vsel %vm620, %v679, %v686
        %v688 = vrot.slane %v683, 4
        %v690 = vshrl.u32 %v594, 16
        %v692 = vrot.slane %v690, 7
        %v693 = vshll.u32 %v594, 16
        %v695 = vor.u32 %v692, %v693
        %v696 = vrot.slane %v692, 4
        %v698 = vshrl.u32 %v595, 16
        %v700 = vrot.slane %v698, 7
        %v701 = vshll.u32 %v595, 16
        %v703 = vor.u32 %v700, %v701
        %v704 = vsel %vm620, %v696, %v703
        %v705 = vrot.slane %v700, 4
        %v707 = vshrl.u32 %v596, 16
        %v709 = vrot.slane %v707, 7
        %v710 = vshll.u32 %v596, 16
        %v712 = vor.u32 %v709, %v710
        %v713 = vrot.slane %v709, 4
        %v715 = vshrl.u32 %v597, 16
        %v717 = vrot.slane %v715, 7
        %v718 = vshll.u32 %v597, 16
        %v720 = vor.u32 %v717, %v718
        %v721 = vsel %vm620, %v713, %v720
        %v722 = vrot.slane %v717, 4
        %v724 = vshrl.u32 %v598, 16
        %v726 = vrot.slane %v724, 7
        %v727 = vshll.u32 %v598, 16
        %v729 = vor.u32 %v726, %v727
        %v730 = vrot.slane %v726, 4
        %v732 = vshrl.u32 %v599, 16
        %v734 = vrot.slane %v732, 7
        %v735 = vshll.u32 %v599, 16
        %v737 = vor.u32 %v734, %v735
        %v738 = vsel %vm620, %v730, %v737
        %v739 = vrot.slane %v734, 4
        %v741 = vshrl.u32 %v600, 16
        %v743 = vrot.slane %v741, 7
        %v744 = vshll.u32 %v600, 16
        %v746 = vor.u32 %v743, %v744
        %v747 = vrot.slane %v743, 4
        %v749 = vshrl.u32 %v601, 16
        %v751 = vrot.slane %v749, 7
        %v752 = vshll.u32 %v601, 16
        %v754 = vor.u32 %v751, %v752
        %v755 = vsel %vm620, %v747, %v754
        %v756 = vrot.slane %v751, 4
        %v758 = vshrl.u32 %v602, 16
        %v760 = vrot.slane %v758, 7
        %v761 = vshll.u32 %v602, 16
        %v763 = vor.u32 %v760, %v761
        %v764 = vrot.slane %v760, 4
        %v766 = vshrl.u32 %v603, 16
        %v768 = vrot.slane %v766, 7
        %v769 = vshll.u32 %v603, 16
        %v771 = vor.u32 %v768, %v769
        %v772 = vsel %vm620, %v764, %v771
        %v773 = vrot.slane %v768, 4
        %v775 = vshrl.u32 %v604, 16
        %v777 = vrot.slane %v775, 7
        %v778 = vshll.u32 %v604, 16
        %v780 = vor.u32 %v777, %v778
        %v781 = vrot.slane %v777, 4
        %v783 = vshrl.u32 %v605, 16
        %v785 = vrot.slane %v783, 7
        %v786 = vshll.u32 %v605, 16
        %v788 = vor.u32 %v785, %v786
        %v789 = vsel %vm620, %v781, %v788
        %v790 = vrot.slane %v785, 4
        %v792 = vshrl.u32 %v606, 16
        %v794 = vrot.slane %v792, 7
        %v795 = vshll.u32 %v606, 16
        %v797 = vor.u32 %v794, %v795
        %v798 = vrot.slane %v794, 4
        %v800 = vshrl.u32 %v607, 16
        %v802 = vrot.slane %v800, 7
        %v803 = vshll.u32 %v607, 16
        %v805 = vor.u32 %v802, %v803
        %v806 = vsel %vm620, %v798, %v805
        %v807 = vrot.slane %v802, 4
        %v809 = vshrl.u32 %v608, 16
        %v811 = vrot.slane %v809, 7
        %v812 = vshll.u32 %v608, 16
        %v814 = vor.u32 %v811, %v812
        %v815 = vrot.slane %v811, 4
        %v817 = vshrl.u32 %v609, 16
        %v819 = vrot.slane %v817, 7
        %v820 = vshll.u32 %v609, 16
        %v822 = vor.u32 %v819, %v820
        %v823 = vsel %vm620, %v815, %v822
        %v824 = vrot.slane %v819, 4
        %v826 = vshrl.u32 %v610, 16
        %v828 = vrot.slane %v826, 7
        %v829 = vshll.u32 %v610, 16
        %v831 = vor.u32 %v828, %v829
        %v832 = vrot.slane %v828, 4
        %v834 = vshrl.u32 %v611, 16
        %v836 = vrot.slane %v834, 7
        %v837 = vshll.u32 %v611, 16
        %v839 = vor.u32 %v836, %v837
        %v840 = vsel %vm620, %v832, %v839
        %v841 = vrot.slane %v836, 4
        %v843 = vshrl.u32 %v612, 16
        %v845 = vrot.slane %v843, 7
        %v846 = vshll.u32 %v612, 16
        %v848 = vor.u32 %v845, %v846
        %v849 = vrot.slane %v845, 4
        %v851 = vshrl.u32 %v613, 16
        %v853 = vrot.slane %v851, 7
        %v854 = vshll.u32 %v613, 16
        %v856 = vor.u32 %v853, %v854
        %v857 = vsel %vm620, %v849, %v856
        %v858 = vrot.slane %v853, 4
        %v860 = vshrl.u32 %v614, 16
        %v862 = vrot.slane %v860, 7
        %v863 = vshll.u32 %v614, 16
        %v865 = vor.u32 %v862, %v863
        %v866 = vrot.slane %v862, 4
        %v868 = vshrl.u32 %v615, 16
        %v870 = vrot.slane %v868, 7
        %v871 = vshll.u32 %v615, 16
        %v873 = vor.u32 %v870, %v871
        %v874 = vsel %vm620, %v866, %v873
        %v875 = vrot.slane %v870, 4
        %v877 = vshrl.u32 %v616, 16
        %v879 = vrot.slane %v877, 7
        %v880 = vshll.u32 %v616, 16
        %v882 = vor.u32 %v879, %v880
        %v883 = vrot.slane %v879, 4
        %v885 = vshrl.u32 %v617, 16
        %v887 = vrot.slane %v885, 7
        %v888 = vshll.u32 %v617, 16
        %v890 = vor.u32 %v887, %v888
        %v891 = vsel %vm620, %v883, %v890
        %v892 = vrot.slane %v887, 4
        %s941 = scalar_lea.vmem [#allocation2], 12
        %vm942 = vcmask 1043456
        %vm943 = vsmask.f32 7938
        %vm944 = vmand %vm942, %vm943
        %v945 = vld [vmem:[%s941] sm:$0xf]
        %v946 = vsel %vm944, %v627, %v945
        %947 = vst [vmem:[%s941] sm:$0xf] %v946
        %948 = vst [vmem:[%s941 + $0x4] sm:$0xf] %v636
        %vm949 = vcmask 1040384
        %vm950 = vmand %vm949, %vm618
        %v951 = vld [vmem:[%s941 + $0x8] sm:$0x1]
        %v952 = vsel %vm950, %v637, %v951
        %953 = vst [vmem:[%s941 + $0x8] sm:$0x1] %v952
        %v954 = vld [vmem:[%s941 + $0xc] sm:$0xf]
        %v955 = vsel %vm944, %v644, %v954
        %956 = vst [vmem:[%s941 + $0xc] sm:$0xf] %v955
        %957 = vst [vmem:[%s941 + $0x10] sm:$0xf] %v653
        %v958 = vld [vmem:[%s941 + $0x14] sm:$0x1]
        %v959 = vsel %vm950, %v654, %v958
        %960 = vst [vmem:[%s941 + $0x14] sm:$0x1] %v959
        %v961 = vld [vmem:[%s941 + $0x18] sm:$0xf]
        %v962 = vsel %vm944, %v661, %v961
        %963 = vst [vmem:[%s941 + $0x18] sm:$0xf] %v962
        %964 = vst [vmem:[%s941 + $0x1c] sm:$0xf] %v670
        %v965 = vld [vmem:[%s941 + $0x20] sm:$0x1]
        %v966 = vsel %vm950, %v671, %v965
        %967 = vst [vmem:[%s941 + $0x20] sm:$0x1] %v966
        %v968 = vld [vmem:[%s941 + $0x24] sm:$0xf]
        %v969 = vsel %vm944, %v678, %v968
        %970 = vst [vmem:[%s941 + $0x24] sm:$0xf] %v969
        %971 = vst [vmem:[%s941 + $0x28] sm:$0xf] %v687
        %v972 = vld [vmem:[%s941 + $0x2c] sm:$0x1]
        %v973 = vsel %vm950, %v688, %v972
        %974 = vst [vmem:[%s941 + $0x2c] sm:$0x1] %v973
        %v975 = vld [vmem:[%s941 + $0x30] sm:$0xf]
        %v976 = vsel %vm944, %v695, %v975
        %977 = vst [vmem:[%s941 + $0x30] sm:$0xf] %v976
        %978 = vst [vmem:[%s941 + $0x34] sm:$0xf] %v704
        %v979 = vld [vmem:[%s941 + $0x38] sm:$0x1]
        %v980 = vsel %vm950, %v705, %v979
        %981 = vst [vmem:[%s941 + $0x38] sm:$0x1] %v980
        %v982 = vld [vmem:[%s941 + $0x3c] sm:$0xf]
        %v983 = vsel %vm944, %v712, %v982
        %984 = vst [vmem:[%s941 + $0x3c] sm:$0xf] %v983
        %985 = vst [vmem:[%s941 + $0x40] sm:$0xf] %v721
        %v986 = vld [vmem:[%s941 + $0x44] sm:$0x1]
        %v987 = vsel %vm950, %v722, %v986
        %988 = vst [vmem:[%s941 + $0x44] sm:$0x1] %v987
        %v989 = vld [vmem:[%s941 + $0x48] sm:$0xf]
        %v990 = vsel %vm944, %v729, %v989
        %991 = vst [vmem:[%s941 + $0x48] sm:$0xf] %v990
        %992 = vst [vmem:[%s941 + $0x4c] sm:$0xf] %v738
        %v993 = vld [vmem:[%s941 + $0x50] sm:$0x1]
        %v994 = vsel %vm950, %v739, %v993
        %995 = vst [vmem:[%s941 + $0x50] sm:$0x1] %v994
        %v996 = vld [vmem:[%s941 + $0x54] sm:$0xf]
        %v997 = vsel %vm944, %v746, %v996
        %998 = vst [vmem:[%s941 + $0x54] sm:$0xf] %v997
        %999 = vst [vmem:[%s941 + $0x58] sm:$0xf] %v755
        %v1000 = vld [vmem:[%s941 + $0x5c] sm:$0x1]
        %v1001 = vsel %vm950, %v756, %v1000
        %1002 = vst [vmem:[%s941 + $0x5c] sm:$0x1] %v1001
        %v1003 = vld [vmem:[%s941 + $0x60] sm:$0xf]
        %v1004 = vsel %vm944, %v763, %v1003
        %1005 = vst [vmem:[%s941 + $0x60] sm:$0xf] %v1004
        %1006 = vst [vmem:[%s941 + $0x64] sm:$0xf] %v772
        %v1007 = vld [vmem:[%s941 + $0x68] sm:$0x1]
        %v1008 = vsel %vm950, %v773, %v1007
        %1009 = vst [vmem:[%s941 + $0x68] sm:$0x1] %v1008
        %v1010 = vld [vmem:[%s941 + $0x6c] sm:$0xf]
        %v1011 = vsel %vm944, %v780, %v1010
        %1012 = vst [vmem:[%s941 + $0x6c] sm:$0xf] %v1011
        %1013 = vst [vmem:[%s941 + $0x70] sm:$0xf] %v789
        %v1014 = vld [vmem:[%s941 + $0x74] sm:$0x1]
        %v1015 = vsel %vm950, %v790, %v1014
        %1016 = vst [vmem:[%s941 + $0x74] sm:$0x1] %v1015
        %v1017 = vld [vmem:[%s941 + $0x78] sm:$0xf]
        %v1018 = vsel %vm944, %v797, %v1017
        %1019 = vst [vmem:[%s941 + $0x78] sm:$0xf] %v1018
        %1020 = vst [vmem:[%s941 + $0x7c] sm:$0xf] %v806
        %v1021 = vld [vmem:[%s941 + $0x80] sm:$0x1]
        %v1022 = vsel %vm950, %v807, %v1021
        %1023 = vst [vmem:[%s941 + $0x80] sm:$0x1] %v1022
        %v1024 = vld [vmem:[%s941 + $0x84] sm:$0xf]
        %v1025 = vsel %vm944, %v814, %v1024
        %1026 = vst [vmem:[%s941 + $0x84] sm:$0xf] %v1025
        %1027 = vst [vmem:[%s941 + $0x88] sm:$0xf] %v823
        %v1028 = vld [vmem:[%s941 + $0x8c] sm:$0x1]
        %v1029 = vsel %vm950, %v824, %v1028
        %1030 = vst [vmem:[%s941 + $0x8c] sm:$0x1] %v1029
        %v1031 = vld [vmem:[%s941 + $0x90] sm:$0xf]
        %v1032 = vsel %vm944, %v831, %v1031
        %1033 = vst [vmem:[%s941 + $0x90] sm:$0xf] %v1032
        %1034 = vst [vmem:[%s941 + $0x94] sm:$0xf] %v840
        %v1035 = vld [vmem:[%s941 + $0x98] sm:$0x1]
        %v1036 = vsel %vm950, %v841, %v1035
        %1037 = vst [vmem:[%s941 + $0x98] sm:$0x1] %v1036
        %v1038 = vld [vmem:[%s941 + $0x9c] sm:$0xf]
        %v1039 = vsel %vm944, %v848, %v1038
        %1040 = vst [vmem:[%s941 + $0x9c] sm:$0xf] %v1039
        %1041 = vst [vmem:[%s941 + $0xa0] sm:$0xf] %v857
        %v1042 = vld [vmem:[%s941 + $0xa4] sm:$0x1]
        %v1043 = vsel %vm950, %v858, %v1042
        %1044 = vst [vmem:[%s941 + $0xa4] sm:$0x1] %v1043
        %v1045 = vld [vmem:[%s941 + $0xa8] sm:$0xf]
        %v1046 = vsel %vm944, %v865, %v1045
        %1047 = vst [vmem:[%s941 + $0xa8] sm:$0xf] %v1046
        %1048 = vst [vmem:[%s941 + $0xac] sm:$0xf] %v874
        %v1049 = vld [vmem:[%s941 + $0xb0] sm:$0x1]
        %v1050 = vsel %vm950, %v875, %v1049
        %1051 = vst [vmem:[%s941 + $0xb0] sm:$0x1] %v1050
        %v1052 = vld [vmem:[%s941 + $0xb4] sm:$0xf]
        %v1053 = vsel %vm944, %v882, %v1052
        %1054 = vst [vmem:[%s941 + $0xb4] sm:$0xf] %v1053
        %1055 = vst [vmem:[%s941 + $0xb8] sm:$0xf] %v891
        %v1056 = vld [vmem:[%s941 + $0xbc] sm:$0x1]
        %v1057 = vsel %vm950, %v892, %v1056
        %1058 = vst [vmem:[%s941 + $0xbc] sm:$0x1] %v1057
        %1059 = vst [vmem:[%s317] sm:$0x1] 0.0
        %1060 = vst [vmem:[%s320] sm:$0x1] 0.0
      $region44: #{conv_block_forward.4} parent=39 // pred_fallthru
        _
      %s1061 = smul.u32 %s24, 8
      %s1062 = smul.u32 %s1061, 3
      %s1063 = smul.addr %s1062, 4
      %s1064 = scalar_lea.vmem [#allocation2], %s1063
      %v1065 = vld [vmem:[%s1064] sm:$0xf]
      %v1066 = vld [vmem:[%s1064 + $0x4] sm:$0xf]
      %v1067 = vld [vmem:[%s1064 + $0x8] sm:$0x1]
      %v1068 = vld [vmem:[%s1064 + $0xc] sm:$0xf]
      %v1069 = vld [vmem:[%s1064 + $0x10] sm:$0xf]
      %v1070 = vld [vmem:[%s1064 + $0x14] sm:$0x1]
      %v1071 = vld [vmem:[%s1064 + $0x18] sm:$0xf]
      %v1072 = vld [vmem:[%s1064 + $0x1c] sm:$0xf]
      %v1073 = vld [vmem:[%s1064 + $0x20] sm:$0x1]
      %v1074 = vld [vmem:[%s1064 + $0x24] sm:$0xf]
      %v1075 = vld [vmem:[%s1064 + $0x28] sm:$0xf]
      %v1076 = vld [vmem:[%s1064 + $0x2c] sm:$0x1]
      %v1077 = vld [vmem:[%s1064 + $0x30] sm:$0xf]
      %v1078 = vld [vmem:[%s1064 + $0x34] sm:$0xf]
      %v1079 = vld [vmem:[%s1064 + $0x38] sm:$0x1]
      %v1080 = vld [vmem:[%s1064 + $0x3c] sm:$0xf]
      %v1081 = vld [vmem:[%s1064 + $0x40] sm:$0xf]
      %v1082 = vld [vmem:[%s1064 + $0x44] sm:$0x1]
      %v1083 = vld [vmem:[%s1064 + $0x48] sm:$0xf]
      %v1084 = vld [vmem:[%s1064 + $0x4c] sm:$0xf]
      %v1085 = vld [vmem:[%s1064 + $0x50] sm:$0x1]
      %v1086 = vld [vmem:[%s1064 + $0x54] sm:$0xf]
      %v1087 = vld [vmem:[%s1064 + $0x58] sm:$0xf]
      %v1088 = vld [vmem:[%s1064 + $0x5c] sm:$0x1]
      %v1089 = vld [vmem:[%s1064 + $0x60] sm:$0xf]
      %v1090 = vld [vmem:[%s1064 + $0x64] sm:$0xf]
      %v1091 = vld [vmem:[%s1064 + $0x68] sm:$0x1]
      %v1092 = vld [vmem:[%s1064 + $0x6c] sm:$0xf]
      %v1093 = vld [vmem:[%s1064 + $0x70] sm:$0xf]
      %v1094 = vld [vmem:[%s1064 + $0x74] sm:$0x1]
      %v1095 = vld [vmem:[%s3] sm:$0xf]
      %v1096 = vld [vmem:[%s3 + $0x4] sm:$0xf]
      %v1097 = vld [vmem:[%s3 + $0x8] sm:$0xf]
      %v1098 = vld [vmem:[%s3 + $0xc] sm:$0xf]
      %v1099 = vld [vmem:[%s3 + $0x10] sm:$0xf]
      %v1100 = vld [vmem:[%s3 + $0x14] sm:$0xf]
      %v1101 = vld [vmem:[%s3 + $0x18] sm:$0xf]
      %v1102 = vld [vmem:[%s3 + $0x1c] sm:$0xf]
      %v1103 = vld [vmem:[%s3 + $0x20] sm:$0xf]
      %v1104 = vld [vmem:[%s3 + $0x24] sm:$0xf]
      %v1105 = vld [vmem:[%s3 + $0x28] sm:$0xf]
      %v1106 = vld [vmem:[%s3 + $0x2c] sm:$0xf]
      %v1107 = vld [vmem:[%s3 + $0x30] sm:$0xf]
      %v1108 = vld [vmem:[%s3 + $0x34] sm:$0xf]
      %v1109 = vld [vmem:[%s3 + $0x38] sm:$0xf]
      %v1110 = vld [vmem:[%s3 + $0x3c] sm:$0xf]
      %vm1111 = vsmask.f32 3328
      %vm1112 = vsmask.f32 7440
      %vm1113 = vmor %vm1111, %vm1112
      %v1115 = vshrl.u32 %v1065, 16
      %v1117 = vrot.slane %v1115, 4
      %v1118 = vshll.u32 %v1065, 16
      %v1120 = vrot.slane %v1118, 5
      %v1121 = vor.u32 %v1117, %v1120
      %v1122 = vrot.slane %v1121, 4
      %v1124 = vshll.u32 %v1066, 16
      %v1126 = vrot.slane %v1124, 5
      %v1127 = vsel %vm1113, %v1122, %v1126
      %v1128 = vshrl.u32 %v1066, 16
      %v1130 = vrot.slane %v1128, 4
      %v1131 = vor.u32 %v1130, %v1126
      %v1132 = vrot.slane %v1131, 4
      %v1134 = vshll.u32 %v1067, 16
      %v1136 = vrot.slane %v1134, 5
      %v1137 = vsel %vm1113, %v1132, %v1136
      %v1139 = vshrl.u32 %v1068, 16
      %v1141 = vrot.slane %v1139, 4
      %v1142 = vshll.u32 %v1068, 16
      %v1144 = vrot.slane %v1142, 5
      %v1145 = vor.u32 %v1141, %v1144
      %v1146 = vrot.slane %v1145, 4
      %v1148 = vshll.u32 %v1069, 16
      %v1150 = vrot.slane %v1148, 5
      %v1151 = vsel %vm1113, %v1146, %v1150
      %v1152 = vshrl.u32 %v1069, 16
      %v1154 = vrot.slane %v1152, 4
      %v1155 = vor.u32 %v1154, %v1150
      %v1156 = vrot.slane %v1155, 4
      %v1158 = vshll.u32 %v1070, 16
      %v1160 = vrot.slane %v1158, 5
      %v1161 = vsel %vm1113, %v1156, %v1160
      %v1163 = vshrl.u32 %v1071, 16
      %v1165 = vrot.slane %v1163, 4
      %v1166 = vshll.u32 %v1071, 16
      %v1168 = vrot.slane %v1166, 5
      %v1169 = vor.u32 %v1165, %v1168
      %v1170 = vrot.slane %v1169, 4
      %v1172 = vshll.u32 %v1072, 16
      %v1174 = vrot.slane %v1172, 5
      %v1175 = vsel %vm1113, %v1170, %v1174
      %v1176 = vshrl.u32 %v1072, 16
      %v1178 = vrot.slane %v1176, 4
      %v1179 = vor.u32 %v1178, %v1174
      %v1180 = vrot.slane %v1179, 4
      %v1182 = vshll.u32 %v1073, 16
      %v1184 = vrot.slane %v1182, 5
      %v1185 = vsel %vm1113, %v1180, %v1184
      %v1187 = vshrl.u32 %v1074, 16
      %v1189 = vrot.slane %v1187, 4
      %v1190 = vshll.u32 %v1074, 16
      %v1192 = vrot.slane %v1190, 5
      %v1193 = vor.u32 %v1189, %v1192
      %v1194 = vrot.slane %v1193, 4
      %v1196 = vshll.u32 %v1075, 16
      %v1198 = vrot.slane %v1196, 5
      %v1199 = vsel %vm1113, %v1194, %v1198
      %v1200 = vshrl.u32 %v1075, 16
      %v1202 = vrot.slane %v1200, 4
      %v1203 = vor.u32 %v1202, %v1198
      %v1204 = vrot.slane %v1203, 4
      %v1206 = vshll.u32 %v1076, 16
      %v1208 = vrot.slane %v1206, 5
      %v1209 = vsel %vm1113, %v1204, %v1208
      %v1211 = vshrl.u32 %v1077, 16
      %v1213 = vrot.slane %v1211, 4
      %v1214 = vshll.u32 %v1077, 16
      %v1216 = vrot.slane %v1214, 5
      %v1217 = vor.u32 %v1213, %v1216
      %v1218 = vrot.slane %v1217, 4
      %v1220 = vshll.u32 %v1078, 16
      %v1222 = vrot.slane %v1220, 5
      %v1223 = vsel %vm1113, %v1218, %v1222
      %v1224 = vshrl.u32 %v1078, 16
      %v1226 = vrot.slane %v1224, 4
      %v1227 = vor.u32 %v1226, %v1222
      %v1228 = vrot.slane %v1227, 4
      %v1230 = vshll.u32 %v1079, 16
      %v1232 = vrot.slane %v1230, 5
      %v1233 = vsel %vm1113, %v1228, %v1232
      %v1235 = vshrl.u32 %v1080, 16
      %v1237 = vrot.slane %v1235, 4
      %v1238 = vshll.u32 %v1080, 16
      %v1240 = vrot.slane %v1238, 5
      %v1241 = vor.u32 %v1237, %v1240
      %v1242 = vrot.slane %v1241, 4
      %v1244 = vshll.u32 %v1081, 16
      %v1246 = vrot.slane %v1244, 5
      %v1247 = vsel %vm1113, %v1242, %v1246
      %v1248 = vshrl.u32 %v1081, 16
      %v1250 = vrot.slane %v1248, 4
      %v1251 = vor.u32 %v1250, %v1246
      %v1252 = vrot.slane %v1251, 4
      %v1254 = vshll.u32 %v1082, 16
      %v1256 = vrot.slane %v1254, 5
      %v1257 = vsel %vm1113, %v1252, %v1256
      %v1259 = vshrl.u32 %v1083, 16
      %v1261 = vrot.slane %v1259, 4
      %v1262 = vshll.u32 %v1083, 16
      %v1264 = vrot.slane %v1262, 5
      %v1265 = vor.u32 %v1261, %v1264
      %v1266 = vrot.slane %v1265, 4
      %v1268 = vshll.u32 %v1084, 16
      %v1270 = vrot.slane %v1268, 5
      %v1271 = vsel %vm1113, %v1266, %v1270
      %v1272 = vshrl.u32 %v1084, 16
      %v1274 = vrot.slane %v1272, 4
      %v1275 = vor.u32 %v1274, %v1270
      %v1276 = vrot.slane %v1275, 4
      %v1278 = vshll.u32 %v1085, 16
      %v1280 = vrot.slane %v1278, 5
      %v1281 = vsel %vm1113, %v1276, %v1280
      %v1283 = vshrl.u32 %v1086, 16
      %v1285 = vrot.slane %v1283, 4
      %v1286 = vshll.u32 %v1086, 16
      %v1288 = vrot.slane %v1286, 5
      %v1289 = vor.u32 %v1285, %v1288
      %v1290 = vrot.slane %v1289, 4
      %v1292 = vshll.u32 %v1087, 16
      %v1294 = vrot.slane %v1292, 5
      %v1295 = vsel %vm1113, %v1290, %v1294
      %v1296 = vshrl.u32 %v1087, 16
      %v1298 = vrot.slane %v1296, 4
      %v1299 = vor.u32 %v1298, %v1294
      %v1300 = vrot.slane %v1299, 4
      %v1302 = vshll.u32 %v1088, 16
      %v1304 = vrot.slane %v1302, 5
      %v1305 = vsel %vm1113, %v1300, %v1304
      %s1306 = scalar_lea.vmem %s3, 64
      %v1307 = vld [vmem:[%s1306] sm:$0xf]
      %v1308 = vld [vmem:[%s1306 + $0x4] sm:$0xf]
      %v1309 = vld [vmem:[%s1306 + $0x8] sm:$0xf]
      %v1310 = vld [vmem:[%s1306 + $0xc] sm:$0xf]
      %v1311 = vld [vmem:[%s1306 + $0x10] sm:$0xf]
      %v1312 = vld [vmem:[%s1306 + $0x14] sm:$0xf]
      %v1313 = vld [vmem:[%s1306 + $0x18] sm:$0xf]
      %v1314 = vld [vmem:[%s1306 + $0x1c] sm:$0xf]
      %v1315 = vld [vmem:[%s1306 + $0x20] sm:$0xf]
      %v1316 = vld [vmem:[%s1306 + $0x24] sm:$0xf]
      %v1317 = vld [vmem:[%s1306 + $0x28] sm:$0xf]
      %v1318 = vld [vmem:[%s1306 + $0x2c] sm:$0xf]
      %v1319 = vld [vmem:[%s1306 + $0x30] sm:$0xf]
      %v1320 = vld [vmem:[%s1306 + $0x34] sm:$0xf]
      %v1321 = vld [vmem:[%s1306 + $0x38] sm:$0xf]
      %v1322 = vld [vmem:[%s1306 + $0x3c] sm:$0xf]
      %v1323 = vunpack.c.l.b16 %v1127
      %v1324 = vunpack.c.l.b16 %v1137
      %v1325 = vunpack.c.l.b16 %v1151
      %v1326 = vunpack.c.l.b16 %v1161
      %v1327 = vunpack.c.l.b16 %v1175
      %v1328 = vunpack.c.l.b16 %v1185
      %v1329 = vunpack.c.l.b16 %v1199
      %v1330 = vunpack.c.l.b16 %v1209
      %v1331 = vunpack.c.l.b16 %v1223
      %v1332 = vunpack.c.l.b16 %v1233
      %v1333 = vunpack.c.l.b16 %v1247
      %v1334 = vunpack.c.l.b16 %v1257
      %v1335 = vunpack.c.l.b16 %v1271
      %v1336 = vunpack.c.l.b16 %v1281
      %v1337 = vunpack.c.l.b16 %v1295
      %v1338 = vunpack.c.l.b16 %v1305
      %v1339 = vpack.c.b16 %v1324, %v1323
      %v1340 = vpack.c.b16 %v1326, %v1325
      %v1341 = vpack.c.b16 %v1328, %v1327
      %v1342 = vpack.c.b16 %v1330, %v1329
      %v1343 = vpack.c.b16 %v1332, %v1331
      %v1344 = vpack.c.b16 %v1334, %v1333
      %v1345 = vpack.c.b16 %v1336, %v1335
      %v1346 = vpack.c.b16 %v1338, %v1337
      %v1371 = vunpack.c.l.b16 %v1307
      %v1372 = vunpack.c.l.b16 %v1308
      %v1373 = vunpack.c.l.b16 %v1309
      %v1374 = vunpack.c.l.b16 %v1310
      %v1375 = vunpack.c.l.b16 %v1311
      %v1376 = vunpack.c.l.b16 %v1312
      %v1377 = vunpack.c.l.b16 %v1313
      %v1378 = vunpack.c.l.b16 %v1314
      %v1379 = vunpack.c.l.b16 %v1315
      %v1380 = vunpack.c.l.b16 %v1316
      %v1381 = vunpack.c.l.b16 %v1317
      %v1382 = vunpack.c.l.b16 %v1318
      %v1383 = vunpack.c.l.b16 %v1319
      %v1384 = vunpack.c.l.b16 %v1320
      %v1385 = vunpack.c.l.b16 %v1321
      %v1386 = vunpack.c.l.b16 %v1322
      %v1387 = vpack.c.b16 %v1372, %v1371
      %v1388 = vpack.c.b16 %v1374, %v1373
      %v1389 = vpack.c.b16 %v1376, %v1375
      %v1390 = vpack.c.b16 %v1378, %v1377
      %v1391 = vpack.c.b16 %v1380, %v1379
      %v1392 = vpack.c.b16 %v1382, %v1381
      %v1393 = vpack.c.b16 %v1384, %v1383
      %v1394 = vpack.c.b16 %v1386, %v1385
      %1403 = vmatprep.subr.bf16.mxu0 0
      %1404 = vmatpush1.bf16.msra.mxu0 %v1387
      %1405 = vmatprep.subr.bf16.mxu0 0
      %1406 = vmatpush1.bf16.msra.mxu0 %v1388
      %1407 = vmatprep.subr.bf16.mxu0 0
      %1408 = vmatpush1.bf16.msra.mxu0 %v1389
      %1409 = vmatprep.subr.bf16.mxu0 0
      %1410 = vmatpush1.bf16.msra.mxu0 %v1390
      %1411 = vmatprep.subr.bf16.mxu0 0
      %1412 = vmatpush1.bf16.msra.mxu0 %v1391
      %1413 = vmatprep.subr.bf16.mxu0 0
      %1414 = vmatpush1.bf16.msra.mxu0 %v1392
      %1415 = vmatprep.subr.bf16.mxu0 0
      %1416 = vmatpush1.bf16.msra.mxu0 %v1393
      %1417 = vmatprep.subr.bf16.mxu0 0
      %1418 = vmatpush1.bf16.msra.mxu0 %v1394
      %1419 = vmatprep.subr.bf16.mxu0 0
      %1420 = vmatpush1.bf16.msra.mxu0 0
      %1421 = vmatprep.subr.bf16.mxu0 0
      %1422 = vmatpush1.bf16.msra.mxu0 0
      %1423 = vmatprep.subr.bf16.mxu0 0
      %1424 = vmatpush1.bf16.msra.mxu0 0
      %1425 = vmatprep.subr.bf16.mxu0 0
      %1426 = vmatpush1.bf16.msra.mxu0 0
      %1427 = vmatprep.subr.bf16.mxu0 0
      %1428 = vmatpush1.bf16.msra.mxu0 0
      %1429 = vmatprep.subr.bf16.mxu0 0
      %1430 = vmatpush1.bf16.msra.mxu0 0
      %1431 = vmatprep.subr.bf16.mxu0 0
      %1432 = vmatpush1.bf16.msra.mxu0 0
      %1433 = vmatprep.subr.bf16.mxu0 0
      %1434 = vmatpush1.bf16.msra.mxu0 0
      %1435 = vmatprep.mubr.bf16.mxu0 0
      %1436 = vmatmul.mubr.bf16.gmra.mrb[0].mxu0 %v1339
      %v1437 = vpop.f32.mrb[0].mxu0
      %v1438 = vadd.f32 0.0, %v1437
      %v1439 = vpop.f32.mrb[0].mxu0
      %v1440 = vpop.f32.mrb[0].mxu0
      %v1441 = vadd.f32 0.0, %v1440
      %v1442 = vpop.f32.mrb[0].mxu0
      %1443 = vmatprep.mubr.bf16.mxu0 0
      %1444 = vmatmul.mubr.bf16.gmra.mrb[0].mxu0 %v1340
      %v1445 = vpop.f32.mrb[0].mxu0
      %v1446 = vadd.f32 0.0, %v1445
      %v1447 = vpop.f32.mrb[0].mxu0
      %v1448 = vpop.f32.mrb[0].mxu0
      %v1449 = vadd.f32 0.0, %v1448
      %v1450 = vpop.f32.mrb[0].mxu0
      %1451 = vmatprep.mubr.bf16.mxu0 0
      %1452 = vmatmul.mubr.bf16.gmra.mrb[0].mxu0 %v1341
      %v1453 = vpop.f32.mrb[0].mxu0
      %v1454 = vadd.f32 0.0, %v1453
      %v1455 = vpop.f32.mrb[0].mxu0
      %v1456 = vpop.f32.mrb[0].mxu0
      %v1457 = vadd.f32 0.0, %v1456
      %v1458 = vpop.f32.mrb[0].mxu0
      %1459 = vmatprep.mubr.bf16.mxu0 0
      %1460 = vmatmul.mubr.bf16.gmra.mrb[0].mxu0 %v1342
      %v1461 = vpop.f32.mrb[0].mxu0
      %v1462 = vadd.f32 0.0, %v1461
      %v1463 = vpop.f32.mrb[0].mxu0
      %v1464 = vpop.f32.mrb[0].mxu0
      %v1465 = vadd.f32 0.0, %v1464
      %v1466 = vpop.f32.mrb[0].mxu0
      %1467 = vmatprep.mubr.bf16.mxu0 0
      %1468 = vmatmul.mubr.bf16.gmra.mrb[0].mxu0 %v1343
      %v1469 = vpop.f32.mrb[0].mxu0
      %v1470 = vadd.f32 0.0, %v1469
      %v1471 = vpop.f32.mrb[0].mxu0
      %v1472 = vpop.f32.mrb[0].mxu0
      %v1473 = vadd.f32 0.0, %v1472
      %v1474 = vpop.f32.mrb[0].mxu0
      %1475 = vmatprep.mubr.bf16.mxu0 0
      %1476 = vmatmul.mubr.bf16.gmra.mrb[0].mxu0 %v1344
      %v1477 = vpop.f32.mrb[0].mxu0
      %v1478 = vadd.f32 0.0, %v1477
      %v1479 = vpop.f32.mrb[0].mxu0
      %v1480 = vpop.f32.mrb[0].mxu0
      %v1481 = vadd.f32 0.0, %v1480
      %v1482 = vpop.f32.mrb[0].mxu0
      %1483 = vmatprep.mubr.bf16.mxu0 0
      %1484 = vmatmul.mubr.bf16.gmra.mrb[0].mxu0 %v1345
      %v1485 = vpop.f32.mrb[0].mxu0
      %v1486 = vadd.f32 0.0, %v1485
      %v1487 = vpop.f32.mrb[0].mxu0
      %v1488 = vpop.f32.mrb[0].mxu0
      %v1489 = vadd.f32 0.0, %v1488
      %v1490 = vpop.f32.mrb[0].mxu0
      %1491 = vmatprep.mubr.bf16.mxu0 0
      %1492 = vmatmul.mubr.bf16.gmra.mrb[0].mxu0 %v1346
      %v1493 = vpop.f32.mrb[0].mxu0
      %v1494 = vadd.f32 0.0, %v1493
      %v1495 = vpop.f32.mrb[0].mxu0
      %v1496 = vpop.f32.mrb[0].mxu0
      %v1497 = vadd.f32 0.0, %v1496
      %v1498 = vpop.f32.mrb[0].mxu0
      %1499 = vdwg.mxu0
      %v1516 = vunpack.c.l.b16 %v1065
      %v1517 = vunpack.c.l.b16 %v1066
      %v1518 = vunpack.c.l.b16 %v1068
      %v1519 = vunpack.c.l.b16 %v1069
      %v1520 = vunpack.c.l.b16 %v1071
      %v1521 = vunpack.c.l.b16 %v1072
      %v1522 = vunpack.c.l.b16 %v1074
      %v1523 = vunpack.c.l.b16 %v1075
      %v1524 = vunpack.c.l.b16 %v1077
      %v1525 = vunpack.c.l.b16 %v1078
      %v1526 = vunpack.c.l.b16 %v1080
      %v1527 = vunpack.c.l.b16 %v1081
      %v1528 = vunpack.c.l.b16 %v1083
      %v1529 = vunpack.c.l.b16 %v1084
      %v1530 = vunpack.c.l.b16 %v1086
      %v1531 = vunpack.c.l.b16 %v1087
      %v1532 = vpack.c.b16 %v1517, %v1516
      %v1533 = vpack.c.b16 %v1519, %v1518
      %v1534 = vpack.c.b16 %v1521, %v1520
      %v1535 = vpack.c.b16 %v1523, %v1522
      %v1536 = vpack.c.b16 %v1525, %v1524
      %v1537 = vpack.c.b16 %v1527, %v1526
      %v1538 = vpack.c.b16 %v1529, %v1528
      %v1539 = vpack.c.b16 %v1531, %v1530
      %v1564 = vunpack.c.l.b16 %v1095
      %v1565 = vunpack.c.l.b16 %v1096
      %v1566 = vunpack.c.l.b16 %v1097
      %v1567 = vunpack.c.l.b16 %v1098
      %v1568 = vunpack.c.l.b16 %v1099
      %v1569 = vunpack.c.l.b16 %v1100
      %v1570 = vunpack.c.l.b16 %v1101
      %v1571 = vunpack.c.l.b16 %v1102
      %v1572 = vunpack.c.l.b16 %v1103
      %v1573 = vunpack.c.l.b16 %v1104
      %v1574 = vunpack.c.l.b16 %v1105
      %v1575 = vunpack.c.l.b16 %v1106
      %v1576 = vunpack.c.l.b16 %v1107
      %v1577 = vunpack.c.l.b16 %v1108
      %v1578 = vunpack.c.l.b16 %v1109
      %v1579 = vunpack.c.l.b16 %v1110
      %v1580 = vpack.c.b16 %v1565, %v1564
      %v1581 = vpack.c.b16 %v1567, %v1566
      %v1582 = vpack.c.b16 %v1569, %v1568
      %v1583 = vpack.c.b16 %v1571, %v1570
      %v1584 = vpack.c.b16 %v1573, %v1572
      %v1585 = vpack.c.b16 %v1575, %v1574
      %v1586 = vpack.c.b16 %v1577, %v1576
      %v1587 = vpack.c.b16 %v1579, %v1578
      %1596 = vmatprep.subr.bf16.mxu0 0
      %1597 = vmatpush1.bf16.msra.mxu0 %v1580
      %1598 = vmatprep.subr.bf16.mxu0 0
      %1599 = vmatpush1.bf16.msra.mxu0 %v1581
      %1600 = vmatprep.subr.bf16.mxu0 0
      %1601 = vmatpush1.bf16.msra.mxu0 %v1582
      %1602 = vmatprep.subr.bf16.mxu0 0
      %1603 = vmatpush1.bf16.msra.mxu0 %v1583
      %1604 = vmatprep.subr.bf16.mxu0 0
      %1605 = vmatpush1.bf16.msra.mxu0 %v1584
      %1606 = vmatprep.subr.bf16.mxu0 0
      %1607 = vmatpush1.bf16.msra.mxu0 %v1585
      %1608 = vmatprep.subr.bf16.mxu0 0
      %1609 = vmatpush1.bf16.msra.mxu0 %v1586
      %1610 = vmatprep.subr.bf16.mxu0 0
      %1611 = vmatpush1.bf16.msra.mxu0 %v1587
      %1612 = vmatprep.subr.bf16.mxu0 0
      %1613 = vmatpush1.bf16.msra.mxu0 0
      %1614 = vmatprep.subr.bf16.mxu0 0
      %1615 = vmatpush1.bf16.msra.mxu0 0
      %1616 = vmatprep.subr.bf16.mxu0 0
      %1617 = vmatpush1.bf16.msra.mxu0 0
      %1618 = vmatprep.subr.bf16.mxu0 0
      %1619 = vmatpush1.bf16.msra.mxu0 0
      %1620 = vmatprep.subr.bf16.mxu0 0
      %1621 = vmatpush1.bf16.msra.mxu0 0
      %1622 = vmatprep.subr.bf16.mxu0 0
      %1623 = vmatpush1.bf16.msra.mxu0 0
      %1624 = vmatprep.subr.bf16.mxu0 0
      %1625 = vmatpush1.bf16.msra.mxu0 0
      %1626 = vmatprep.subr.bf16.mxu0 0
      %1627 = vmatpush1.bf16.msra.mxu0 0
      %1628 = vmatprep.mubr.bf16.mxu0 0
      %1629 = vmatmul.mubr.bf16.gmra.mrb[0].mxu0 %v1532
      %v1630 = vpop.f32.mrb[0].mxu0
      %v1631 = vadd.f32 %v1438, %v1630
      %v1632 = vpop.f32.mrb[0].mxu0
      %v1633 = vpop.f32.mrb[0].mxu0
      %v1634 = vadd.f32 %v1441, %v1633
      %v1635 = vpop.f32.mrb[0].mxu0
      %1636 = vmatprep.mubr.bf16.mxu0 0
      %1637 = vmatmul.mubr.bf16.gmra.mrb[0].mxu0 %v1533
      %v1638 = vpop.f32.mrb[0].mxu0
      %v1639 = vadd.f32 %v1446, %v1638
      %v1640 = vpop.f32.mrb[0].mxu0
      %v1641 = vpop.f32.mrb[0].mxu0
      %v1642 = vadd.f32 %v1449, %v1641
      %v1643 = vpop.f32.mrb[0].mxu0
      %1644 = vmatprep.mubr.bf16.mxu0 0
      %1645 = vmatmul.mubr.bf16.gmra.mrb[0].mxu0 %v1534
      %v1646 = vpop.f32.mrb[0].mxu0
      %v1647 = vadd.f32 %v1454, %v1646
      %v1648 = vpop.f32.mrb[0].mxu0
      %v1649 = vpop.f32.mrb[0].mxu0
      %v1650 = vadd.f32 %v1457, %v1649
      %v1651 = vpop.f32.mrb[0].mxu0
      %1652 = vmatprep.mubr.bf16.mxu0 0
      %1653 = vmatmul.mubr.bf16.gmra.mrb[0].mxu0 %v1535
      %v1654 = vpop.f32.mrb[0].mxu0
      %v1655 = vadd.f32 %v1462, %v1654
      %v1656 = vpop.f32.mrb[0].mxu0
      %v1657 = vpop.f32.mrb[0].mxu0
      %v1658 = vadd.f32 %v1465, %v1657
      %v1659 = vpop.f32.mrb[0].mxu0
      %1660 = vmatprep.mubr.bf16.mxu0 0
      %1661 = vmatmul.mubr.bf16.gmra.mrb[0].mxu0 %v1536
      %v1662 = vpop.f32.mrb[0].mxu0
      %v1663 = vadd.f32 %v1470, %v1662
      %v1664 = vpop.f32.mrb[0].mxu0
      %v1665 = vpop.f32.mrb[0].mxu0
      %v1666 = vadd.f32 %v1473, %v1665
      %v1667 = vpop.f32.mrb[0].mxu0
      %1668 = vmatprep.mubr.bf16.mxu0 0
      %1669 = vmatmul.mubr.bf16.gmra.mrb[0].mxu0 %v1537
      %v1670 = vpop.f32.mrb[0].mxu0
      %v1671 = vadd.f32 %v1478, %v1670
      %v1672 = vpop.f32.mrb[0].mxu0
      %v1673 = vpop.f32.mrb[0].mxu0
      %v1674 = vadd.f32 %v1481, %v1673
      %v1675 = vpop.f32.mrb[0].mxu0
      %1676 = vmatprep.mubr.bf16.mxu0 0
      %1677 = vmatmul.mubr.bf16.gmra.mrb[0].mxu0 %v1538
      %v1678 = vpop.f32.mrb[0].mxu0
      %v1679 = vadd.f32 %v1486, %v1678
      %v1680 = vpop.f32.mrb[0].mxu0
      %v1681 = vpop.f32.mrb[0].mxu0
      %v1682 = vadd.f32 %v1489, %v1681
      %v1683 = vpop.f32.mrb[0].mxu0
      %1684 = vmatprep.mubr.bf16.mxu0 0
      %1685 = vmatmul.mubr.bf16.gmra.mrb[0].mxu0 %v1539
      %v1686 = vpop.f32.mrb[0].mxu0
      %v1687 = vadd.f32 %v1494, %v1686
      %v1688 = vpop.f32.mrb[0].mxu0
      %v1689 = vpop.f32.mrb[0].mxu0
      %v1690 = vadd.f32 %v1497, %v1689
      %v1691 = vpop.f32.mrb[0].mxu0
      %1692 = vdwg.mxu0
      %vm1701 = vcmask 1042432
      %vm1702 = vcmask 1046532
      %vm1703 = vmor %vm1701, %vm1702
      %v1704 = vrot.slane %v1065, 5
      %v1705 = vrot.slane %v1704, 4
      %v1706 = vrot.slane %v1066, 5
      %v1707 = vsel %vm1703, %v1705, %v1706
      %v1708 = vrot.slane %v1706, 4
      %v1709 = vrot.slane %v1067, 5
      %v1710 = vsel %vm1703, %v1708, %v1709
      %v1711 = vrot.slane %v1068, 5
      %v1712 = vrot.slane %v1711, 4
      %v1713 = vrot.slane %v1069, 5
      %v1714 = vsel %vm1703, %v1712, %v1713
      %v1715 = vrot.slane %v1713, 4
      %v1716 = vrot.slane %v1070, 5
      %v1717 = vsel %vm1703, %v1715, %v1716
      %v1718 = vrot.slane %v1071, 5
      %v1719 = vrot.slane %v1718, 4
      %v1720 = vrot.slane %v1072, 5
      %v1721 = vsel %vm1703, %v1719, %v1720
      %v1722 = vrot.slane %v1720, 4
      %v1723 = vrot.slane %v1073, 5
      %v1724 = vsel %vm1703, %v1722, %v1723
      %v1725 = vrot.slane %v1074, 5
      %v1726 = vrot.slane %v1725, 4
      %v1727 = vrot.slane %v1075, 5
      %v1728 = vsel %vm1703, %v1726, %v1727
      %v1729 = vrot.slane %v1727, 4
      %v1730 = vrot.slane %v1076, 5
      %v1731 = vsel %vm1703, %v1729, %v1730
      %v1732 = vrot.slane %v1077, 5
      %v1733 = vrot.slane %v1732, 4
      %v1734 = vrot.slane %v1078, 5
      %v1735 = vsel %vm1703, %v1733, %v1734
      %v1736 = vrot.slane %v1734, 4
      %v1737 = vrot.slane %v1079, 5
      %v1738 = vsel %vm1703, %v1736, %v1737
      %v1739 = vrot.slane %v1080, 5
      %v1740 = vrot.slane %v1739, 4
      %v1741 = vrot.slane %v1081, 5
      %v1742 = vsel %vm1703, %v1740, %v1741
      %v1743 = vrot.slane %v1741, 4
      %v1744 = vrot.slane %v1082, 5
      %v1745 = vsel %vm1703, %v1743, %v1744
      %v1746 = vrot.slane %v1083, 5
      %v1747 = vrot.slane %v1746, 4
      %v1748 = vrot.slane %v1084, 5
      %v1749 = vsel %vm1703, %v1747, %v1748
      %v1750 = vrot.slane %v1748, 4
      %v1751 = vrot.slane %v1085, 5
      %v1752 = vsel %vm1703, %v1750, %v1751
      %v1753 = vrot.slane %v1086, 5
      %v1754 = vrot.slane %v1753, 4
      %v1755 = vrot.slane %v1087, 5
      %v1756 = vsel %vm1703, %v1754, %v1755
      %v1757 = vrot.slane %v1755, 4
      %v1758 = vrot.slane %v1088, 5
      %v1759 = vsel %vm1703, %v1757, %v1758
      %s1760 = scalar_lea.vmem %s3, 128
      %v1761 = vld [vmem:[%s1760] sm:$0xf]
      %v1762 = vld [vmem:[%s1760 + $0x4] sm:$0xf]
      %v1763 = vld [vmem:[%s1760 + $0x8] sm:$0xf]
      %v1764 = vld [vmem:[%s1760 + $0xc] sm:$0xf]
      %v1765 = vld [vmem:[%s1760 + $0x10] sm:$0xf]
      %v1766 = vld [vmem:[%s1760 + $0x14] sm:$0xf]
      %v1767 = vld [vmem:[%s1760 + $0x18] sm:$0xf]
      %v1768 = vld [vmem:[%s1760 + $0x1c] sm:$0xf]
      %v1769 = vld [vmem:[%s1760 + $0x20] sm:$0xf]
      %v1770 = vld [vmem:[%s1760 + $0x24] sm:$0xf]
      %v1771 = vld [vmem:[%s1760 + $0x28] sm:$0xf]
      %v1772 = vld [vmem:[%s1760 + $0x2c] sm:$0xf]
      %v1773 = vld [vmem:[%s1760 + $0x30] sm:$0xf]
      %v1774 = vld [vmem:[%s1760 + $0x34] sm:$0xf]
      %v1775 = vld [vmem:[%s1760 + $0x38] sm:$0xf]
      %v1776 = vld [vmem:[%s1760 + $0x3c] sm:$0xf]
      %v1777 = vunpack.c.l.b16 %v1707
      %v1778 = vunpack.c.l.b16 %v1710
      %v1779 = vunpack.c.l.b16 %v1714
      %v1780 = vunpack.c.l.b16 %v1717
      %v1781 = vunpack.c.l.b16 %v1721
      %v1782 = vunpack.c.l.b16 %v1724
      %v1783 = vunpack.c.l.b16 %v1728
      %v1784 = vunpack.c.l.b16 %v1731
      %v1785 = vunpack.c.l.b16 %v1735
      %v1786 = vunpack.c.l.b16 %v1738
      %v1787 = vunpack.c.l.b16 %v1742
      %v1788 = vunpack.c.l.b16 %v1745
      %v1789 = vunpack.c.l.b16 %v1749
      %v1790 = vunpack.c.l.b16 %v1752
      %v1791 = vunpack.c.l.b16 %v1756
      %v1792 = vunpack.c.l.b16 %v1759
      %v1793 = vpack.c.b16 %v1778, %v1777
      %v1794 = vpack.c.b16 %v1780, %v1779
      %v1795 = vpack.c.b16 %v1782, %v1781
      %v1796 = vpack.c.b16 %v1784, %v1783
      %v1797 = vpack.c.b16 %v1786, %v1785
      %v1798 = vpack.c.b16 %v1788, %v1787
      %v1799 = vpack.c.b16 %v1790, %v1789
      %v1800 = vpack.c.b16 %v1792, %v1791
      %v1825 = vunpack.c.l.b16 %v1761
      %v1826 = vunpack.c.l.b16 %v1762
      %v1827 = vunpack.c.l.b16 %v1763
      %v1828 = vunpack.c.l.b16 %v1764
      %v1829 = vunpack.c.l.b16 %v1765
      %v1830 = vunpack.c.l.b16 %v1766
      %v1831 = vunpack.c.l.b16 %v1767
      %v1832 = vunpack.c.l.b16 %v1768
      %v1833 = vunpack.c.l.b16 %v1769
      %v1834 = vunpack.c.l.b16 %v1770
      %v1835 = vunpack.c.l.b16 %v1771
      %v1836 = vunpack.c.l.b16 %v1772
      %v1837 = vunpack.c.l.b16 %v1773
      %v1838 = vunpack.c.l.b16 %v1774
      %v1839 = vunpack.c.l.b16 %v1775
      %v1840 = vunpack.c.l.b16 %v1776
      %v1841 = vpack.c.b16 %v1826, %v1825
      %v1842 = vpack.c.b16 %v1828, %v1827
      %v1843 = vpack.c.b16 %v1830, %v1829
      %v1844 = vpack.c.b16 %v1832, %v1831
      %v1845 = vpack.c.b16 %v1834, %v1833
      %v1846 = vpack.c.b16 %v1836, %v1835
      %v1847 = vpack.c.b16 %v1838, %v1837
      %v1848 = vpack.c.b16 %v1840, %v1839
      %1857 = vmatprep.subr.bf16.mxu0 0
      %1858 = vmatpush1.bf16.msra.mxu0 %v1841
      %1859 = vmatprep.subr.bf16.mxu0 0
      %1860 = vmatpush1.bf16.msra.mxu0 %v1842
      %1861 = vmatprep.subr.bf16.mxu0 0
      %1862 = vmatpush1.bf16.msra.mxu0 %v1843
      %1863 = vmatprep.subr.bf16.mxu0 0
      %1864 = vmatpush1.bf16.msra.mxu0 %v1844
      %1865 = vmatprep.subr.bf16.mxu0 0
      %1866 = vmatpush1.bf16.msra.mxu0 %v1845
      %1867 = vmatprep.subr.bf16.mxu0 0
      %1868 = vmatpush1.bf16.msra.mxu0 %v1846
      %1869 = vmatprep.subr.bf16.mxu0 0
      %1870 = vmatpush1.bf16.msra.mxu0 %v1847
      %1871 = vmatprep.subr.bf16.mxu0 0
      %1872 = vmatpush1.bf16.msra.mxu0 %v1848
      %1873 = vmatprep.subr.bf16.mxu0 0
      %1874 = vmatpush1.bf16.msra.mxu0 0
      %1875 = vmatprep.subr.bf16.mxu0 0
      %1876 = vmatpush1.bf16.msra.mxu0 0
      %1877 = vmatprep.subr.bf16.mxu0 0
      %1878 = vmatpush1.bf16.msra.mxu0 0
      %1879 = vmatprep.subr.bf16.mxu0 0
      %1880 = vmatpush1.bf16.msra.mxu0 0
      %1881 = vmatprep.subr.bf16.mxu0 0
      %1882 = vmatpush1.bf16.msra.mxu0 0
      %1883 = vmatprep.subr.bf16.mxu0 0
      %1884 = vmatpush1.bf16.msra.mxu0 0
      %1885 = vmatprep.subr.bf16.mxu0 0
      %1886 = vmatpush1.bf16.msra.mxu0 0
      %1887 = vmatprep.subr.bf16.mxu0 0
      %1888 = vmatpush1.bf16.msra.mxu0 0
      %1889 = vmatprep.mubr.bf16.mxu0 0
      %1890 = vmatmul.mubr.bf16.gmra.mrb[0].mxu0 %v1793
      %v1891 = vpop.f32.mrb[0].mxu0
      %v1892 = vadd.f32 0.0, %v1891
      %v1893 = vpop.f32.mrb[0].mxu0
      %v1894 = vpop.f32.mrb[0].mxu0
      %v1895 = vadd.f32 0.0, %v1894
      %v1896 = vpop.f32.mrb[0].mxu0
      %1897 = vmatprep.mubr.bf16.mxu0 0
      %1898 = vmatmul.mubr.bf16.gmra.mrb[0].mxu0 %v1794
      %v1899 = vpop.f32.mrb[0].mxu0
      %v1900 = vadd.f32 0.0, %v1899
      %v1901 = vpop.f32.mrb[0].mxu0
      %v1902 = vpop.f32.mrb[0].mxu0
      %v1903 = vadd.f32 0.0, %v1902
      %v1904 = vpop.f32.mrb[0].mxu0
      %1905 = vmatprep.mubr.bf16.mxu0 0
      %1906 = vmatmul.mubr.bf16.gmra.mrb[0].mxu0 %v1795
      %v1907 = vpop.f32.mrb[0].mxu0
      %v1908 = vadd.f32 0.0, %v1907
      %v1909 = vpop.f32.mrb[0].mxu0
      %v1910 = vpop.f32.mrb[0].mxu0
      %v1911 = vadd.f32 0.0, %v1910
      %v1912 = vpop.f32.mrb[0].mxu0
      %1913 = vmatprep.mubr.bf16.mxu0 0
      %1914 = vmatmul.mubr.bf16.gmra.mrb[0].mxu0 %v1796
      %v1915 = vpop.f32.mrb[0].mxu0
      %v1916 = vadd.f32 0.0, %v1915
      %v1917 = vpop.f32.mrb[0].mxu0
      %v1918 = vpop.f32.mrb[0].mxu0
      %v1919 = vadd.f32 0.0, %v1918
      %v1920 = vpop.f32.mrb[0].mxu0
      %1921 = vmatprep.mubr.bf16.mxu0 0
      %1922 = vmatmul.mubr.bf16.gmra.mrb[0].mxu0 %v1797
      %v1923 = vpop.f32.mrb[0].mxu0
      %v1924 = vadd.f32 0.0, %v1923
      %v1925 = vpop.f32.mrb[0].mxu0
      %v1926 = vpop.f32.mrb[0].mxu0
      %v1927 = vadd.f32 0.0, %v1926
      %v1928 = vpop.f32.mrb[0].mxu0
      %1929 = vmatprep.mubr.bf16.mxu0 0
      %1930 = vmatmul.mubr.bf16.gmra.mrb[0].mxu0 %v1798
      %v1931 = vpop.f32.mrb[0].mxu0
      %v1932 = vadd.f32 0.0, %v1931
      %v1933 = vpop.f32.mrb[0].mxu0
      %v1934 = vpop.f32.mrb[0].mxu0
      %v1935 = vadd.f32 0.0, %v1934
      %v1936 = vpop.f32.mrb[0].mxu0
      %1937 = vmatprep.mubr.bf16.mxu0 0
      %1938 = vmatmul.mubr.bf16.gmra.mrb[0].mxu0 %v1799
      %v1939 = vpop.f32.mrb[0].mxu0
      %v1940 = vadd.f32 0.0, %v1939
      %v1941 = vpop.f32.mrb[0].mxu0
      %v1942 = vpop.f32.mrb[0].mxu0
      %v1943 = vadd.f32 0.0, %v1942
      %v1944 = vpop.f32.mrb[0].mxu0
      %1945 = vmatprep.mubr.bf16.mxu0 0
      %1946 = vmatmul.mubr.bf16.gmra.mrb[0].mxu0 %v1800
      %v1947 = vpop.f32.mrb[0].mxu0
      %v1948 = vadd.f32 0.0, %v1947
      %v1949 = vpop.f32.mrb[0].mxu0
      %v1950 = vpop.f32.mrb[0].mxu0
      %v1951 = vadd.f32 0.0, %v1950
      %v1952 = vpop.f32.mrb[0].mxu0
      %1953 = vdwg.mxu0
      %v1954 = vadd.f32 %v1631, %v1892
      %v1955 = vadd.f32 %v1634, %v1895
      %v1956 = vadd.f32 %v1639, %v1900
      %v1957 = vadd.f32 %v1642, %v1903
      %v1958 = vadd.f32 %v1647, %v1908
      %v1959 = vadd.f32 %v1650, %v1911
      %v1960 = vadd.f32 %v1655, %v1916
      %v1961 = vadd.f32 %v1658, %v1919
      %v1962 = vadd.f32 %v1663, %v1924
      %v1963 = vadd.f32 %v1666, %v1927
      %v1964 = vadd.f32 %v1671, %v1932
      %v1965 = vadd.f32 %v1674, %v1935
      %v1966 = vadd.f32 %v1679, %v1940
      %v1967 = vadd.f32 %v1682, %v1943
      %v1968 = vadd.f32 %v1687, %v1948
      %v1969 = vadd.f32 %v1690, %v1951
      %s1970 = scalar_lea.vmem %s3, 192
      %v1971 = vld [vmem:[%s1970] sm:$0xf]
      %v1972 = vld [vmem:[%s1970 + $0x4] sm:$0xf]
      %v1973 = vld [vmem:[%s1970 + $0x8] sm:$0xf]
      %v1974 = vld [vmem:[%s1970 + $0xc] sm:$0xf]
      %v1975 = vld [vmem:[%s1970 + $0x10] sm:$0xf]
      %v1976 = vld [vmem:[%s1970 + $0x14] sm:$0xf]
      %v1977 = vld [vmem:[%s1970 + $0x18] sm:$0xf]
      %v1978 = vld [vmem:[%s1970 + $0x1c] sm:$0xf]
      %v1979 = vld [vmem:[%s1970 + $0x20] sm:$0xf]
      %v1980 = vld [vmem:[%s1970 + $0x24] sm:$0xf]
      %v1981 = vld [vmem:[%s1970 + $0x28] sm:$0xf]
      %v1982 = vld [vmem:[%s1970 + $0x2c] sm:$0xf]
      %v1983 = vld [vmem:[%s1970 + $0x30] sm:$0xf]
      %v1984 = vld [vmem:[%s1970 + $0x34] sm:$0xf]
      %v1985 = vld [vmem:[%s1970 + $0x38] sm:$0xf]
      %v1986 = vld [vmem:[%s1970 + $0x3c] sm:$0xf]
      %v1989 = vunpack.c.l.b16 %v1089
      %v1990 = vunpack.c.l.b16 %v1090
      %v1991 = vpack.c.b16 %v1990, %v1989
      %v2009 = vunpack.c.l.b16 %v1971
      %v2010 = vunpack.c.l.b16 %v1972
      %v2011 = vunpack.c.l.b16 %v1973
      %v2012 = vunpack.c.l.b16 %v1974
      %v2013 = vunpack.c.l.b16 %v1975
      %v2014 = vunpack.c.l.b16 %v1976
      %v2015 = vunpack.c.l.b16 %v1977
      %v2016 = vunpack.c.l.b16 %v1978
      %v2017 = vunpack.c.l.b16 %v1979
      %v2018 = vunpack.c.l.b16 %v1980
      %v2019 = vunpack.c.l.b16 %v1981
      %v2020 = vunpack.c.l.b16 %v1982
      %v2021 = vunpack.c.l.b16 %v1983
      %v2022 = vunpack.c.l.b16 %v1984
      %v2023 = vunpack.c.l.b16 %v1985
      %v2024 = vunpack.c.l.b16 %v1986
      %v2025 = vpack.c.b16 %v2010, %v2009
      %v2026 = vpack.c.b16 %v2012, %v2011
      %v2027 = vpack.c.b16 %v2014, %v2013
      %v2028 = vpack.c.b16 %v2016, %v2015
      %v2029 = vpack.c.b16 %v2018, %v2017
      %v2030 = vpack.c.b16 %v2020, %v2019
      %v2031 = vpack.c.b16 %v2022, %v2021
      %v2032 = vpack.c.b16 %v2024, %v2023
      %2041 = vmatprep.subr.bf16.mxu0 0
      %2042 = vmatpush1.bf16.msra.mxu0 %v2025
      %2043 = vmatprep.subr.bf16.mxu0 0
      %2044 = vmatpush1.bf16.msra.mxu0 %v2026
      %2045 = vmatprep.subr.bf16.mxu0 0
      %2046 = vmatpush1.bf16.msra.mxu0 %v2027
      %2047 = vmatprep.subr.bf16.mxu0 0
      %2048 = vmatpush1.bf16.msra.mxu0 %v2028
      %2049 = vmatprep.subr.bf16.mxu0 0
      %2050 = vmatpush1.bf16.msra.mxu0 %v2029
      %2051 = vmatprep.subr.bf16.mxu0 0
      %2052 = vmatpush1.bf16.msra.mxu0 %v2030
      %2053 = vmatprep.subr.bf16.mxu0 0
      %2054 = vmatpush1.bf16.msra.mxu0 %v2031
      %2055 = vmatprep.subr.bf16.mxu0 0
      %2056 = vmatpush1.bf16.msra.mxu0 %v2032
      %2057 = vmatprep.subr.bf16.mxu0 0
      %2058 = vmatpush1.bf16.msra.mxu0 0
      %2059 = vmatprep.subr.bf16.mxu0 0
      %2060 = vmatpush1.bf16.msra.mxu0 0
      %2061 = vmatprep.subr.bf16.mxu0 0
      %2062 = vmatpush1.bf16.msra.mxu0 0
      %2063 = vmatprep.subr.bf16.mxu0 0
      %2064 = vmatpush1.bf16.msra.mxu0 0
      %2065 = vmatprep.subr.bf16.mxu0 0
      %2066 = vmatpush1.bf16.msra.mxu0 0
      %2067 = vmatprep.subr.bf16.mxu0 0
      %2068 = vmatpush1.bf16.msra.mxu0 0
      %2069 = vmatprep.subr.bf16.mxu0 0
      %2070 = vmatpush1.bf16.msra.mxu0 0
      %2071 = vmatprep.subr.bf16.mxu0 0
      %2072 = vmatpush1.bf16.msra.mxu0 0
      %2073 = vmatprep.mubr.bf16.mxu0 0
      %2074 = vmatmul.mubr.bf16.gmra.mrb[0].mxu0 %v1533
      %v2075 = vpop.f32.mrb[0].mxu0
      %v2076 = vadd.f32 0.0, %v2075
      %v2077 = vpop.f32.mrb[0].mxu0
      %v2078 = vpop.f32.mrb[0].mxu0
      %v2079 = vadd.f32 0.0, %v2078
      %v2080 = vpop.f32.mrb[0].mxu0
      %2081 = vmatprep.mubr.bf16.mxu0 0
      %2082 = vmatmul.mubr.bf16.gmra.mrb[0].mxu0 %v1534
      %v2083 = vpop.f32.mrb[0].mxu0
      %v2084 = vadd.f32 0.0, %v2083
      %v2085 = vpop.f32.mrb[0].mxu0
      %v2086 = vpop.f32.mrb[0].mxu0
      %v2087 = vadd.f32 0.0, %v2086
      %v2088 = vpop.f32.mrb[0].mxu0
      %2089 = vmatprep.mubr.bf16.mxu0 0
      %2090 = vmatmul.mubr.bf16.gmra.mrb[0].mxu0 %v1535
      %v2091 = vpop.f32.mrb[0].mxu0
      %v2092 = vadd.f32 0.0, %v2091
      %v2093 = vpop.f32.mrb[0].mxu0
      %v2094 = vpop.f32.mrb[0].mxu0
      %v2095 = vadd.f32 0.0, %v2094
      %v2096 = vpop.f32.mrb[0].mxu0
      %2097 = vmatprep.mubr.bf16.mxu0 0
      %2098 = vmatmul.mubr.bf16.gmra.mrb[0].mxu0 %v1536
      %v2099 = vpop.f32.mrb[0].mxu0
      %v2100 = vadd.f32 0.0, %v2099
      %v2101 = vpop.f32.mrb[0].mxu0
      %v2102 = vpop.f32.mrb[0].mxu0
      %v2103 = vadd.f32 0.0, %v2102
      %v2104 = vpop.f32.mrb[0].mxu0
      %2105 = vmatprep.mubr.bf16.mxu0 0
      %2106 = vmatmul.mubr.bf16.gmra.mrb[0].mxu0 %v1537
      %v2107 = vpop.f32.mrb[0].mxu0
      %v2108 = vadd.f32 0.0, %v2107
      %v2109 = vpop.f32.mrb[0].mxu0
      %v2110 = vpop.f32.mrb[0].mxu0
      %v2111 = vadd.f32 0.0, %v2110
      %v2112 = vpop.f32.mrb[0].mxu0
      %2113 = vmatprep.mubr.bf16.mxu0 0
      %2114 = vmatmul.mubr.bf16.gmra.mrb[0].mxu0 %v1538
      %v2115 = vpop.f32.mrb[0].mxu0
      %v2116 = vadd.f32 0.0, %v2115
      %v2117 = vpop.f32.mrb[0].mxu0
      %v2118 = vpop.f32.mrb[0].mxu0
      %v2119 = vadd.f32 0.0, %v2118
      %v2120 = vpop.f32.mrb[0].mxu0
      %2121 = vmatprep.mubr.bf16.mxu0 0
      %2122 = vmatmul.mubr.bf16.gmra.mrb[0].mxu0 %v1539
      %v2123 = vpop.f32.mrb[0].mxu0
      %v2124 = vadd.f32 0.0, %v2123
      %v2125 = vpop.f32.mrb[0].mxu0
      %v2126 = vpop.f32.mrb[0].mxu0
      %v2127 = vadd.f32 0.0, %v2126
      %v2128 = vpop.f32.mrb[0].mxu0
      %2129 = vmatprep.mubr.bf16.mxu0 0
      %2130 = vmatmul.mubr.bf16.gmra.mrb[0].mxu0 %v1991
      %v2131 = vpop.f32.mrb[0].mxu0
      %v2132 = vadd.f32 0.0, %v2131
      %v2133 = vpop.f32.mrb[0].mxu0
      %v2134 = vpop.f32.mrb[0].mxu0
      %v2135 = vadd.f32 0.0, %v2134
      %v2136 = vpop.f32.mrb[0].mxu0
      %2137 = vdwg.mxu0
      %v2138 = vadd.f32 %v1954, %v2076
      %v2139 = vadd.f32 %v1955, %v2079
      %v2140 = vadd.f32 %v1956, %v2084
      %v2141 = vadd.f32 %v1957, %v2087
      %v2142 = vadd.f32 %v1958, %v2092
      %v2143 = vadd.f32 %v1959, %v2095
      %v2144 = vadd.f32 %v1960, %v2100
      %v2145 = vadd.f32 %v1961, %v2103
      %v2146 = vadd.f32 %v1962, %v2108
      %v2147 = vadd.f32 %v1963, %v2111
      %v2148 = vadd.f32 %v1964, %v2116
      %v2149 = vadd.f32 %v1965, %v2119
      %v2150 = vadd.f32 %v1966, %v2124
      %v2151 = vadd.f32 %v1967, %v2127
      %v2152 = vadd.f32 %v1968, %v2132
      %v2153 = vadd.f32 %v1969, %v2135
      %v2155 = vshrl.u32 %v1089, 16
      %v2157 = vrot.slane %v2155, 4
      %v2158 = vshll.u32 %v1089, 16
      %v2160 = vrot.slane %v2158, 5
      %v2161 = vor.u32 %v2157, %v2160
      %v2162 = vrot.slane %v2161, 4
      %v2164 = vshll.u32 %v1090, 16
      %v2166 = vrot.slane %v2164, 5
      %v2167 = vsel %vm1113, %v2162, %v2166
      %v2168 = vshrl.u32 %v1090, 16
      %v2170 = vrot.slane %v2168, 4
      %v2171 = vor.u32 %v2170, %v2166
      %v2172 = vrot.slane %v2171, 4
      %v2174 = vshll.u32 %v1091, 16
      %v2176 = vrot.slane %v2174, 5
      %v2177 = vsel %vm1113, %v2172, %v2176
      %s2178 = scalar_lea.vmem %s3, 256
      %v2179 = vld [vmem:[%s2178] sm:$0xf]
      %v2180 = vld [vmem:[%s2178 + $0x4] sm:$0xf]
      %v2181 = vld [vmem:[%s2178 + $0x8] sm:$0xf]
      %v2182 = vld [vmem:[%s2178 + $0xc] sm:$0xf]
      %v2183 = vld [vmem:[%s2178 + $0x10] sm:$0xf]
      %v2184 = vld [vmem:[%s2178 + $0x14] sm:$0xf]
      %v2185 = vld [vmem:[%s2178 + $0x18] sm:$0xf]
      %v2186 = vld [vmem:[%s2178 + $0x1c] sm:$0xf]
      %v2187 = vld [vmem:[%s2178 + $0x20] sm:$0xf]
      %v2188 = vld [vmem:[%s2178 + $0x24] sm:$0xf]
      %v2189 = vld [vmem:[%s2178 + $0x28] sm:$0xf]
      %v2190 = vld [vmem:[%s2178 + $0x2c] sm:$0xf]
      %v2191 = vld [vmem:[%s2178 + $0x30] sm:$0xf]
      %v2192 = vld [vmem:[%s2178 + $0x34] sm:$0xf]
      %v2193 = vld [vmem:[%s2178 + $0x38] sm:$0xf]
      %v2194 = vld [vmem:[%s2178 + $0x3c] sm:$0xf]
      %v2195 = vunpack.c.l.b16 %v2167
      %v2196 = vunpack.c.l.b16 %v2177
      %v2197 = vpack.c.b16 %v2196, %v2195
      %v2215 = vunpack.c.l.b16 %v2179
      %v2216 = vunpack.c.l.b16 %v2180
      %v2217 = vunpack.c.l.b16 %v2181
      %v2218 = vunpack.c.l.b16 %v2182
      %v2219 = vunpack.c.l.b16 %v2183
      %v2220 = vunpack.c.l.b16 %v2184
      %v2221 = vunpack.c.l.b16 %v2185
      %v2222 = vunpack.c.l.b16 %v2186
      %v2223 = vunpack.c.l.b16 %v2187
      %v2224 = vunpack.c.l.b16 %v2188
      %v2225 = vunpack.c.l.b16 %v2189
      %v2226 = vunpack.c.l.b16 %v2190
      %v2227 = vunpack.c.l.b16 %v2191
      %v2228 = vunpack.c.l.b16 %v2192
      %v2229 = vunpack.c.l.b16 %v2193
      %v2230 = vunpack.c.l.b16 %v2194
      %v2231 = vpack.c.b16 %v2216, %v2215
      %v2232 = vpack.c.b16 %v2218, %v2217
      %v2233 = vpack.c.b16 %v2220, %v2219
      %v2234 = vpack.c.b16 %v2222, %v2221
      %v2235 = vpack.c.b16 %v2224, %v2223
      %v2236 = vpack.c.b16 %v2226, %v2225
      %v2237 = vpack.c.b16 %v2228, %v2227
      %v2238 = vpack.c.b16 %v2230, %v2229
      %2247 = vmatprep.subr.bf16.mxu0 0
      %2248 = vmatpush1.bf16.msra.mxu0 %v2231
      %2249 = vmatprep.subr.bf16.mxu0 0
      %2250 = vmatpush1.bf16.msra.mxu0 %v2232
      %2251 = vmatprep.subr.bf16.mxu0 0
      %2252 = vmatpush1.bf16.msra.mxu0 %v2233
      %2253 = vmatprep.subr.bf16.mxu0 0
      %2254 = vmatpush1.bf16.msra.mxu0 %v2234
      %2255 = vmatprep.subr.bf16.mxu0 0
      %2256 = vmatpush1.bf16.msra.mxu0 %v2235
      %2257 = vmatprep.subr.bf16.mxu0 0
      %2258 = vmatpush1.bf16.msra.mxu0 %v2236
      %2259 = vmatprep.subr.bf16.mxu0 0
      %2260 = vmatpush1.bf16.msra.mxu0 %v2237
      %2261 = vmatprep.subr.bf16.mxu0 0
      %2262 = vmatpush1.bf16.msra.mxu0 %v2238
      %2263 = vmatprep.subr.bf16.mxu0 0
      %2264 = vmatpush1.bf16.msra.mxu0 0
      %2265 = vmatprep.subr.bf16.mxu0 0
      %2266 = vmatpush1.bf16.msra.mxu0 0
      %2267 = vmatprep.subr.bf16.mxu0 0
      %2268 = vmatpush1.bf16.msra.mxu0 0
      %2269 = vmatprep.subr.bf16.mxu0 0
      %2270 = vmatpush1.bf16.msra.mxu0 0
      %2271 = vmatprep.subr.bf16.mxu0 0
      %2272 = vmatpush1.bf16.msra.mxu0 0
      %2273 = vmatprep.subr.bf16.mxu0 0
      %2274 = vmatpush1.bf16.msra.mxu0 0
      %2275 = vmatprep.subr.bf16.mxu0 0
      %2276 = vmatpush1.bf16.msra.mxu0 0
      %2277 = vmatprep.subr.bf16.mxu0 0
      %2278 = vmatpush1.bf16.msra.mxu0 0
      %2279 = vmatprep.mubr.bf16.mxu0 0
      %2280 = vmatmul.mubr.bf16.gmra.mrb[0].mxu0 %v1340
      %v2281 = vpop.f32.mrb[0].mxu0
      %v2282 = vadd.f32 0.0, %v2281
      %v2283 = vpop.f32.mrb[0].mxu0
      %v2284 = vpop.f32.mrb[0].mxu0
      %v2285 = vadd.f32 0.0, %v2284
      %v2286 = vpop.f32.mrb[0].mxu0
      %2287 = vmatprep.mubr.bf16.mxu0 0
      %2288 = vmatmul.mubr.bf16.gmra.mrb[0].mxu0 %v1341
      %v2289 = vpop.f32.mrb[0].mxu0
      %v2290 = vadd.f32 0.0, %v2289
      %v2291 = vpop.f32.mrb[0].mxu0
      %v2292 = vpop.f32.mrb[0].mxu0
      %v2293 = vadd.f32 0.0, %v2292
      %v2294 = vpop.f32.mrb[0].mxu0
      %2295 = vmatprep.mubr.bf16.mxu0 0
      %2296 = vmatmul.mubr.bf16.gmra.mrb[0].mxu0 %v1342
      %v2297 = vpop.f32.mrb[0].mxu0
      %v2298 = vadd.f32 0.0, %v2297
      %v2299 = vpop.f32.mrb[0].mxu0
      %v2300 = vpop.f32.mrb[0].mxu0
      %v2301 = vadd.f32 0.0, %v2300
      %v2302 = vpop.f32.mrb[0].mxu0
      %2303 = vmatprep.mubr.bf16.mxu0 0
      %2304 = vmatmul.mubr.bf16.gmra.mrb[0].mxu0 %v1343
      %v2305 = vpop.f32.mrb[0].mxu0
      %v2306 = vadd.f32 0.0, %v2305
      %v2307 = vpop.f32.mrb[0].mxu0
      %v2308 = vpop.f32.mrb[0].mxu0
      %v2309 = vadd.f32 0.0, %v2308
      %v2310 = vpop.f32.mrb[0].mxu0
      %2311 = vmatprep.mubr.bf16.mxu0 0
      %2312 = vmatmul.mubr.bf16.gmra.mrb[0].mxu0 %v1344
      %v2313 = vpop.f32.mrb[0].mxu0
      %v2314 = vadd.f32 0.0, %v2313
      %v2315 = vpop.f32.mrb[0].mxu0
      %v2316 = vpop.f32.mrb[0].mxu0
      %v2317 = vadd.f32 0.0, %v2316
      %v2318 = vpop.f32.mrb[0].mxu0
      %2319 = vmatprep.mubr.bf16.mxu0 0
      %2320 = vmatmul.mubr.bf16.gmra.mrb[0].mxu0 %v1345
      %v2321 = vpop.f32.mrb[0].mxu0
      %v2322 = vadd.f32 0.0, %v2321
      %v2323 = vpop.f32.mrb[0].mxu0
      %v2324 = vpop.f32.mrb[0].mxu0
      %v2325 = vadd.f32 0.0, %v2324
      %v2326 = vpop.f32.mrb[0].mxu0
      %2327 = vmatprep.mubr.bf16.mxu0 0
      %2328 = vmatmul.mubr.bf16.gmra.mrb[0].mxu0 %v1346
      %v2329 = vpop.f32.mrb[0].mxu0
      %v2330 = vadd.f32 0.0, %v2329
      %v2331 = vpop.f32.mrb[0].mxu0
      %v2332 = vpop.f32.mrb[0].mxu0
      %v2333 = vadd.f32 0.0, %v2332
      %v2334 = vpop.f32.mrb[0].mxu0
      %2335 = vmatprep.mubr.bf16.mxu0 0
      %2336 = vmatmul.mubr.bf16.gmra.mrb[0].mxu0 %v2197
      %v2337 = vpop.f32.mrb[0].mxu0
      %v2338 = vadd.f32 0.0, %v2337
      %v2339 = vpop.f32.mrb[0].mxu0
      %v2340 = vpop.f32.mrb[0].mxu0
      %v2341 = vadd.f32 0.0, %v2340
      %v2342 = vpop.f32.mrb[0].mxu0
      %2343 = vdwg.mxu0
      %v2344 = vadd.f32 %v2138, %v2282
      %v2345 = vadd.f32 %v2139, %v2285
      %v2346 = vadd.f32 %v2140, %v2290
      %v2347 = vadd.f32 %v2141, %v2293
      %v2348 = vadd.f32 %v2142, %v2298
      %v2349 = vadd.f32 %v2143, %v2301
      %v2350 = vadd.f32 %v2144, %v2306
      %v2351 = vadd.f32 %v2145, %v2309
      %v2352 = vadd.f32 %v2146, %v2314
      %v2353 = vadd.f32 %v2147, %v2317
      %v2354 = vadd.f32 %v2148, %v2322
      %v2355 = vadd.f32 %v2149, %v2325
      %v2356 = vadd.f32 %v2150, %v2330
      %v2357 = vadd.f32 %v2151, %v2333
      %v2358 = vadd.f32 %v2152, %v2338
      %v2359 = vadd.f32 %v2153, %v2341
      %v2361 = vrot.slane %v1089, 5
      %v2362 = vrot.slane %v2361, 4
      %v2363 = vrot.slane %v1090, 5
      %v2364 = vsel %vm1703, %v2362, %v2363
      %v2365 = vrot.slane %v2363, 4
      %v2366 = vrot.slane %v1091, 5
      %v2367 = vsel %vm1703, %v2365, %v2366
      %s2368 = scalar_lea.vmem %s3, 320
      %v2369 = vld [vmem:[%s2368] sm:$0xf]
      %v2370 = vld [vmem:[%s2368 + $0x4] sm:$0xf]
      %v2371 = vld [vmem:[%s2368 + $0x8] sm:$0xf]
      %v2372 = vld [vmem:[%s2368 + $0xc] sm:$0xf]
      %v2373 = vld [vmem:[%s2368 + $0x10] sm:$0xf]
      %v2374 = vld [vmem:[%s2368 + $0x14] sm:$0xf]
      %v2375 = vld [vmem:[%s2368 + $0x18] sm:$0xf]
      %v2376 = vld [vmem:[%s2368 + $0x1c] sm:$0xf]
      %v2377 = vld [vmem:[%s2368 + $0x20] sm:$0xf]
      %v2378 = vld [vmem:[%s2368 + $0x24] sm:$0xf]
      %v2379 = vld [vmem:[%s2368 + $0x28] sm:$0xf]
      %v2380 = vld [vmem:[%s2368 + $0x2c] sm:$0xf]
      %v2381 = vld [vmem:[%s2368 + $0x30] sm:$0xf]
      %v2382 = vld [vmem:[%s2368 + $0x34] sm:$0xf]
      %v2383 = vld [vmem:[%s2368 + $0x38] sm:$0xf]
      %v2384 = vld [vmem:[%s2368 + $0x3c] sm:$0xf]
      %v2385 = vunpack.c.l.b16 %v2364
      %v2386 = vunpack.c.l.b16 %v2367
      %v2387 = vpack.c.b16 %v2386, %v2385
      %v2405 = vunpack.c.l.b16 %v2369
      %v2406 = vunpack.c.l.b16 %v2370
      %v2407 = vunpack.c.l.b16 %v2371
      %v2408 = vunpack.c.l.b16 %v2372
      %v2409 = vunpack.c.l.b16 %v2373
      %v2410 = vunpack.c.l.b16 %v2374
      %v2411 = vunpack.c.l.b16 %v2375
      %v2412 = vunpack.c.l.b16 %v2376
      %v2413 = vunpack.c.l.b16 %v2377
      %v2414 = vunpack.c.l.b16 %v2378
      %v2415 = vunpack.c.l.b16 %v2379
      %v2416 = vunpack.c.l.b16 %v2380
      %v2417 = vunpack.c.l.b16 %v2381
      %v2418 = vunpack.c.l.b16 %v2382
      %v2419 = vunpack.c.l.b16 %v2383
      %v2420 = vunpack.c.l.b16 %v2384
      %v2421 = vpack.c.b16 %v2406, %v2405
      %v2422 = vpack.c.b16 %v2408, %v2407
      %v2423 = vpack.c.b16 %v2410, %v2409
      %v2424 = vpack.c.b16 %v2412, %v2411
      %v2425 = vpack.c.b16 %v2414, %v2413
      %v2426 = vpack.c.b16 %v2416, %v2415
      %v2427 = vpack.c.b16 %v2418, %v2417
      %v2428 = vpack.c.b16 %v2420, %v2419
      %2437 = vmatprep.subr.bf16.mxu0 0
      %2438 = vmatpush1.bf16.msra.mxu0 %v2421
      %2439 = vmatprep.subr.bf16.mxu0 0
      %2440 = vmatpush1.bf16.msra.mxu0 %v2422
      %2441 = vmatprep.subr.bf16.mxu0 0
      %2442 = vmatpush1.bf16.msra.mxu0 %v2423
      %2443 = vmatprep.subr.bf16.mxu0 0
      %2444 = vmatpush1.bf16.msra.mxu0 %v2424
      %2445 = vmatprep.subr.bf16.mxu0 0
      %2446 = vmatpush1.bf16.msra.mxu0 %v2425
      %2447 = vmatprep.subr.bf16.mxu0 0
      %2448 = vmatpush1.bf16.msra.mxu0 %v2426
      %2449 = vmatprep.subr.bf16.mxu0 0
      %2450 = vmatpush1.bf16.msra.mxu0 %v2427
      %2451 = vmatprep.subr.bf16.mxu0 0
      %2452 = vmatpush1.bf16.msra.mxu0 %v2428
      %2453 = vmatprep.subr.bf16.mxu0 0
      %2454 = vmatpush1.bf16.msra.mxu0 0
      %2455 = vmatprep.subr.bf16.mxu0 0
      %2456 = vmatpush1.bf16.msra.mxu0 0
      %2457 = vmatprep.subr.bf16.mxu0 0
      %2458 = vmatpush1.bf16.msra.mxu0 0
      %2459 = vmatprep.subr.bf16.mxu0 0
      %2460 = vmatpush1.bf16.msra.mxu0 0
      %2461 = vmatprep.subr.bf16.mxu0 0
      %2462 = vmatpush1.bf16.msra.mxu0 0
      %2463 = vmatprep.subr.bf16.mxu0 0
      %2464 = vmatpush1.bf16.msra.mxu0 0
      %2465 = vmatprep.subr.bf16.mxu0 0
      %2466 = vmatpush1.bf16.msra.mxu0 0
      %2467 = vmatprep.subr.bf16.mxu0 0
      %2468 = vmatpush1.bf16.msra.mxu0 0
      %2469 = vmatprep.mubr.bf16.mxu0 0
      %2470 = vmatmul.mubr.bf16.gmra.mrb[0].mxu0 %v1794
      %v2471 = vpop.f32.mrb[0].mxu0
      %v2472 = vadd.f32 0.0, %v2471
      %v2473 = vpop.f32.mrb[0].mxu0
      %v2474 = vpop.f32.mrb[0].mxu0
      %v2475 = vadd.f32 0.0, %v2474
      %v2476 = vpop.f32.mrb[0].mxu0
      %2477 = vmatprep.mubr.bf16.mxu0 0
      %2478 = vmatmul.mubr.bf16.gmra.mrb[0].mxu0 %v1795
      %v2479 = vpop.f32.mrb[0].mxu0
      %v2480 = vadd.f32 0.0, %v2479
      %v2481 = vpop.f32.mrb[0].mxu0
      %v2482 = vpop.f32.mrb[0].mxu0
      %v2483 = vadd.f32 0.0, %v2482
      %v2484 = vpop.f32.mrb[0].mxu0
      %2485 = vmatprep.mubr.bf16.mxu0 0
      %2486 = vmatmul.mubr.bf16.gmra.mrb[0].mxu0 %v1796
      %v2487 = vpop.f32.mrb[0].mxu0
      %v2488 = vadd.f32 0.0, %v2487
      %v2489 = vpop.f32.mrb[0].mxu0
      %v2490 = vpop.f32.mrb[0].mxu0
      %v2491 = vadd.f32 0.0, %v2490
      %v2492 = vpop.f32.mrb[0].mxu0
      %2493 = vmatprep.mubr.bf16.mxu0 0
      %2494 = vmatmul.mubr.bf16.gmra.mrb[0].mxu0 %v1797
      %v2495 = vpop.f32.mrb[0].mxu0
      %v2496 = vadd.f32 0.0, %v2495
      %v2497 = vpop.f32.mrb[0].mxu0
      %v2498 = vpop.f32.mrb[0].mxu0
      %v2499 = vadd.f32 0.0, %v2498
      %v2500 = vpop.f32.mrb[0].mxu0
      %2501 = vmatprep.mubr.bf16.mxu0 0
      %2502 = vmatmul.mubr.bf16.gmra.mrb[0].mxu0 %v1798
      %v2503 = vpop.f32.mrb[0].mxu0
      %v2504 = vadd.f32 0.0, %v2503
      %v2505 = vpop.f32.mrb[0].mxu0
      %v2506 = vpop.f32.mrb[0].mxu0
      %v2507 = vadd.f32 0.0, %v2506
      %v2508 = vpop.f32.mrb[0].mxu0
      %2509 = vmatprep.mubr.bf16.mxu0 0
      %2510 = vmatmul.mubr.bf16.gmra.mrb[0].mxu0 %v1799
      %v2511 = vpop.f32.mrb[0].mxu0
      %v2512 = vadd.f32 0.0, %v2511
      %v2513 = vpop.f32.mrb[0].mxu0
      %v2514 = vpop.f32.mrb[0].mxu0
      %v2515 = vadd.f32 0.0, %v2514
      %v2516 = vpop.f32.mrb[0].mxu0
      %2517 = vmatprep.mubr.bf16.mxu0 0
      %2518 = vmatmul.mubr.bf16.gmra.mrb[0].mxu0 %v1800
      %v2519 = vpop.f32.mrb[0].mxu0
      %v2520 = vadd.f32 0.0, %v2519
      %v2521 = vpop.f32.mrb[0].mxu0
      %v2522 = vpop.f32.mrb[0].mxu0
      %v2523 = vadd.f32 0.0, %v2522
      %v2524 = vpop.f32.mrb[0].mxu0
      %2525 = vmatprep.mubr.bf16.mxu0 0
      %2526 = vmatmul.mubr.bf16.gmra.mrb[0].mxu0 %v2387
      %v2527 = vpop.f32.mrb[0].mxu0
      %v2528 = vadd.f32 0.0, %v2527
      %v2529 = vpop.f32.mrb[0].mxu0
      %v2530 = vpop.f32.mrb[0].mxu0
      %v2531 = vadd.f32 0.0, %v2530
      %v2532 = vpop.f32.mrb[0].mxu0
      %2533 = vdwg.mxu0
      %v2534 = vadd.f32 %v2344, %v2472
      %v2535 = vadd.f32 %v2345, %v2475
      %v2536 = vadd.f32 %v2346, %v2480
      %v2537 = vadd.f32 %v2347, %v2483
      %v2538 = vadd.f32 %v2348, %v2488
      %v2539 = vadd.f32 %v2349, %v2491
      %v2540 = vadd.f32 %v2350, %v2496
      %v2541 = vadd.f32 %v2351, %v2499
      %v2542 = vadd.f32 %v2352, %v2504
      %v2543 = vadd.f32 %v2353, %v2507
      %v2544 = vadd.f32 %v2354, %v2512
      %v2545 = vadd.f32 %v2355, %v2515
      %v2546 = vadd.f32 %v2356, %v2520
      %v2547 = vadd.f32 %v2357, %v2523
      %v2548 = vadd.f32 %v2358, %v2528
      %v2549 = vadd.f32 %v2359, %v2531
      %s2550 = scalar_lea.vmem %s3, 384
      %v2551 = vld [vmem:[%s2550] sm:$0xf]
      %v2552 = vld [vmem:[%s2550 + $0x4] sm:$0xf]
      %v2553 = vld [vmem:[%s2550 + $0x8] sm:$0xf]
      %v2554 = vld [vmem:[%s2550 + $0xc] sm:$0xf]
      %v2555 = vld [vmem:[%s2550 + $0x10] sm:$0xf]
      %v2556 = vld [vmem:[%s2550 + $0x14] sm:$0xf]
      %v2557 = vld [vmem:[%s2550 + $0x18] sm:$0xf]
      %v2558 = vld [vmem:[%s2550 + $0x1c] sm:$0xf]
      %v2559 = vld [vmem:[%s2550 + $0x20] sm:$0xf]
      %v2560 = vld [vmem:[%s2550 + $0x24] sm:$0xf]
      %v2561 = vld [vmem:[%s2550 + $0x28] sm:$0xf]
      %v2562 = vld [vmem:[%s2550 + $0x2c] sm:$0xf]
      %v2563 = vld [vmem:[%s2550 + $0x30] sm:$0xf]
      %v2564 = vld [vmem:[%s2550 + $0x34] sm:$0xf]
      %v2565 = vld [vmem:[%s2550 + $0x38] sm:$0xf]
      %v2566 = vld [vmem:[%s2550 + $0x3c] sm:$0xf]
      %v2569 = vunpack.c.l.b16 %v1092
      %v2570 = vunpack.c.l.b16 %v1093
      %v2571 = vpack.c.b16 %v2570, %v2569
      %v2589 = vunpack.c.l.b16 %v2551
      %v2590 = vunpack.c.l.b16 %v2552
      %v2591 = vunpack.c.l.b16 %v2553
      %v2592 = vunpack.c.l.b16 %v2554
      %v2593 = vunpack.c.l.b16 %v2555
      %v2594 = vunpack.c.l.b16 %v2556
      %v2595 = vunpack.c.l.b16 %v2557
      %v2596 = vunpack.c.l.b16 %v2558
      %v2597 = vunpack.c.l.b16 %v2559
      %v2598 = vunpack.c.l.b16 %v2560
      %v2599 = vunpack.c.l.b16 %v2561
      %v2600 = vunpack.c.l.b16 %v2562
      %v2601 = vunpack.c.l.b16 %v2563
      %v2602 = vunpack.c.l.b16 %v2564
      %v2603 = vunpack.c.l.b16 %v2565
      %v2604 = vunpack.c.l.b16 %v2566
      %v2605 = vpack.c.b16 %v2590, %v2589
      %v2606 = vpack.c.b16 %v2592, %v2591
      %v2607 = vpack.c.b16 %v2594, %v2593
      %v2608 = vpack.c.b16 %v2596, %v2595
      %v2609 = vpack.c.b16 %v2598, %v2597
      %v2610 = vpack.c.b16 %v2600, %v2599
      %v2611 = vpack.c.b16 %v2602, %v2601
      %v2612 = vpack.c.b16 %v2604, %v2603
      %2621 = vmatprep.subr.bf16.mxu0 0
      %2622 = vmatpush1.bf16.msra.mxu0 %v2605
      %2623 = vmatprep.subr.bf16.mxu0 0
      %2624 = vmatpush1.bf16.msra.mxu0 %v2606
      %2625 = vmatprep.subr.bf16.mxu0 0
      %2626 = vmatpush1.bf16.msra.mxu0 %v2607
      %2627 = vmatprep.subr.bf16.mxu0 0
      %2628 = vmatpush1.bf16.msra.mxu0 %v2608
      %2629 = vmatprep.subr.bf16.mxu0 0
      %2630 = vmatpush1.bf16.msra.mxu0 %v2609
      %2631 = vmatprep.subr.bf16.mxu0 0
      %2632 = vmatpush1.bf16.msra.mxu0 %v2610
      %2633 = vmatprep.subr.bf16.mxu0 0
      %2634 = vmatpush1.bf16.msra.mxu0 %v2611
      %2635 = vmatprep.subr.bf16.mxu0 0
      %2636 = vmatpush1.bf16.msra.mxu0 %v2612
      %2637 = vmatprep.subr.bf16.mxu0 0
      %2638 = vmatpush1.bf16.msra.mxu0 0
      %2639 = vmatprep.subr.bf16.mxu0 0
      %2640 = vmatpush1.bf16.msra.mxu0 0
      %2641 = vmatprep.subr.bf16.mxu0 0
      %2642 = vmatpush1.bf16.msra.mxu0 0
      %2643 = vmatprep.subr.bf16.mxu0 0
      %2644 = vmatpush1.bf16.msra.mxu0 0
      %2645 = vmatprep.subr.bf16.mxu0 0
      %2646 = vmatpush1.bf16.msra.mxu0 0
      %2647 = vmatprep.subr.bf16.mxu0 0
      %2648 = vmatpush1.bf16.msra.mxu0 0
      %2649 = vmatprep.subr.bf16.mxu0 0
      %2650 = vmatpush1.bf16.msra.mxu0 0
      %2651 = vmatprep.subr.bf16.mxu0 0
      %2652 = vmatpush1.bf16.msra.mxu0 0
      %2653 = vmatprep.mubr.bf16.mxu0 0
      %2654 = vmatmul.mubr.bf16.gmra.mrb[0].mxu0 %v1534
      %v2655 = vpop.f32.mrb[0].mxu0
      %v2656 = vadd.f32 0.0, %v2655
      %v2657 = vpop.f32.mrb[0].mxu0
      %v2658 = vpop.f32.mrb[0].mxu0
      %v2659 = vadd.f32 0.0, %v2658
      %v2660 = vpop.f32.mrb[0].mxu0
      %2661 = vmatprep.mubr.bf16.mxu0 0
      %2662 = vmatmul.mubr.bf16.gmra.mrb[0].mxu0 %v1535
      %v2663 = vpop.f32.mrb[0].mxu0
      %v2664 = vadd.f32 0.0, %v2663
      %v2665 = vpop.f32.mrb[0].mxu0
      %v2666 = vpop.f32.mrb[0].mxu0
      %v2667 = vadd.f32 0.0, %v2666
      %v2668 = vpop.f32.mrb[0].mxu0
      %2669 = vmatprep.mubr.bf16.mxu0 0
      %2670 = vmatmul.mubr.bf16.gmra.mrb[0].mxu0 %v1536
      %v2671 = vpop.f32.mrb[0].mxu0
      %v2672 = vadd.f32 0.0, %v2671
      %v2673 = vpop.f32.mrb[0].mxu0
      %v2674 = vpop.f32.mrb[0].mxu0
      %v2675 = vadd.f32 0.0, %v2674
      %v2676 = vpop.f32.mrb[0].mxu0
      %2677 = vmatprep.mubr.bf16.mxu0 0
      %2678 = vmatmul.mubr.bf16.gmra.mrb[0].mxu0 %v1537
      %v2679 = vpop.f32.mrb[0].mxu0
      %v2680 = vadd.f32 0.0, %v2679
      %v2681 = vpop.f32.mrb[0].mxu0
      %v2682 = vpop.f32.mrb[0].mxu0
      %v2683 = vadd.f32 0.0, %v2682
      %v2684 = vpop.f32.mrb[0].mxu0
      %2685 = vmatprep.mubr.bf16.mxu0 0
      %2686 = vmatmul.mubr.bf16.gmra.mrb[0].mxu0 %v1538
      %v2687 = vpop.f32.mrb[0].mxu0
      %v2688 = vadd.f32 0.0, %v2687
      %v2689 = vpop.f32.mrb[0].mxu0
      %v2690 = vpop.f32.mrb[0].mxu0
      %v2691 = vadd.f32 0.0, %v2690
      %v2692 = vpop.f32.mrb[0].mxu0
      %2693 = vmatprep.mubr.bf16.mxu0 0
      %2694 = vmatmul.mubr.bf16.gmra.mrb[0].mxu0 %v1539
      %v2695 = vpop.f32.mrb[0].mxu0
      %v2696 = vadd.f32 0.0, %v2695
      %v2697 = vpop.f32.mrb[0].mxu0
      %v2698 = vpop.f32.mrb[0].mxu0
      %v2699 = vadd.f32 0.0, %v2698
      %v2700 = vpop.f32.mrb[0].mxu0
      %2701 = vmatprep.mubr.bf16.mxu0 0
      %2702 = vmatmul.mubr.bf16.gmra.mrb[0].mxu0 %v1991
      %v2703 = vpop.f32.mrb[0].mxu0
      %v2704 = vadd.f32 0.0, %v2703
      %v2705 = vpop.f32.mrb[0].mxu0
      %v2706 = vpop.f32.mrb[0].mxu0
      %v2707 = vadd.f32 0.0, %v2706
      %v2708 = vpop.f32.mrb[0].mxu0
      %2709 = vmatprep.mubr.bf16.mxu0 0
      %2710 = vmatmul.mubr.bf16.gmra.mrb[0].mxu0 %v2571
      %v2711 = vpop.f32.mrb[0].mxu0
      %v2712 = vadd.f32 0.0, %v2711
      %v2713 = vpop.f32.mrb[0].mxu0
      %v2714 = vpop.f32.mrb[0].mxu0
      %v2715 = vadd.f32 0.0, %v2714
      %v2716 = vpop.f32.mrb[0].mxu0
      %2717 = vdwg.mxu0
      %v2718 = vadd.f32 %v2534, %v2656
      %v2719 = vadd.f32 %v2535, %v2659
      %v2720 = vadd.f32 %v2536, %v2664
      %v2721 = vadd.f32 %v2537, %v2667
      %v2722 = vadd.f32 %v2538, %v2672
      %v2723 = vadd.f32 %v2539, %v2675
      %v2724 = vadd.f32 %v2540, %v2680
      %v2725 = vadd.f32 %v2541, %v2683
      %v2726 = vadd.f32 %v2542, %v2688
      %v2727 = vadd.f32 %v2543, %v2691
      %v2728 = vadd.f32 %v2544, %v2696
      %v2729 = vadd.f32 %v2545, %v2699
      %v2730 = vadd.f32 %v2546, %v2704
      %v2731 = vadd.f32 %v2547, %v2707
      %v2732 = vadd.f32 %v2548, %v2712
      %v2733 = vadd.f32 %v2549, %v2715
      %v2735 = vshrl.u32 %v1092, 16
      %v2737 = vrot.slane %v2735, 4
      %v2738 = vshll.u32 %v1092, 16
      %v2740 = vrot.slane %v2738, 5
      %v2741 = vor.u32 %v2737, %v2740
      %v2742 = vrot.slane %v2741, 4
      %v2744 = vshll.u32 %v1093, 16
      %v2746 = vrot.slane %v2744, 5
      %v2747 = vsel %vm1113, %v2742, %v2746
      %v2748 = vshrl.u32 %v1093, 16
      %v2750 = vrot.slane %v2748, 4
      %v2751 = vor.u32 %v2750, %v2746
      %v2752 = vrot.slane %v2751, 4
      %v2754 = vshll.u32 %v1094, 16
      %v2756 = vrot.slane %v2754, 5
      %v2757 = vsel %vm1113, %v2752, %v2756
      %s2758 = scalar_lea.vmem %s3, 448
      %v2759 = vld [vmem:[%s2758] sm:$0xf]
      %v2760 = vld [vmem:[%s2758 + $0x4] sm:$0xf]
      %v2761 = vld [vmem:[%s2758 + $0x8] sm:$0xf]
      %v2762 = vld [vmem:[%s2758 + $0xc] sm:$0xf]
      %v2763 = vld [vmem:[%s2758 + $0x10] sm:$0xf]
      %v2764 = vld [vmem:[%s2758 + $0x14] sm:$0xf]
      %v2765 = vld [vmem:[%s2758 + $0x18] sm:$0xf]
      %v2766 = vld [vmem:[%s2758 + $0x1c] sm:$0xf]
      %v2767 = vld [vmem:[%s2758 + $0x20] sm:$0xf]
      %v2768 = vld [vmem:[%s2758 + $0x24] sm:$0xf]
      %v2769 = vld [vmem:[%s2758 + $0x28] sm:$0xf]
      %v2770 = vld [vmem:[%s2758 + $0x2c] sm:$0xf]
      %v2771 = vld [vmem:[%s2758 + $0x30] sm:$0xf]
      %v2772 = vld [vmem:[%s2758 + $0x34] sm:$0xf]
      %v2773 = vld [vmem:[%s2758 + $0x38] sm:$0xf]
      %v2774 = vld [vmem:[%s2758 + $0x3c] sm:$0xf]
      %v2775 = vunpack.c.l.b16 %v2747
      %v2776 = vunpack.c.l.b16 %v2757
      %v2777 = vpack.c.b16 %v2776, %v2775
      %v2795 = vunpack.c.l.b16 %v2759
      %v2796 = vunpack.c.l.b16 %v2760
      %v2797 = vunpack.c.l.b16 %v2761
      %v2798 = vunpack.c.l.b16 %v2762
      %v2799 = vunpack.c.l.b16 %v2763
      %v2800 = vunpack.c.l.b16 %v2764
      %v2801 = vunpack.c.l.b16 %v2765
      %v2802 = vunpack.c.l.b16 %v2766
      %v2803 = vunpack.c.l.b16 %v2767
      %v2804 = vunpack.c.l.b16 %v2768
      %v2805 = vunpack.c.l.b16 %v2769
      %v2806 = vunpack.c.l.b16 %v2770
      %v2807 = vunpack.c.l.b16 %v2771
      %v2808 = vunpack.c.l.b16 %v2772
      %v2809 = vunpack.c.l.b16 %v2773
      %v2810 = vunpack.c.l.b16 %v2774
      %v2811 = vpack.c.b16 %v2796, %v2795
      %v2812 = vpack.c.b16 %v2798, %v2797
      %v2813 = vpack.c.b16 %v2800, %v2799
      %v2814 = vpack.c.b16 %v2802, %v2801
      %v2815 = vpack.c.b16 %v2804, %v2803
      %v2816 = vpack.c.b16 %v2806, %v2805
      %v2817 = vpack.c.b16 %v2808, %v2807
      %v2818 = vpack.c.b16 %v2810, %v2809
      %2827 = vmatprep.subr.bf16.mxu0 0
      %2828 = vmatpush1.bf16.msra.mxu0 %v2811
      %2829 = vmatprep.subr.bf16.mxu0 0
      %2830 = vmatpush1.bf16.msra.mxu0 %v2812
      %2831 = vmatprep.subr.bf16.mxu0 0
      %2832 = vmatpush1.bf16.msra.mxu0 %v2813
      %2833 = vmatprep.subr.bf16.mxu0 0
      %2834 = vmatpush1.bf16.msra.mxu0 %v2814
      %2835 = vmatprep.subr.bf16.mxu0 0
      %2836 = vmatpush1.bf16.msra.mxu0 %v2815
      %2837 = vmatprep.subr.bf16.mxu0 0
      %2838 = vmatpush1.bf16.msra.mxu0 %v2816
      %2839 = vmatprep.subr.bf16.mxu0 0
      %2840 = vmatpush1.bf16.msra.mxu0 %v2817
      %2841 = vmatprep.subr.bf16.mxu0 0
      %2842 = vmatpush1.bf16.msra.mxu0 %v2818
      %2843 = vmatprep.subr.bf16.mxu0 0
      %2844 = vmatpush1.bf16.msra.mxu0 0
      %2845 = vmatprep.subr.bf16.mxu0 0
      %2846 = vmatpush1.bf16.msra.mxu0 0
      %2847 = vmatprep.subr.bf16.mxu0 0
      %2848 = vmatpush1.bf16.msra.mxu0 0
      %2849 = vmatprep.subr.bf16.mxu0 0
      %2850 = vmatpush1.bf16.msra.mxu0 0
      %2851 = vmatprep.subr.bf16.mxu0 0
      %2852 = vmatpush1.bf16.msra.mxu0 0
      %2853 = vmatprep.subr.bf16.mxu0 0
      %2854 = vmatpush1.bf16.msra.mxu0 0
      %2855 = vmatprep.subr.bf16.mxu0 0
      %2856 = vmatpush1.bf16.msra.mxu0 0
      %2857 = vmatprep.subr.bf16.mxu0 0
      %2858 = vmatpush1.bf16.msra.mxu0 0
      %2859 = vmatprep.mubr.bf16.mxu0 0
      %2860 = vmatmul.mubr.bf16.gmra.mrb[0].mxu0 %v1341
      %v2861 = vpop.f32.mrb[0].mxu0
      %v2862 = vadd.f32 0.0, %v2861
      %v2863 = vpop.f32.mrb[0].mxu0
      %v2864 = vpop.f32.mrb[0].mxu0
      %v2865 = vadd.f32 0.0, %v2864
      %v2866 = vpop.f32.mrb[0].mxu0
      %2867 = vmatprep.mubr.bf16.mxu0 0
      %2868 = vmatmul.mubr.bf16.gmra.mrb[0].mxu0 %v1342
      %v2869 = vpop.f32.mrb[0].mxu0
      %v2870 = vadd.f32 0.0, %v2869
      %v2871 = vpop.f32.mrb[0].mxu0
      %v2872 = vpop.f32.mrb[0].mxu0
      %v2873 = vadd.f32 0.0, %v2872
      %v2874 = vpop.f32.mrb[0].mxu0
      %2875 = vmatprep.mubr.bf16.mxu0 0
      %2876 = vmatmul.mubr.bf16.gmra.mrb[0].mxu0 %v1343
      %v2877 = vpop.f32.mrb[0].mxu0
      %v2878 = vadd.f32 0.0, %v2877
      %v2879 = vpop.f32.mrb[0].mxu0
      %v2880 = vpop.f32.mrb[0].mxu0
      %v2881 = vadd.f32 0.0, %v2880
      %v2882 = vpop.f32.mrb[0].mxu0
      %2883 = vmatprep.mubr.bf16.mxu0 0
      %2884 = vmatmul.mubr.bf16.gmra.mrb[0].mxu0 %v1344
      %v2885 = vpop.f32.mrb[0].mxu0
      %v2886 = vadd.f32 0.0, %v2885
      %v2887 = vpop.f32.mrb[0].mxu0
      %v2888 = vpop.f32.mrb[0].mxu0
      %v2889 = vadd.f32 0.0, %v2888
      %v2890 = vpop.f32.mrb[0].mxu0
      %2891 = vmatprep.mubr.bf16.mxu0 0
      %2892 = vmatmul.mubr.bf16.gmra.mrb[0].mxu0 %v1345
      %v2893 = vpop.f32.mrb[0].mxu0
      %v2894 = vadd.f32 0.0, %v2893
      %v2895 = vpop.f32.mrb[0].mxu0
      %v2896 = vpop.f32.mrb[0].mxu0
      %v2897 = vadd.f32 0.0, %v2896
      %v2898 = vpop.f32.mrb[0].mxu0
      %2899 = vmatprep.mubr.bf16.mxu0 0
      %2900 = vmatmul.mubr.bf16.gmra.mrb[0].mxu0 %v1346
      %v2901 = vpop.f32.mrb[0].mxu0
      %v2902 = vadd.f32 0.0, %v2901
      %v2903 = vpop.f32.mrb[0].mxu0
      %v2904 = vpop.f32.mrb[0].mxu0
      %v2905 = vadd.f32 0.0, %v2904
      %v2906 = vpop.f32.mrb[0].mxu0
      %2907 = vmatprep.mubr.bf16.mxu0 0
      %2908 = vmatmul.mubr.bf16.gmra.mrb[0].mxu0 %v2197
      %v2909 = vpop.f32.mrb[0].mxu0
      %v2910 = vadd.f32 0.0, %v2909
      %v2911 = vpop.f32.mrb[0].mxu0
      %v2912 = vpop.f32.mrb[0].mxu0
      %v2913 = vadd.f32 0.0, %v2912
      %v2914 = vpop.f32.mrb[0].mxu0
      %2915 = vmatprep.mubr.bf16.mxu0 0
      %2916 = vmatmul.mubr.bf16.gmra.mrb[0].mxu0 %v2777
      %v2917 = vpop.f32.mrb[0].mxu0
      %v2918 = vadd.f32 0.0, %v2917
      %v2919 = vpop.f32.mrb[0].mxu0
      %v2920 = vpop.f32.mrb[0].mxu0
      %v2921 = vadd.f32 0.0, %v2920
      %v2922 = vpop.f32.mrb[0].mxu0
      %2923 = vdwg.mxu0
      %v2924 = vadd.f32 %v2718, %v2862
      %v2925 = vadd.f32 %v2719, %v2865
      %v2926 = vadd.f32 %v2720, %v2870
      %v2927 = vadd.f32 %v2721, %v2873
      %v2928 = vadd.f32 %v2722, %v2878
      %v2929 = vadd.f32 %v2723, %v2881
      %v2930 = vadd.f32 %v2724, %v2886
      %v2931 = vadd.f32 %v2725, %v2889
      %v2932 = vadd.f32 %v2726, %v2894
      %v2933 = vadd.f32 %v2727, %v2897
      %v2934 = vadd.f32 %v2728, %v2902
      %v2935 = vadd.f32 %v2729, %v2905
      %v2936 = vadd.f32 %v2730, %v2910
      %v2937 = vadd.f32 %v2731, %v2913
      %v2938 = vadd.f32 %v2732, %v2918
      %v2939 = vadd.f32 %v2733, %v2921
      %v2941 = vrot.slane %v1092, 5
      %v2942 = vrot.slane %v2941, 4
      %v2943 = vrot.slane %v1093, 5
      %v2944 = vsel %vm1703, %v2942, %v2943
      %v2945 = vrot.slane %v2943, 4
      %v2946 = vrot.slane %v1094, 5
      %v2947 = vsel %vm1703, %v2945, %v2946
      %s2948 = scalar_lea.vmem %s3, 512
      %v2949 = vld [vmem:[%s2948] sm:$0xf]
      %v2950 = vld [vmem:[%s2948 + $0x4] sm:$0xf]
      %v2951 = vld [vmem:[%s2948 + $0x8] sm:$0xf]
      %v2952 = vld [vmem:[%s2948 + $0xc] sm:$0xf]
      %v2953 = vld [vmem:[%s2948 + $0x10] sm:$0xf]
      %v2954 = vld [vmem:[%s2948 + $0x14] sm:$0xf]
      %v2955 = vld [vmem:[%s2948 + $0x18] sm:$0xf]
      %v2956 = vld [vmem:[%s2948 + $0x1c] sm:$0xf]
      %v2957 = vld [vmem:[%s2948 + $0x20] sm:$0xf]
      %v2958 = vld [vmem:[%s2948 + $0x24] sm:$0xf]
      %v2959 = vld [vmem:[%s2948 + $0x28] sm:$0xf]
      %v2960 = vld [vmem:[%s2948 + $0x2c] sm:$0xf]
      %v2961 = vld [vmem:[%s2948 + $0x30] sm:$0xf]
      %v2962 = vld [vmem:[%s2948 + $0x34] sm:$0xf]
      %v2963 = vld [vmem:[%s2948 + $0x38] sm:$0xf]
      %v2964 = vld [vmem:[%s2948 + $0x3c] sm:$0xf]
      %v2965 = vunpack.c.l.b16 %v2944
      %v2966 = vunpack.c.l.b16 %v2947
      %v2967 = vpack.c.b16 %v2966, %v2965
      %v2985 = vunpack.c.l.b16 %v2949
      %v2986 = vunpack.c.l.b16 %v2950
      %v2987 = vunpack.c.l.b16 %v2951
      %v2988 = vunpack.c.l.b16 %v2952
      %v2989 = vunpack.c.l.b16 %v2953
      %v2990 = vunpack.c.l.b16 %v2954
      %v2991 = vunpack.c.l.b16 %v2955
      %v2992 = vunpack.c.l.b16 %v2956
      %v2993 = vunpack.c.l.b16 %v2957
      %v2994 = vunpack.c.l.b16 %v2958
      %v2995 = vunpack.c.l.b16 %v2959
      %v2996 = vunpack.c.l.b16 %v2960
      %v2997 = vunpack.c.l.b16 %v2961
      %v2998 = vunpack.c.l.b16 %v2962
      %v2999 = vunpack.c.l.b16 %v2963
      %v3000 = vunpack.c.l.b16 %v2964
      %v3001 = vpack.c.b16 %v2986, %v2985
      %v3002 = vpack.c.b16 %v2988, %v2987
      %v3003 = vpack.c.b16 %v2990, %v2989
      %v3004 = vpack.c.b16 %v2992, %v2991
      %v3005 = vpack.c.b16 %v2994, %v2993
      %v3006 = vpack.c.b16 %v2996, %v2995
      %v3007 = vpack.c.b16 %v2998, %v2997
      %v3008 = vpack.c.b16 %v3000, %v2999
      %3017 = vmatprep.subr.bf16.mxu0 0
      %3018 = vmatpush1.bf16.msra.mxu0 %v3001
      %3019 = vmatprep.subr.bf16.mxu0 0
      %3020 = vmatpush1.bf16.msra.mxu0 %v3002
      %3021 = vmatprep.subr.bf16.mxu0 0
      %3022 = vmatpush1.bf16.msra.mxu0 %v3003
      %3023 = vmatprep.subr.bf16.mxu0 0
      %3024 = vmatpush1.bf16.msra.mxu0 %v3004
      %3025 = vmatprep.subr.bf16.mxu0 0
      %3026 = vmatpush1.bf16.msra.mxu0 %v3005
      %3027 = vmatprep.subr.bf16.mxu0 0
      %3028 = vmatpush1.bf16.msra.mxu0 %v3006
      %3029 = vmatprep.subr.bf16.mxu0 0
      %3030 = vmatpush1.bf16.msra.mxu0 %v3007
      %3031 = vmatprep.subr.bf16.mxu0 0
      %3032 = vmatpush1.bf16.msra.mxu0 %v3008
      %3033 = vmatprep.subr.bf16.mxu0 0
      %3034 = vmatpush1.bf16.msra.mxu0 0
      %3035 = vmatprep.subr.bf16.mxu0 0
      %3036 = vmatpush1.bf16.msra.mxu0 0
      %3037 = vmatprep.subr.bf16.mxu0 0
      %3038 = vmatpush1.bf16.msra.mxu0 0
      %3039 = vmatprep.subr.bf16.mxu0 0
      %3040 = vmatpush1.bf16.msra.mxu0 0
      %3041 = vmatprep.subr.bf16.mxu0 0
      %3042 = vmatpush1.bf16.msra.mxu0 0
      %3043 = vmatprep.subr.bf16.mxu0 0
      %3044 = vmatpush1.bf16.msra.mxu0 0
      %3045 = vmatprep.subr.bf16.mxu0 0
      %3046 = vmatpush1.bf16.msra.mxu0 0
      %3047 = vmatprep.subr.bf16.mxu0 0
      %3048 = vmatpush1.bf16.msra.mxu0 0
      %3049 = vmatprep.mubr.bf16.mxu0 0
      %3050 = vmatmul.mubr.bf16.gmra.mrb[0].mxu0 %v1795
      %v3051 = vpop.f32.mrb[0].mxu0
      %v3052 = vadd.f32 0.0, %v3051
      %v3053 = vpop.f32.mrb[0].mxu0
      %v3054 = vpop.f32.mrb[0].mxu0
      %v3055 = vadd.f32 0.0, %v3054
      %v3056 = vpop.f32.mrb[0].mxu0
      %3057 = vmatprep.mubr.bf16.mxu0 0
      %3058 = vmatmul.mubr.bf16.gmra.mrb[0].mxu0 %v1796
      %v3059 = vpop.f32.mrb[0].mxu0
      %v3060 = vadd.f32 0.0, %v3059
      %v3061 = vpop.f32.mrb[0].mxu0
      %v3062 = vpop.f32.mrb[0].mxu0
      %v3063 = vadd.f32 0.0, %v3062
      %v3064 = vpop.f32.mrb[0].mxu0
      %3065 = vmatprep.mubr.bf16.mxu0 0
      %3066 = vmatmul.mubr.bf16.gmra.mrb[0].mxu0 %v1797
      %v3067 = vpop.f32.mrb[0].mxu0
      %v3068 = vadd.f32 0.0, %v3067
      %v3069 = vpop.f32.mrb[0].mxu0
      %v3070 = vpop.f32.mrb[0].mxu0
      %v3071 = vadd.f32 0.0, %v3070
      %v3072 = vpop.f32.mrb[0].mxu0
      %3073 = vmatprep.mubr.bf16.mxu0 0
      %3074 = vmatmul.mubr.bf16.gmra.mrb[0].mxu0 %v1798
      %v3075 = vpop.f32.mrb[0].mxu0
      %v3076 = vadd.f32 0.0, %v3075
      %v3077 = vpop.f32.mrb[0].mxu0
      %v3078 = vpop.f32.mrb[0].mxu0
      %v3079 = vadd.f32 0.0, %v3078
      %v3080 = vpop.f32.mrb[0].mxu0
      %3081 = vmatprep.mubr.bf16.mxu0 0
      %3082 = vmatmul.mubr.bf16.gmra.mrb[0].mxu0 %v1799
      %v3083 = vpop.f32.mrb[0].mxu0
      %v3084 = vadd.f32 0.0, %v3083
      %v3085 = vpop.f32.mrb[0].mxu0
      %v3086 = vpop.f32.mrb[0].mxu0
      %v3087 = vadd.f32 0.0, %v3086
      %v3088 = vpop.f32.mrb[0].mxu0
      %3089 = vmatprep.mubr.bf16.mxu0 0
      %3090 = vmatmul.mubr.bf16.gmra.mrb[0].mxu0 %v1800
      %v3091 = vpop.f32.mrb[0].mxu0
      %v3092 = vadd.f32 0.0, %v3091
      %v3093 = vpop.f32.mrb[0].mxu0
      %v3094 = vpop.f32.mrb[0].mxu0
      %v3095 = vadd.f32 0.0, %v3094
      %v3096 = vpop.f32.mrb[0].mxu0
      %3097 = vmatprep.mubr.bf16.mxu0 0
      %3098 = vmatmul.mubr.bf16.gmra.mrb[0].mxu0 %v2387
      %v3099 = vpop.f32.mrb[0].mxu0
      %v3100 = vadd.f32 0.0, %v3099
      %v3101 = vpop.f32.mrb[0].mxu0
      %v3102 = vpop.f32.mrb[0].mxu0
      %v3103 = vadd.f32 0.0, %v3102
      %v3104 = vpop.f32.mrb[0].mxu0
      %3105 = vmatprep.mubr.bf16.mxu0 0
      %3106 = vmatmul.mubr.bf16.gmra.mrb[0].mxu0 %v2967
      %v3107 = vpop.f32.mrb[0].mxu0
      %v3108 = vadd.f32 0.0, %v3107
      %v3109 = vpop.f32.mrb[0].mxu0
      %v3110 = vpop.f32.mrb[0].mxu0
      %v3111 = vadd.f32 0.0, %v3110
      %v3112 = vpop.f32.mrb[0].mxu0
      %3113 = vdwg.mxu0
      %v3114 = vadd.f32 %v2924, %v3052
      %v3115 = vadd.f32 %v2925, %v3055
      %v3116 = vadd.f32 %v2926, %v3060
      %v3117 = vadd.f32 %v2927, %v3063
      %v3118 = vadd.f32 %v2928, %v3068
      %v3119 = vadd.f32 %v2929, %v3071
      %v3120 = vadd.f32 %v2930, %v3076
      %v3121 = vadd.f32 %v2931, %v3079
      %v3122 = vadd.f32 %v2932, %v3084
      %v3123 = vadd.f32 %v2933, %v3087
      %v3124 = vadd.f32 %v2934, %v3092
      %v3125 = vadd.f32 %v2935, %v3095
      %v3126 = vadd.f32 %v2936, %v3100
      %v3127 = vadd.f32 %v2937, %v3103
      %v3128 = vadd.f32 %v2938, %v3108
      %v3129 = vadd.f32 %v2939, %v3111
      %v3130 = vld [vmem:[%s4] sm:$0x1]
      %v3132 = vlaneseq
      %v3133 = vshrl.u32 %v3132, 7
      %v3134 = vsub.s32 0, %v3133
      %v3135 = vrot.slane %v3130, %v3134
      %v3137 = vadd.f32 %v3114, %v3135
      %v3138 = vadd.f32 %v3115, %v3135
      %v3139 = vadd.f32 %v3116, %v3135
      %v3140 = vadd.f32 %v3117, %v3135
      %v3141 = vadd.f32 %v3118, %v3135
      %v3142 = vadd.f32 %v3119, %v3135
      %v3143 = vadd.f32 %v3120, %v3135
      %v3144 = vadd.f32 %v3121, %v3135
      %v3145 = vadd.f32 %v3122, %v3135
      %v3146 = vadd.f32 %v3123, %v3135
      %v3147 = vadd.f32 %v3124, %v3135
      %v3148 = vadd.f32 %v3125, %v3135
      %v3149 = vadd.f32 %v3126, %v3135
      %v3150 = vadd.f32 %v3127, %v3135
      %v3151 = vadd.f32 %v3128, %v3135
      %v3152 = vadd.f32 %v3129, %v3135
      %3153 = vst [vmem:[%s313] sm:$0xff] %v3137
      %3154 = vst [vmem:[%s313 + $0x8] sm:$0xff] %v3138
      %3155 = vst [vmem:[%s313 + $0x10] sm:$0xff] %v3139
      %3156 = vst [vmem:[%s313 + $0x18] sm:$0xff] %v3140
      %3157 = vst [vmem:[%s313 + $0x20] sm:$0xff] %v3141
      %3158 = vst [vmem:[%s313 + $0x28] sm:$0xff] %v3142
      %3159 = vst [vmem:[%s313 + $0x30] sm:$0xff] %v3143
      %3160 = vst [vmem:[%s313 + $0x38] sm:$0xff] %v3144
      %3161 = vst [vmem:[%s313 + $0x40] sm:$0xff] %v3145
      %3162 = vst [vmem:[%s313 + $0x48] sm:$0xff] %v3146
      %3163 = vst [vmem:[%s313 + $0x50] sm:$0xff] %v3147
      %3164 = vst [vmem:[%s313 + $0x58] sm:$0xff] %v3148
      %3165 = vst [vmem:[%s313 + $0x60] sm:$0xff] %v3149
      %3166 = vst [vmem:[%s313 + $0x68] sm:$0xff] %v3150
      %3167 = vst [vmem:[%s313 + $0x70] sm:$0xff] %v3151
      %3168 = vst [vmem:[%s313 + $0x78] sm:$0xff] %v3152
      %v3169 = vld [vmem:[%s317] sm:$0x1]
      %v3170 = vadd.f32 %v3137, %v3138
      %v3171 = vadd.f32 %v3170, %v3139
      %v3172 = vadd.f32 %v3171, %v3140
      %v3173 = vadd.f32 %v3172, %v3141
      %v3174 = vadd.f32 %v3173, %v3142
      %v3175 = vadd.f32 %v3174, %v3143
      %v3176 = vadd.f32 %v3175, %v3144
      %v3177 = vadd.f32 %v3176, %v3145
      %v3178 = vadd.f32 %v3177, %v3146
      %v3179 = vadd.f32 %v3178, %v3147
      %v3180 = vadd.f32 %v3179, %v3148
      %v3181 = vadd.f32 %v3180, %v3149
      %v3182 = vadd.f32 %v3181, %v3150
      %v3183 = vadd.f32 %v3182, %v3151
      %v3184 = vadd.f32 %v3183, %v3152
      %v3185 = vrot.slane %v3184, 4
      %v3186 = vadd.f32 %v3184, %v3185
      %v3187 = vrot.slane %v3186, 2
      %v3188 = vadd.f32 %v3186, %v3187
      %v3189 = vrot.slane %v3188, 1
      %v3190 = vadd.f32 %v3188, %v3189
      %v3191 = vadd.f32 %v3169, %v3190
      %3192 = vst [vmem:[%s317] sm:$0x1] %v3191
      %v3193 = vld [vmem:[%s320] sm:$0x1]
      %v3194 = vmul.f32 %v3137, %v3137
      %v3195 = vmul.f32 %v3138, %v3138
      %v3196 = vmul.f32 %v3139, %v3139
      %v3197 = vmul.f32 %v3140, %v3140
      %v3198 = vmul.f32 %v3141, %v3141
      %v3199 = vmul.f32 %v3142, %v3142
      %v3200 = vmul.f32 %v3143, %v3143
      %v3201 = vmul.f32 %v3144, %v3144
      %v3202 = vmul.f32 %v3145, %v3145
      %v3203 = vmul.f32 %v3146, %v3146
      %v3204 = vmul.f32 %v3147, %v3147
      %v3205 = vmul.f32 %v3148, %v3148
      %v3206 = vmul.f32 %v3149, %v3149
      %v3207 = vmul.f32 %v3150, %v3150
      %v3208 = vmul.f32 %v3151, %v3151
      %v3209 = vmul.f32 %v3152, %v3152
      %v3210 = vadd.f32 %v3194, %v3195
      %v3211 = vadd.f32 %v3210, %v3196
      %v3212 = vadd.f32 %v3211, %v3197
      %v3213 = vadd.f32 %v3212, %v3198
      %v3214 = vadd.f32 %v3213, %v3199
      %v3215 = vadd.f32 %v3214, %v3200
      %v3216 = vadd.f32 %v3215, %v3201
      %v3217 = vadd.f32 %v3216, %v3202
      %v3218 = vadd.f32 %v3217, %v3203
      %v3219 = vadd.f32 %v3218, %v3204
      %v3220 = vadd.f32 %v3219, %v3205
      %v3221 = vadd.f32 %v3220, %v3206
      %v3222 = vadd.f32 %v3221, %v3207
      %v3223 = vadd.f32 %v3222, %v3208
      %v3224 = vadd.f32 %v3223, %v3209
      %v3225 = vrot.slane %v3224, 4
      %v3226 = vadd.f32 %v3224, %v3225
      %v3227 = vrot.slane %v3226, 2
      %v3228 = vadd.f32 %v3226, %v3227
      %v3229 = vrot.slane %v3228, 1
      %v3230 = vadd.f32 %v3228, %v3229
      %v3231 = vadd.f32 %v3193, %v3230
      %3232 = vst [vmem:[%s320] sm:$0x1] %v3231
      %s3233 = smul.u32 8, %s24
      %p3234 = scmp.lt.s32.totalorder %s23, 1
      %s3235 = scalar_select %p3234, %s23, 1
      %p3236 = scmp.lt.s32.totalorder %s3233, 15
      %s3237 = scalar_select %p3236, %s3233, 15
      %s3238 = smul.addr %s3237, 2
      %s3239 = smul.addr %s3235, 32
      %s3240 = sadd.s32 %s3238, %s3239
      %s3241 = smul.addr %s3240, 8
      %s3242 = scalar_lea.vmem %s5, %s3241
      %p3243 = scmp.lt.s32.totalorder %s23, 1
      %s3244 = scalar_select %p3243, %s23, 1
      %s3245 = scalar_lea.vmem %s6, %s3244
      %p3246 = scmp.lt.s32.totalorder %s23, 1
      %s3247 = scalar_select %p3246, %s23, 1
      %s3248 = scalar_lea.vmem %s7, %s3247
      // Predicated region
      $region45: #{conv_block_forward.4} parent=39 // pred_check
        %p3249 = pneg %p161
      $region46: #{conv_block_forward.4} parent=39 // pred_check_branch
        %3251 = sbr.rel (%p3249) target = $region48
      $region47: #{conv_block_forward.4} parent=39 // pred_region
        %s3252 = smul.u32 8, %s24
      $region48: #{conv_block_forward.4} parent=39 // pred_fallthru
        _
      // Predicated region
      $region49: #{conv_block_forward.4} parent=39 // pred_check
        %p3253 = pneg %p187
      $region50: #{conv_block_forward.4} parent=39 // pred_check_branch
        %3255 = sbr.rel (%p3253) target = $region52
      $region51: #{conv_block_forward.4} parent=39 // pred_region
        _
      $region52: #{conv_block_forward.4} parent=39 // pred_fallthru
        _
      // Predicated region
      $region53: #{conv_block_forward.4} parent=39 // pred_check
        %p3256 = pneg %p213
      $region54: #{conv_block_forward.4} parent=39 // pred_check_branch
        %3258 = sbr.rel (%p3256) target = $region56
      $region55: #{conv_block_forward.4} parent=39 // pred_region
        _
      $region56: #{conv_block_forward.4} parent=39 // pred_fallthru
        _
    $region40: #{conv_block_forward.4} parent=5 // pred_fallthru
      _
    %p3259 = scmp.le.s32.totalorder 2, %s14
    // Predicated region
    $region57: #{conv_block_forward.4} parent=5 // pred_check
      %p3260 = pneg %p3259
    $region58: #{conv_block_forward.4} parent=5 // pred_check_branch
      %3262 = sbr.rel (%p3260) target = $region60
    $region59: #{conv_block_forward.4} parent=5 // pred_region
      %s3263 = ssub.s32 %s14, 2
      // Predicated region
      $region61: #{conv_block_forward.4} parent=59 // pred_check
        %p3264 = pneg %p167
      $region62: #{conv_block_forward.4} parent=59 // pred_check_branch
        %3266 = sbr.rel (%p3264) target = $region64
      $region63: #{conv_block_forward.4} parent=59 // pred_region
        %s3267 = smul.u32 8, %s26
        %p3268 = scmp.lt.s32.totalorder %s25, 1
        %s3269 = scalar_select %p3268, %s25, 1
        %p3270 = scmp.lt.s32.totalorder %s3267, 15
        %s3271 = scalar_select %p3270, %s3267, 15
        %s3272 = smul.addr %s3271, 2
        %s3273 = smul.addr %s3269, 32
        %s3274 = sadd.s32 %s3272, %s3273
        %s3275 = smul.addr %s3274, 8
        %s3276 = scalar_lea.vmem %s5, %s3275
      $region64: #{conv_block_forward.4} parent=59 // pred_fallthru
        _
      // Predicated region
      $region65: #{conv_block_forward.4} parent=59 // pred_check
        %p3277 = pneg %p193
      $region66: #{conv_block_forward.4} parent=59 // pred_check_branch
        %3279 = sbr.rel (%p3277) target = $region68
      $region67: #{conv_block_forward.4} parent=59 // pred_region
        %p3280 = scmp.lt.s32.totalorder %s25, 1
        %s3281 = scalar_select %p3280, %s25, 1
        %s3282 = scalar_lea.vmem %s6, %s3281
      $region68: #{conv_block_forward.4} parent=59 // pred_fallthru
        _
      // Predicated region
      $region69: #{conv_block_forward.4} parent=59 // pred_check
        %p3283 = pneg %p219
      $region70: #{conv_block_forward.4} parent=59 // pred_check_branch
        %3285 = sbr.rel (%p3283) target = $region72
      $region71: #{conv_block_forward.4} parent=59 // pred_region
        %p3286 = scmp.lt.s32.totalorder %s25, 1
        %s3287 = scalar_select %p3286, %s25, 1
        %s3288 = scalar_lea.vmem %s7, %s3287
      $region72: #{conv_block_forward.4} parent=59 // pred_fallthru
        _
    $region60: #{conv_block_forward.4} parent=5 // pred_fallthru
      _
  $region6: #{conv_block_forward.4} parent=0 // loop_footer
    %s18 = sadd.s32 1, %s14
  $region7: #{conv_block_forward.4} parent=0 // loop_footer_branch
    %13 = sbr.rel target = $region3
  $region8: #{conv_block_forward.4} parent=0 // loop_exit
    _

</llo_original>
